<compile_context>
chip_gen: v7x
topology: tpu7x:2x2x1
jax: 0.10.0
libtpu: 0.0.40
codegen_flags: <defaults>
</compile_context>

<pallas_src>
import functools

import jax
import jax.numpy as jnp
import numpy as np
from jax.experimental import pallas as pl
from jax.experimental.pallas import tpu as pltpu

# ----------------------------- configuration -------------------------------
KS = 3
C_IN, C1, C2, C3 = 10, 8, 16, 32
H0, W0 = 16, 14                   # input spatial
H1, W1 = 14, 12                   # after conv1
H2, W2 = 12, 10                   # after conv2
H3, W3 = 10, 8                    # after conv3
BATCH = 2
BN_EPS = 1e-5

FC_DIM = 32
LSTM_H = 32
GATE_LANES = 128                  # one 128-lane block holds the 3 live gates
NUM_CLASSES = 4

ROWS_CORE = BATCH * H0            # 32 conv rows computed per layer (row = b*16 + i)
PAD_R = 8                         # zero rows at the bottom, cover kh shifts (<= +2)
ROWS_TOT = ROWS_CORE + PAD_R      # 40

LANES0 = W0 * C_IN                # 140  (lane = j*Cin + c)
LANES1 = W1 * C1                  # 96
LANES2 = W2 * C2                  # 160
LANES3 = W3 * C3                  # 256
FLAT_K = H3 * W3 * C3             # 2560 (matches the module's hard-coded FC1 input)
assert FLAT_K == 2560


# ------------------------------ small helpers ------------------------------
def _full_spec(shape):
    """BlockSpec covering the whole array (single block, grid=(1,))."""
    n = len(shape)
    return pl.BlockSpec(shape, lambda i, n=n: (0,) * n)


def _elu(y):
    # ELU(alpha=1); clamped exp argument keeps the discarded branch finite.
    return jnp.where(y > 0, y, jnp.exp(jnp.minimum(y, 0.0)) - 1.0)


def _sigmoid(z):
    return 1.0 / (1.0 + jnp.exp(-z))


# ------------------------------ fused kernel --------------------------------
def _fused_kernel(xf_ref, w1_ref, s1_ref, t1_ref,
                  w2_ref, s2_ref, t2_ref,
                  w3_ref, s3_ref, t3_ref,
                  fc1_hbm,
                  s4_ref, t4_ref,
                  wg0_ref, bg0_ref, wg1_ref, bg1_ref,
                  wf_ref, bf_ref,
                  o_ref,
                  f1_ref, f2_ref, f3_ref, flat_ref, fc1_vmem, fc1_sem):
    # Overlap the largest head weight DMA (FC1, 160 KiB bf16) with the conv stage.
    fc1_dma = pltpu.make_async_copy(fc1_hbm, fc1_vmem, fc1_sem)
    fc1_dma.start()

    def conv_bn_elu(in_ref, w_ref, s_ref, t_ref):
        # 3 dots (one per kh row-shift) against block-banded weights; kw is
        # folded into the weight's lane structure.  bf16 operands, f32 acc.
        acc = jnp.dot(in_ref[0:ROWS_CORE, :], w_ref[0],
                      preferred_element_type=jnp.float32)
        acc = acc + jnp.dot(in_ref[1:1 + ROWS_CORE, :], w_ref[1],
                            preferred_element_type=jnp.float32)
        acc = acc + jnp.dot(in_ref[2:2 + ROWS_CORE, :], w_ref[2],
                            preferred_element_type=jnp.float32)
        y = acc * s_ref[...] + t_ref[...]          # folded BN (+conv bias)
        return _elu(y).astype(jnp.bfloat16)

    # conv1: (40,140) -> (32, 96); rows >= valid height hold finite garbage
    # that only ever feeds garbage rows downstream (never the FC1 flatten).
    y1 = conv_bn_elu(xf_ref, w1_ref, s1_ref, t1_ref)
    f1_ref[0:ROWS_CORE, :] = y1
    f1_ref[ROWS_CORE:ROWS_TOT, :] = jnp.zeros((PAD_R, LANES1), jnp.bfloat16)

    # conv2: (40,96) -> (32, 160)
    y2 = conv_bn_elu(f1_ref, w2_ref, s2_ref, t2_ref)
    f2_ref[0:ROWS_CORE, :] = y2
    f2_ref[ROWS_CORE:ROWS_TOT, :] = jnp.zeros((PAD_R, LANES2), jnp.bfloat16)

    # conv3: (40,160) -> (32, 256)
    f3_ref[...] = conv_bn_elu(f2_ref, w3_ref, s3_ref, t3_ref)

    # In-VMEM flatten: valid conv3 rows (b, i < H3) -> lane-dense (B, 2560),
    # lane order (i, j, c).  20 copies, each at a 128-aligned lane offset.
    for b in range(BATCH):
        for i in range(H3):
            flat_ref[b:b + 1, i * LANES3:(i + 1) * LANES3] = (
                f3_ref[b * H0 + i:b * H0 + i + 1, :])

    # FC1 + BN4 + ELU  (weight (FC_DIM, 2560) arrives via the overlapped DMA).
    fc1_dma.wait()
    z = jax.lax.dot_general(flat_ref[...], fc1_vmem[...],
                            dimension_numbers=(((1,), (1,)), ((), ())),
                            preferred_element_type=jnp.float32)   # (B, FC_DIM)
    fc = _elu(z * s4_ref[...] + t4_ref[...])

    # Two single-step LSTM layers; h0 = c0 = 0 -> forget gate unused.
    def lstm_cell(h, wg_ref, bg_ref):
        g = jnp.dot(h.astype(jnp.bfloat16), wg_ref[...],
                    preferred_element_type=jnp.float32) + bg_ref[...]  # (B,128)
        i = _sigmoid(g[:, 0:LSTM_H])
        gg = jnp.tanh(g[:, LSTM_H:2 * LSTM_H])
        o = _sigmoid(g[:, 2 * LSTM_H:3 * LSTM_H])
        return o * jnp.tanh(i * gg)                                    # (B, 32)

    h1 = lstm_cell(fc, wg0_ref, bg0_ref)
    h2 = lstm_cell(h1, wg1_ref, bg1_ref)

    # Fused FC2 -> FC3 (dropout off; no nonlinearity in between).
    o_ref[...] = (jnp.dot(h2.astype(jnp.bfloat16), wf_ref[...],
                          preferred_element_type=jnp.float32) + bf_ref[...])


def _fused_call(xf, p):
    args = [xf,
            p["conv1_w"], p["bn1_scale"], p["bn1_shift"],
            p["conv2_w"], p["bn2_scale"], p["bn2_shift"],
            p["conv3_w"], p["bn3_scale"], p["bn3_shift"],
            p["fc1_wT"],
            p["bn4_scale"], p["bn4_shift"],
            p["lstm0_w"], p["lstm0_b"], p["lstm1_w"], p["lstm1_b"],
            p["fc23_w"], p["fc23_b"]]
    in_specs = ([_full_spec(a.shape) for a in args[:10]]
                + [pl.BlockSpec(memory_space=pl.ANY)]        # fc1_wT stays in HBM
                + [_full_spec(a.shape) for a in args[11:]])
    return pl.pallas_call(
        _fused_kernel,
        out_shape=jax.ShapeDtypeStruct((BATCH, NUM_CLASSES), jnp.float32),
        grid=(1,),
        in_specs=in_specs,
        out_specs=_full_spec((BATCH, NUM_CLASSES)),
        scratch_shapes=[
            pltpu.VMEM((ROWS_TOT, LANES1), jnp.bfloat16),    # conv1 frame
            pltpu.VMEM((ROWS_TOT, LANES2), jnp.bfloat16),    # conv2 frame
            pltpu.VMEM((ROWS_CORE, LANES3), jnp.bfloat16),   # conv3 frame
            pltpu.VMEM((BATCH, FLAT_K), jnp.bfloat16),       # FC1 input (lane dense)
            pltpu.VMEM((FC_DIM, FLAT_K), jnp.bfloat16),      # FC1 weight landing buf
            pltpu.SemaphoreType.DMA(()),
        ],
        compiler_params=pltpu.CompilerParams(
            dimension_semantics=("arbitrary",)),
    )(*args)


# ------------------------------ parameter init ------------------------------
def init_params(key):
    keys = iter(jax.random.split(key, 64))
    nk = lambda: next(keys)
    nrm = lambda shape, s=0.1: np.asarray(
        s * jax.random.normal(nk(), shape, jnp.float32))

    def bn_fold(c):
        gamma = 1.0 + 0.1 * np.asarray(jax.random.normal(nk(), (c,), jnp.float32))
        beta = 0.1 * np.asarray(jax.random.normal(nk(), (c,), jnp.float32))
        mean = 0.1 * np.asarray(jax.random.normal(nk(), (c,), jnp.float32))
        var = 1.0 + 0.1 * np.abs(np.asarray(jax.random.normal(nk(), (c,), jnp.float32)))
        scale = gamma / np.sqrt(var + BN_EPS)
        shift = beta - mean * scale
        return scale, shift

    p = {}

    # Convs: torch weight (Cout, Cin, 3, 3) -> 3 block-banded (Win*Cin, Wout*Cout)
    # matrices (one per kh); kw and the lane structure (lane = j*C + c) are
    # folded into the band.  Conv bias folded into the BN shift.
    for idx, (cin, cout, win) in enumerate(
            ((C_IN, C1, W0), (C1, C2, W1), (C2, C3, W2)), start=1):
        wout = win - 2
        w = nrm((cout, cin, KS, KS))
        b = nrm((cout,))
        scale, shift = bn_fold(cout)
        big = np.zeros((KS, win * cin, wout * cout), np.float32)
        for kh in range(KS):
            for kw in range(KS):
                for jo in range(wout):
                    big[kh,
                        (jo + kw) * cin:(jo + kw + 1) * cin,
                        jo * cout:(jo + 1) * cout] = w[:, :, kh, kw].T
        p[f"conv{idx}_w"] = jnp.asarray(big, jnp.bfloat16)
        p[f"bn{idx}_scale"] = jnp.asarray(
            np.tile(scale, wout).reshape(1, wout * cout), jnp.float32)
        p[f"bn{idx}_shift"] = jnp.asarray(
            np.tile(shift + b * scale, wout).reshape(1, wout * cout), jnp.float32)

    # FC1 (2560 -> FC_DIM) + BN4.  Torch flat index p = c*80 + i*8 + j; kernel
    # lane q = i*256 + j*32 + c.  Stored transposed (FC_DIM, 2560) for a dense,
    # lane-major DMA and a trans-B dot.
    w1 = nrm((FC_DIM, FLAT_K))
    b1 = nrm((FC_DIM,))
    s4, t4 = bn_fold(FC_DIM)
    w1_perm = np.transpose(w1.reshape(FC_DIM, C3, H3, W3),
                           (0, 2, 3, 1)).reshape(FC_DIM, FLAT_K)
    p["fc1_wT"] = jnp.asarray(w1_perm, jnp.bfloat16)
    p["bn4_scale"] = jnp.asarray(s4.reshape(1, FC_DIM), jnp.float32)
    p["bn4_shift"] = jnp.asarray((t4 + b1 * s4).reshape(1, FC_DIM), jnp.float32)

    # LSTM: 2 layers, batch_first, seq_len = 1, zero initial state.
    # PyTorch gate order in weight_ih: [i, f, g, o]; forget gate unused (c0=0).
    # Pack [i, g, o] into one (in_dim, 128) matrix (lanes [0:96) used).
    for layer in (0, 1):
        in_dim = FC_DIM if layer == 0 else LSTM_H
        w_ih = nrm((4 * LSTM_H, in_dim))
        b_ih = nrm((4 * LSTM_H,))
        b_hh = nrm((4 * LSTM_H,))
        bsum = b_ih + b_hh
        W = np.zeros((in_dim, GATE_LANES), np.float32)
        Bv = np.zeros((1, GATE_LANES), np.float32)
        for slot, gate in enumerate((0, 2, 3)):            # i, g, o
            W[:, slot * LSTM_H:(slot + 1) * LSTM_H] = (
                w_ih[gate * LSTM_H:(gate + 1) * LSTM_H, :].T)
            Bv[0, slot * LSTM_H:(slot + 1) * LSTM_H] = (
                bsum[gate * LSTM_H:(gate + 1) * LSTM_H])
        p[f"lstm{layer}_w"] = jnp.asarray(W, jnp.bfloat16)
        p[f"lstm{layer}_b"] = jnp.asarray(Bv, jnp.float32)

    # FC2 (hidden -> fc_dim) and FC3 (fc_dim -> num_classes) fused:
    #   FC3(FC2(h)) = h @ (W3 @ W2)^T + (b2 @ W3^T + b3)
    w2 = nrm((FC_DIM, LSTM_H)); b2 = nrm((FC_DIM,))
    w3 = nrm((NUM_CLASSES, FC_DIM)); b3 = nrm((NUM_CLASSES,))
    p["fc23_w"] = jnp.asarray((w3 @ w2).T, jnp.bfloat16)              # (32, 4)
    p["fc23_b"] = jnp.asarray((b2 @ w3.T + b3).reshape(1, NUM_CLASSES),
                              jnp.float32)
    return p


# -------------------------------- forward -----------------------------------
def cnn_lstm_forward(params, x):
    """x: (B, 10, 16, 14) float32 NCHW  ->  (B, NUM_CLASSES) float32."""
    assert x.shape == (BATCH, C_IN, H0, W0)
    # NCHW -> row = b*16 + i, lane = j*10 + c, plus 8 zero pad rows, bf16.
    # TODO(synk): this ~18 KiB relayout stays as one fused XLA op; a 4-D
    # transpose has no clean in-kernel Mosaic lowering.
    xf = jnp.transpose(x, (0, 2, 3, 1)).reshape(BATCH * H0, LANES0)
    xf = jnp.pad(xf, ((0, PAD_R), (0, 0))).astype(jnp.bfloat16)
    return _fused_call(xf, params)


# --------------------------------- main --------------------------------------
if __name__ == "__main__":
    key = jax.random.PRNGKey(0)
    pkey, xkey = jax.random.split(key)
    params = init_params(pkey)
    x = jax.random.normal(xkey, (BATCH, C_IN, H0, W0), jnp.float32)

    fwd = jax.jit(functools.partial(cnn_lstm_forward, params))
    out = jax.block_until_ready(fwd(x))

    assert out.shape == (BATCH, NUM_CLASSES), out.shape
    assert out.dtype == jnp.float32
    assert bool(jnp.all(jnp.isfinite(out)))
    print("KERNEL_OK")
</pallas_src>

<mosaic_0001>
module attributes {stable_mosaic.version = 11 : i64} {
  func.func @_fused_kernel(%arg0: i32, %arg1: memref<40x140xbf16, #tpu.memory_space<vmem>>, %arg2: memref<3x140x96xbf16, #tpu.memory_space<vmem>>, %arg3: memref<1x96xf32, #tpu.memory_space<vmem>>, %arg4: memref<1x96xf32, #tpu.memory_space<vmem>>, %arg5: memref<3x96x160xbf16, #tpu.memory_space<vmem>>, %arg6: memref<1x160xf32, #tpu.memory_space<vmem>>, %arg7: memref<1x160xf32, #tpu.memory_space<vmem>>, %arg8: memref<3x160x256xbf16, #tpu.memory_space<vmem>>, %arg9: memref<1x256xf32, #tpu.memory_space<vmem>>, %arg10: memref<1x256xf32, #tpu.memory_space<vmem>>, %arg11: memref<32x2560xbf16, #tpu.memory_space<any>>, %arg12: memref<1x32xf32, #tpu.memory_space<vmem>>, %arg13: memref<1x32xf32, #tpu.memory_space<vmem>>, %arg14: memref<32x128xbf16, #tpu.memory_space<vmem>>, %arg15: memref<1x128xf32, #tpu.memory_space<vmem>>, %arg16: memref<32x128xbf16, #tpu.memory_space<vmem>>, %arg17: memref<1x128xf32, #tpu.memory_space<vmem>>, %arg18: memref<32x4xbf16, #tpu.memory_space<vmem>>, %arg19: memref<1x4xf32, #tpu.memory_space<vmem>>, %arg20: memref<2x4xf32, #tpu.memory_space<vmem>>, %arg21: memref<40x96xbf16, #tpu.memory_space<vmem>>, %arg22: memref<40x160xbf16, #tpu.memory_space<vmem>>, %arg23: memref<32x256xbf16, #tpu.memory_space<vmem>>, %arg24: memref<2x2560xbf16, #tpu.memory_space<vmem>>, %arg25: memref<32x2560xbf16, #tpu.memory_space<vmem>>, %arg26: memref<!tpu.dma_semaphore, #tpu.memory_space<semaphore_mem>>) attributes {dimension_semantics = [#tpu.dimension_semantics<arbitrary>], iteration_bounds = array<i64: 1>, scalar_prefetch = 0 : i64, scratch_operands = 6 : i64, tpu.core_type = #tpu.core_type<tc>, window_params = [{pipeline_mode = #tpu.pipeline_mode<synchronous>, transform_indices = @transform_0, window_bounds = array<i64: 40, 140>}, {pipeline_mode = #tpu.pipeline_mode<synchronous>, transform_indices = @transform_1, window_bounds = array<i64: 3, 140, 96>}, {pipeline_mode = #tpu.pipeline_mode<synchronous>, transform_indices = @transform_2, window_bounds = array<i64: 1, 96>}, {pipeline_mode = #tpu.pipeline_mode<synchronous>, transform_indices = @transform_3, window_bounds = array<i64: 1, 96>}, {pipeline_mode = #tpu.pipeline_mode<synchronous>, transform_indices = @transform_4, window_bounds = array<i64: 3, 96, 160>}, {pipeline_mode = #tpu.pipeline_mode<synchronous>, transform_indices = @transform_5, window_bounds = array<i64: 1, 160>}, {pipeline_mode = #tpu.pipeline_mode<synchronous>, transform_indices = @transform_6, window_bounds = array<i64: 1, 160>}, {pipeline_mode = #tpu.pipeline_mode<synchronous>, transform_indices = @transform_7, window_bounds = array<i64: 3, 160, 256>}, {pipeline_mode = #tpu.pipeline_mode<synchronous>, transform_indices = @transform_8, window_bounds = array<i64: 1, 256>}, {pipeline_mode = #tpu.pipeline_mode<synchronous>, transform_indices = @transform_9, window_bounds = array<i64: 1, 256>}, {}, {pipeline_mode = #tpu.pipeline_mode<synchronous>, transform_indices = @transform_11, window_bounds = array<i64: 1, 32>}, {pipeline_mode = #tpu.pipeline_mode<synchronous>, transform_indices = @transform_12, window_bounds = array<i64: 1, 32>}, {pipeline_mode = #tpu.pipeline_mode<synchronous>, transform_indices = @transform_13, window_bounds = array<i64: 32, 128>}, {pipeline_mode = #tpu.pipeline_mode<synchronous>, transform_indices = @transform_14, window_bounds = array<i64: 1, 128>}, {pipeline_mode = #tpu.pipeline_mode<synchronous>, transform_indices = @transform_15, window_bounds = array<i64: 32, 128>}, {pipeline_mode = #tpu.pipeline_mode<synchronous>, transform_indices = @transform_16, window_bounds = array<i64: 1, 128>}, {pipeline_mode = #tpu.pipeline_mode<synchronous>, transform_indices = @transform_17, window_bounds = array<i64: 32, 4>}, {pipeline_mode = #tpu.pipeline_mode<synchronous>, transform_indices = @transform_18, window_bounds = array<i64: 1, 4>}, {pipeline_mode = #tpu.pipeline_mode<synchronous>, transform_indices = @transform_19, window_bounds = array<i64: 2, 4>}]} {
    tpu.enqueue_dma source(%arg11 : memref<32x2560xbf16, #tpu.memory_space<any>>) target(%arg25 : memref<32x2560xbf16, #tpu.memory_space<vmem>>) target_semaphore(%arg26 : memref<!tpu.dma_semaphore, #tpu.memory_space<semaphore_mem>>)
    %c0 = arith.constant 0 : index
    %c0_0 = arith.constant 0 : index
    %0 = vector.load %arg1[%c0, %c0_0] : memref<40x140xbf16, #tpu.memory_space<vmem>>, vector<32x140xbf16>
    %c0_1 = arith.constant 0 : index
    %c0_2 = arith.constant 0 : index
    %c0_3 = arith.constant 0 : index
    %1 = vector.load %arg2[%c0_1, %c0_2, %c0_3] : memref<3x140x96xbf16, #tpu.memory_space<vmem>>, vector<1x140x96xbf16>
    %2 = vector.shape_cast %1 : vector<1x140x96xbf16> to vector<140x96xbf16>
    %cst = arith.constant dense<0.000000e+00> : vector<32x96xf32>
    %3 = tpu.matmul %0, %2, %cst {dimension_numbers = #tpu.dot_dimension_numbers<[1], [0], [0], [1], [0, 0, 1, 1], [], []>} : vector<32x140xbf16>, vector<140x96xbf16>, vector<32x96xf32> -> vector<32x96xf32>
    %c1 = arith.constant 1 : index
    %c0_4 = arith.constant 0 : index
    %4 = vector.load %arg1[%c1, %c0_4] : memref<40x140xbf16, #tpu.memory_space<vmem>>, vector<32x140xbf16>
    %c1_5 = arith.constant 1 : index
    %c0_6 = arith.constant 0 : index
    %c0_7 = arith.constant 0 : index
    %5 = vector.load %arg2[%c1_5, %c0_6, %c0_7] : memref<3x140x96xbf16, #tpu.memory_space<vmem>>, vector<1x140x96xbf16>
    %6 = vector.shape_cast %5 : vector<1x140x96xbf16> to vector<140x96xbf16>
    %cst_8 = arith.constant dense<0.000000e+00> : vector<32x96xf32>
    %7 = tpu.matmul %4, %6, %cst_8 {dimension_numbers = #tpu.dot_dimension_numbers<[1], [0], [0], [1], [0, 0, 1, 1], [], []>} : vector<32x140xbf16>, vector<140x96xbf16>, vector<32x96xf32> -> vector<32x96xf32>
    %8 = arith.addf %3, %7 : vector<32x96xf32>
    %c2 = arith.constant 2 : index
    %c0_9 = arith.constant 0 : index
    %9 = vector.load %arg1[%c2, %c0_9] : memref<40x140xbf16, #tpu.memory_space<vmem>>, vector<32x140xbf16>
    %c2_10 = arith.constant 2 : index
    %c0_11 = arith.constant 0 : index
    %c0_12 = arith.constant 0 : index
    %10 = vector.load %arg2[%c2_10, %c0_11, %c0_12] : memref<3x140x96xbf16, #tpu.memory_space<vmem>>, vector<1x140x96xbf16>
    %11 = vector.shape_cast %10 : vector<1x140x96xbf16> to vector<140x96xbf16>
    %cst_13 = arith.constant dense<0.000000e+00> : vector<32x96xf32>
    %12 = tpu.matmul %9, %11, %cst_13 {dimension_numbers = #tpu.dot_dimension_numbers<[1], [0], [0], [1], [0, 0, 1, 1], [], []>} : vector<32x140xbf16>, vector<140x96xbf16>, vector<32x96xf32> -> vector<32x96xf32>
    %13 = arith.addf %8, %12 : vector<32x96xf32>
    %c0_14 = arith.constant 0 : index
    %c0_15 = arith.constant 0 : index
    %14 = vector.load %arg3[%c0_14, %c0_15] : memref<1x96xf32, #tpu.memory_space<vmem>>, vector<1x96xf32>
    %15 = vector.broadcast %14 : vector<1x96xf32> to vector<32x96xf32>
    %16 = arith.mulf %13, %15 : vector<32x96xf32>
    %c0_16 = arith.constant 0 : index
    %c0_17 = arith.constant 0 : index
    %17 = vector.load %arg4[%c0_16, %c0_17] : memref<1x96xf32, #tpu.memory_space<vmem>>, vector<1x96xf32>
    %18 = vector.broadcast %17 : vector<1x96xf32> to vector<32x96xf32>
    %19 = arith.addf %16, %18 : vector<32x96xf32>
    %cst_18 = arith.constant 0.000000e+00 : f32
    %20 = vector.broadcast %cst_18 : f32 to vector<32x96xf32>
    %21 = arith.cmpf ogt, %19, %20 : vector<32x96xf32>
    %cst_19 = arith.constant 0.000000e+00 : f32
    %22 = vector.broadcast %cst_19 : f32 to vector<32x96xf32>
    %23 = arith.minimumf %19, %22 : vector<32x96xf32>
    %24 = math.exp %23 : vector<32x96xf32>
    %cst_20 = arith.constant 1.000000e+00 : f32
    %25 = vector.broadcast %cst_20 : f32 to vector<32x96xf32>
    %26 = arith.subf %24, %25 : vector<32x96xf32>
    %27 = arith.select %21, %19, %26 : vector<32x96xi1>, vector<32x96xf32>
    %28 = arith.truncf %27 : vector<32x96xf32> to vector<32x96xbf16>
    %c0_21 = arith.constant 0 : index
    %c0_22 = arith.constant 0 : index
    %29 = vector.load %arg21[%c0_21, %c0_22] : memref<40x96xbf16, #tpu.memory_space<vmem>>, vector<32x96xbf16>
    tpu.vector_store %arg21[%c0_21, %c0_22], %28 {strides = array<i32>} : memref<40x96xbf16, #tpu.memory_space<vmem>>, vector<32x96xbf16>,
    %cst_23 = arith.constant 0.000000e+00 : bf16
    %30 = vector.broadcast %cst_23 : bf16 to vector<8x96xbf16>
    %c32 = arith.constant 32 : index
    %c0_24 = arith.constant 0 : index
    %31 = vector.load %arg21[%c32, %c0_24] : memref<40x96xbf16, #tpu.memory_space<vmem>>, vector<8x96xbf16>
    tpu.vector_store %arg21[%c32, %c0_24], %30 {strides = array<i32>} : memref<40x96xbf16, #tpu.memory_space<vmem>>, vector<8x96xbf16>,
    %c0_25 = arith.constant 0 : index
    %c0_26 = arith.constant 0 : index
    %32 = vector.load %arg21[%c0_25, %c0_26] : memref<40x96xbf16, #tpu.memory_space<vmem>>, vector<32x96xbf16>
    %c0_27 = arith.constant 0 : index
    %c0_28 = arith.constant 0 : index
    %c0_29 = arith.constant 0 : index
    %33 = vector.load %arg5[%c0_27, %c0_28, %c0_29] : memref<3x96x160xbf16, #tpu.memory_space<vmem>>, vector<1x96x160xbf16>
    %34 = vector.shape_cast %33 : vector<1x96x160xbf16> to vector<96x160xbf16>
    %cst_30 = arith.constant dense<0.000000e+00> : vector<32x160xf32>
    %35 = tpu.matmul %32, %34, %cst_30 {dimension_numbers = #tpu.dot_dimension_numbers<[1], [0], [0], [1], [0, 0, 1, 1], [], []>} : vector<32x96xbf16>, vector<96x160xbf16>, vector<32x160xf32> -> vector<32x160xf32>
    %c1_31 = arith.constant 1 : index
    %c0_32 = arith.constant 0 : index
    %36 = vector.load %arg21[%c1_31, %c0_32] : memref<40x96xbf16, #tpu.memory_space<vmem>>, vector<32x96xbf16>
    %c1_33 = arith.constant 1 : index
    %c0_34 = arith.constant 0 : index
    %c0_35 = arith.constant 0 : index
    %37 = vector.load %arg5[%c1_33, %c0_34, %c0_35] : memref<3x96x160xbf16, #tpu.memory_space<vmem>>, vector<1x96x160xbf16>
    %38 = vector.shape_cast %37 : vector<1x96x160xbf16> to vector<96x160xbf16>
    %cst_36 = arith.constant dense<0.000000e+00> : vector<32x160xf32>
    %39 = tpu.matmul %36, %38, %cst_36 {dimension_numbers = #tpu.dot_dimension_numbers<[1], [0], [0], [1], [0, 0, 1, 1], [], []>} : vector<32x96xbf16>, vector<96x160xbf16>, vector<32x160xf32> -> vector<32x160xf32>
    %40 = arith.addf %35, %39 : vector<32x160xf32>
    %c2_37 = arith.constant 2 : index
    %c0_38 = arith.constant 0 : index
    %41 = vector.load %arg21[%c2_37, %c0_38] : memref<40x96xbf16, #tpu.memory_space<vmem>>, vector<32x96xbf16>
    %c2_39 = arith.constant 2 : index
    %c0_40 = arith.constant 0 : index
    %c0_41 = arith.constant 0 : index
    %42 = vector.load %arg5[%c2_39, %c0_40, %c0_41] : memref<3x96x160xbf16, #tpu.memory_space<vmem>>, vector<1x96x160xbf16>
    %43 = vector.shape_cast %42 : vector<1x96x160xbf16> to vector<96x160xbf16>
    %cst_42 = arith.constant dense<0.000000e+00> : vector<32x160xf32>
    %44 = tpu.matmul %41, %43, %cst_42 {dimension_numbers = #tpu.dot_dimension_numbers<[1], [0], [0], [1], [0, 0, 1, 1], [], []>} : vector<32x96xbf16>, vector<96x160xbf16>, vector<32x160xf32> -> vector<32x160xf32>
    %45 = arith.addf %40, %44 : vector<32x160xf32>
    %c0_43 = arith.constant 0 : index
    %c0_44 = arith.constant 0 : index
    %46 = vector.load %arg6[%c0_43, %c0_44] : memref<1x160xf32, #tpu.memory_space<vmem>>, vector<1x160xf32>
    %47 = vector.broadcast %46 : vector<1x160xf32> to vector<32x160xf32>
    %48 = arith.mulf %45, %47 : vector<32x160xf32>
    %c0_45 = arith.constant 0 : index
    %c0_46 = arith.constant 0 : index
    %49 = vector.load %arg7[%c0_45, %c0_46] : memref<1x160xf32, #tpu.memory_space<vmem>>, vector<1x160xf32>
    %50 = vector.broadcast %49 : vector<1x160xf32> to vector<32x160xf32>
    %51 = arith.addf %48, %50 : vector<32x160xf32>
    %cst_47 = arith.constant 0.000000e+00 : f32
    %52 = vector.broadcast %cst_47 : f32 to vector<32x160xf32>
    %53 = arith.cmpf ogt, %51, %52 : vector<32x160xf32>
    %cst_48 = arith.constant 0.000000e+00 : f32
    %54 = vector.broadcast %cst_48 : f32 to vector<32x160xf32>
    %55 = arith.minimumf %51, %54 : vector<32x160xf32>
    %56 = math.exp %55 : vector<32x160xf32>
    %cst_49 = arith.constant 1.000000e+00 : f32
    %57 = vector.broadcast %cst_49 : f32 to vector<32x160xf32>
    %58 = arith.subf %56, %57 : vector<32x160xf32>
    %59 = arith.select %53, %51, %58 : vector<32x160xi1>, vector<32x160xf32>
    %60 = arith.truncf %59 : vector<32x160xf32> to vector<32x160xbf16>
    %c0_50 = arith.constant 0 : index
    %c0_51 = arith.constant 0 : index
    %61 = vector.load %arg22[%c0_50, %c0_51] : memref<40x160xbf16, #tpu.memory_space<vmem>>, vector<32x160xbf16>
    tpu.vector_store %arg22[%c0_50, %c0_51], %60 {strides = array<i32>} : memref<40x160xbf16, #tpu.memory_space<vmem>>, vector<32x160xbf16>,
    %cst_52 = arith.constant 0.000000e+00 : bf16
    %62 = vector.broadcast %cst_52 : bf16 to vector<8x160xbf16>
    %c32_53 = arith.constant 32 : index
    %c0_54 = arith.constant 0 : index
    %63 = vector.load %arg22[%c32_53, %c0_54] : memref<40x160xbf16, #tpu.memory_space<vmem>>, vector<8x160xbf16>
    tpu.vector_store %arg22[%c32_53, %c0_54], %62 {strides = array<i32>} : memref<40x160xbf16, #tpu.memory_space<vmem>>, vector<8x160xbf16>,
    %c0_55 = arith.constant 0 : index
    %c0_56 = arith.constant 0 : index
    %64 = vector.load %arg22[%c0_55, %c0_56] : memref<40x160xbf16, #tpu.memory_space<vmem>>, vector<32x160xbf16>
    %c0_57 = arith.constant 0 : index
    %c0_58 = arith.constant 0 : index
    %c0_59 = arith.constant 0 : index
    %65 = vector.load %arg8[%c0_57, %c0_58, %c0_59] : memref<3x160x256xbf16, #tpu.memory_space<vmem>>, vector<1x160x256xbf16>
    %66 = vector.shape_cast %65 : vector<1x160x256xbf16> to vector<160x256xbf16>
    %cst_60 = arith.constant dense<0.000000e+00> : vector<32x256xf32>
    %67 = tpu.matmul %64, %66, %cst_60 {dimension_numbers = #tpu.dot_dimension_numbers<[1], [0], [0], [1], [0, 0, 1, 1], [], []>} : vector<32x160xbf16>, vector<160x256xbf16>, vector<32x256xf32> -> vector<32x256xf32>
    %c1_61 = arith.constant 1 : index
    %c0_62 = arith.constant 0 : index
    %68 = vector.load %arg22[%c1_61, %c0_62] : memref<40x160xbf16, #tpu.memory_space<vmem>>, vector<32x160xbf16>
    %c1_63 = arith.constant 1 : index
    %c0_64 = arith.constant 0 : index
    %c0_65 = arith.constant 0 : index
    %69 = vector.load %arg8[%c1_63, %c0_64, %c0_65] : memref<3x160x256xbf16, #tpu.memory_space<vmem>>, vector<1x160x256xbf16>
    %70 = vector.shape_cast %69 : vector<1x160x256xbf16> to vector<160x256xbf16>
    %cst_66 = arith.constant dense<0.000000e+00> : vector<32x256xf32>
    %71 = tpu.matmul %68, %70, %cst_66 {dimension_numbers = #tpu.dot_dimension_numbers<[1], [0], [0], [1], [0, 0, 1, 1], [], []>} : vector<32x160xbf16>, vector<160x256xbf16>, vector<32x256xf32> -> vector<32x256xf32>
    %72 = arith.addf %67, %71 : vector<32x256xf32>
    %c2_67 = arith.constant 2 : index
    %c0_68 = arith.constant 0 : index
    %73 = vector.load %arg22[%c2_67, %c0_68] : memref<40x160xbf16, #tpu.memory_space<vmem>>, vector<32x160xbf16>
    %c2_69 = arith.constant 2 : index
    %c0_70 = arith.constant 0 : index
    %c0_71 = arith.constant 0 : index
    %74 = vector.load %arg8[%c2_69, %c0_70, %c0_71] : memref<3x160x256xbf16, #tpu.memory_space<vmem>>, vector<1x160x256xbf16>
    %75 = vector.shape_cast %74 : vector<1x160x256xbf16> to vector<160x256xbf16>
    %cst_72 = arith.constant dense<0.000000e+00> : vector<32x256xf32>
    %76 = tpu.matmul %73, %75, %cst_72 {dimension_numbers = #tpu.dot_dimension_numbers<[1], [0], [0], [1], [0, 0, 1, 1], [], []>} : vector<32x160xbf16>, vector<160x256xbf16>, vector<32x256xf32> -> vector<32x256xf32>
    %77 = arith.addf %72, %76 : vector<32x256xf32>
    %c0_73 = arith.constant 0 : index
    %c0_74 = arith.constant 0 : index
    %78 = vector.load %arg9[%c0_73, %c0_74] : memref<1x256xf32, #tpu.memory_space<vmem>>, vector<1x256xf32>
    %79 = vector.broadcast %78 : vector<1x256xf32> to vector<32x256xf32>
    %80 = arith.mulf %77, %79 : vector<32x256xf32>
    %c0_75 = arith.constant 0 : index
    %c0_76 = arith.constant 0 : index
    %81 = vector.load %arg10[%c0_75, %c0_76] : memref<1x256xf32, #tpu.memory_space<vmem>>, vector<1x256xf32>
    %82 = vector.broadcast %81 : vector<1x256xf32> to vector<32x256xf32>
    %83 = arith.addf %80, %82 : vector<32x256xf32>
    %cst_77 = arith.constant 0.000000e+00 : f32
    %84 = vector.broadcast %cst_77 : f32 to vector<32x256xf32>
    %85 = arith.cmpf ogt, %83, %84 : vector<32x256xf32>
    %cst_78 = arith.constant 0.000000e+00 : f32
    %86 = vector.broadcast %cst_78 : f32 to vector<32x256xf32>
    %87 = arith.minimumf %83, %86 : vector<32x256xf32>
    %88 = math.exp %87 : vector<32x256xf32>
    %cst_79 = arith.constant 1.000000e+00 : f32
    %89 = vector.broadcast %cst_79 : f32 to vector<32x256xf32>
    %90 = arith.subf %88, %89 : vector<32x256xf32>
    %91 = arith.select %85, %83, %90 : vector<32x256xi1>, vector<32x256xf32>
    %92 = arith.truncf %91 : vector<32x256xf32> to vector<32x256xbf16>
    %c0_80 = arith.constant 0 : index
    %c0_81 = arith.constant 0 : index
    %93 = vector.load %arg23[%c0_80, %c0_81] : memref<32x256xbf16, #tpu.memory_space<vmem>>, vector<32x256xbf16>
    tpu.vector_store %arg23[%c0_80, %c0_81], %92 {strides = array<i32>} : memref<32x256xbf16, #tpu.memory_space<vmem>>, vector<32x256xbf16>,
    %c0_82 = arith.constant 0 : index
    %c0_83 = arith.constant 0 : index
    %94 = vector.load %arg23[%c0_82, %c0_83] : memref<32x256xbf16, #tpu.memory_space<vmem>>, vector<1x256xbf16>
    %c0_84 = arith.constant 0 : index
    %c0_85 = arith.constant 0 : index
    %95 = vector.load %arg24[%c0_84, %c0_85] : memref<2x2560xbf16, #tpu.memory_space<vmem>>, vector<1x256xbf16>
    tpu.vector_store %arg24[%c0_84, %c0_85], %94 {strides = array<i32>} : memref<2x2560xbf16, #tpu.memory_space<vmem>>, vector<1x256xbf16>,
    %c1_86 = arith.constant 1 : index
    %c0_87 = arith.constant 0 : index
    %96 = vector.load %arg23[%c1_86, %c0_87] : memref<32x256xbf16, #tpu.memory_space<vmem>>, vector<1x256xbf16>
    %c0_88 = arith.constant 0 : index
    %c256 = arith.constant 256 : index
    %97 = vector.load %arg24[%c0_88, %c256] : memref<2x2560xbf16, #tpu.memory_space<vmem>>, vector<1x256xbf16>
    tpu.vector_store %arg24[%c0_88, %c256], %96 {strides = array<i32>} : memref<2x2560xbf16, #tpu.memory_space<vmem>>, vector<1x256xbf16>,
    %c2_89 = arith.constant 2 : index
    %c0_90 = arith.constant 0 : index
    %98 = vector.load %arg23[%c2_89, %c0_90] : memref<32x256xbf16, #tpu.memory_space<vmem>>, vector<1x256xbf16>
    %c0_91 = arith.constant 0 : index
    %c512 = arith.constant 512 : index
    %99 = vector.load %arg24[%c0_91, %c512] : memref<2x2560xbf16, #tpu.memory_space<vmem>>, vector<1x256xbf16>
    tpu.vector_store %arg24[%c0_91, %c512], %98 {strides = array<i32>} : memref<2x2560xbf16, #tpu.memory_space<vmem>>, vector<1x256xbf16>,
    %c3 = arith.constant 3 : index
    %c0_92 = arith.constant 0 : index
    %100 = vector.load %arg23[%c3, %c0_92] : memref<32x256xbf16, #tpu.memory_space<vmem>>, vector<1x256xbf16>
    %c0_93 = arith.constant 0 : index
    %c768 = arith.constant 768 : index
    %101 = vector.load %arg24[%c0_93, %c768] : memref<2x2560xbf16, #tpu.memory_space<vmem>>, vector<1x256xbf16>
    tpu.vector_store %arg24[%c0_93, %c768], %100 {strides = array<i32>} : memref<2x2560xbf16, #tpu.memory_space<vmem>>, vector<1x256xbf16>,
    %c4 = arith.constant 4 : index
    %c0_94 = arith.constant 0 : index
    %102 = vector.load %arg23[%c4, %c0_94] : memref<32x256xbf16, #tpu.memory_space<vmem>>, vector<1x256xbf16>
    %c0_95 = arith.constant 0 : index
    %c1024 = arith.constant 1024 : index
    %103 = vector.load %arg24[%c0_95, %c1024] : memref<2x2560xbf16, #tpu.memory_space<vmem>>, vector<1x256xbf16>
    tpu.vector_store %arg24[%c0_95, %c1024], %102 {strides = array<i32>} : memref<2x2560xbf16, #tpu.memory_space<vmem>>, vector<1x256xbf16>,
    %c5 = arith.constant 5 : index
    %c0_96 = arith.constant 0 : index
    %104 = vector.load %arg23[%c5, %c0_96] : memref<32x256xbf16, #tpu.memory_space<vmem>>, vector<1x256xbf16>
    %c0_97 = arith.constant 0 : index
    %c1280 = arith.constant 1280 : index
    %105 = vector.load %arg24[%c0_97, %c1280] : memref<2x2560xbf16, #tpu.memory_space<vmem>>, vector<1x256xbf16>
    tpu.vector_store %arg24[%c0_97, %c1280], %104 {strides = array<i32>} : memref<2x2560xbf16, #tpu.memory_space<vmem>>, vector<1x256xbf16>,
    %c6 = arith.constant 6 : index
    %c0_98 = arith.constant 0 : index
    %106 = vector.load %arg23[%c6, %c0_98] : memref<32x256xbf16, #tpu.memory_space<vmem>>, vector<1x256xbf16>
    %c0_99 = arith.constant 0 : index
    %c1536 = arith.constant 1536 : index
    %107 = vector.load %arg24[%c0_99, %c1536] : memref<2x2560xbf16, #tpu.memory_space<vmem>>, vector<1x256xbf16>
    tpu.vector_store %arg24[%c0_99, %c1536], %106 {strides = array<i32>} : memref<2x2560xbf16, #tpu.memory_space<vmem>>, vector<1x256xbf16>,
    %c7 = arith.constant 7 : index
    %c0_100 = arith.constant 0 : index
    %108 = vector.load %arg23[%c7, %c0_100] : memref<32x256xbf16, #tpu.memory_space<vmem>>, vector<1x256xbf16>
    %c0_101 = arith.constant 0 : index
    %c1792 = arith.constant 1792 : index
    %109 = vector.load %arg24[%c0_101, %c1792] : memref<2x2560xbf16, #tpu.memory_space<vmem>>, vector<1x256xbf16>
    tpu.vector_store %arg24[%c0_101, %c1792], %108 {strides = array<i32>} : memref<2x2560xbf16, #tpu.memory_space<vmem>>, vector<1x256xbf16>,
    %c8 = arith.constant 8 : index
    %c0_102 = arith.constant 0 : index
    %110 = vector.load %arg23[%c8, %c0_102] : memref<32x256xbf16, #tpu.memory_space<vmem>>, vector<1x256xbf16>
    %c0_103 = arith.constant 0 : index
    %c2048 = arith.constant 2048 : index
    %111 = vector.load %arg24[%c0_103, %c2048] : memref<2x2560xbf16, #tpu.memory_space<vmem>>, vector<1x256xbf16>
    tpu.vector_store %arg24[%c0_103, %c2048], %110 {strides = array<i32>} : memref<2x2560xbf16, #tpu.memory_space<vmem>>, vector<1x256xbf16>,
    %c9 = arith.constant 9 : index
    %c0_104 = arith.constant 0 : index
    %112 = vector.load %arg23[%c9, %c0_104] : memref<32x256xbf16, #tpu.memory_space<vmem>>, vector<1x256xbf16>
    %c0_105 = arith.constant 0 : index
    %c2304 = arith.constant 2304 : index
    %113 = vector.load %arg24[%c0_105, %c2304] : memref<2x2560xbf16, #tpu.memory_space<vmem>>, vector<1x256xbf16>
    tpu.vector_store %arg24[%c0_105, %c2304], %112 {strides = array<i32>} : memref<2x2560xbf16, #tpu.memory_space<vmem>>, vector<1x256xbf16>,
    %c16 = arith.constant 16 : index
    %c0_106 = arith.constant 0 : index
    %114 = vector.load %arg23[%c16, %c0_106] : memref<32x256xbf16, #tpu.memory_space<vmem>>, vector<1x256xbf16>
    %c1_107 = arith.constant 1 : index
    %c0_108 = arith.constant 0 : index
    %115 = vector.load %arg24[%c1_107, %c0_108] : memref<2x2560xbf16, #tpu.memory_space<vmem>>, vector<1x256xbf16>
    tpu.vector_store %arg24[%c1_107, %c0_108], %114 {strides = array<i32>} : memref<2x2560xbf16, #tpu.memory_space<vmem>>, vector<1x256xbf16>,
    %c17 = arith.constant 17 : index
    %c0_109 = arith.constant 0 : index
    %116 = vector.load %arg23[%c17, %c0_109] : memref<32x256xbf16, #tpu.memory_space<vmem>>, vector<1x256xbf16>
    %c1_110 = arith.constant 1 : index
    %c256_111 = arith.constant 256 : index
    %117 = vector.load %arg24[%c1_110, %c256_111] : memref<2x2560xbf16, #tpu.memory_space<vmem>>, vector<1x256xbf16>
    tpu.vector_store %arg24[%c1_110, %c256_111], %116 {strides = array<i32>} : memref<2x2560xbf16, #tpu.memory_space<vmem>>, vector<1x256xbf16>,
    %c18 = arith.constant 18 : index
    %c0_112 = arith.constant 0 : index
    %118 = vector.load %arg23[%c18, %c0_112] : memref<32x256xbf16, #tpu.memory_space<vmem>>, vector<1x256xbf16>
    %c1_113 = arith.constant 1 : index
    %c512_114 = arith.constant 512 : index
    %119 = vector.load %arg24[%c1_113, %c512_114] : memref<2x2560xbf16, #tpu.memory_space<vmem>>, vector<1x256xbf16>
    tpu.vector_store %arg24[%c1_113, %c512_114], %118 {strides = array<i32>} : memref<2x2560xbf16, #tpu.memory_space<vmem>>, vector<1x256xbf16>,
    %c19 = arith.constant 19 : index
    %c0_115 = arith.constant 0 : index
    %120 = vector.load %arg23[%c19, %c0_115] : memref<32x256xbf16, #tpu.memory_space<vmem>>, vector<1x256xbf16>
    %c1_116 = arith.constant 1 : index
    %c768_117 = arith.constant 768 : index
    %121 = vector.load %arg24[%c1_116, %c768_117] : memref<2x2560xbf16, #tpu.memory_space<vmem>>, vector<1x256xbf16>
    tpu.vector_store %arg24[%c1_116, %c768_117], %120 {strides = array<i32>} : memref<2x2560xbf16, #tpu.memory_space<vmem>>, vector<1x256xbf16>,
    %c20 = arith.constant 20 : index
    %c0_118 = arith.constant 0 : index
    %122 = vector.load %arg23[%c20, %c0_118] : memref<32x256xbf16, #tpu.memory_space<vmem>>, vector<1x256xbf16>
    %c1_119 = arith.constant 1 : index
    %c1024_120 = arith.constant 1024 : index
    %123 = vector.load %arg24[%c1_119, %c1024_120] : memref<2x2560xbf16, #tpu.memory_space<vmem>>, vector<1x256xbf16>
    tpu.vector_store %arg24[%c1_119, %c1024_120], %122 {strides = array<i32>} : memref<2x2560xbf16, #tpu.memory_space<vmem>>, vector<1x256xbf16>,
    %c21 = arith.constant 21 : index
    %c0_121 = arith.constant 0 : index
    %124 = vector.load %arg23[%c21, %c0_121] : memref<32x256xbf16, #tpu.memory_space<vmem>>, vector<1x256xbf16>
    %c1_122 = arith.constant 1 : index
    %c1280_123 = arith.constant 1280 : index
    %125 = vector.load %arg24[%c1_122, %c1280_123] : memref<2x2560xbf16, #tpu.memory_space<vmem>>, vector<1x256xbf16>
    tpu.vector_store %arg24[%c1_122, %c1280_123], %124 {strides = array<i32>} : memref<2x2560xbf16, #tpu.memory_space<vmem>>, vector<1x256xbf16>,
    %c22 = arith.constant 22 : index
    %c0_124 = arith.constant 0 : index
    %126 = vector.load %arg23[%c22, %c0_124] : memref<32x256xbf16, #tpu.memory_space<vmem>>, vector<1x256xbf16>
    %c1_125 = arith.constant 1 : index
    %c1536_126 = arith.constant 1536 : index
    %127 = vector.load %arg24[%c1_125, %c1536_126] : memref<2x2560xbf16, #tpu.memory_space<vmem>>, vector<1x256xbf16>
    tpu.vector_store %arg24[%c1_125, %c1536_126], %126 {strides = array<i32>} : memref<2x2560xbf16, #tpu.memory_space<vmem>>, vector<1x256xbf16>,
    %c23 = arith.constant 23 : index
    %c0_127 = arith.constant 0 : index
    %128 = vector.load %arg23[%c23, %c0_127] : memref<32x256xbf16, #tpu.memory_space<vmem>>, vector<1x256xbf16>
    %c1_128 = arith.constant 1 : index
    %c1792_129 = arith.constant 1792 : index
    %129 = vector.load %arg24[%c1_128, %c1792_129] : memref<2x2560xbf16, #tpu.memory_space<vmem>>, vector<1x256xbf16>
    tpu.vector_store %arg24[%c1_128, %c1792_129], %128 {strides = array<i32>} : memref<2x2560xbf16, #tpu.memory_space<vmem>>, vector<1x256xbf16>,
    %c24 = arith.constant 24 : index
    %c0_130 = arith.constant 0 : index
    %130 = vector.load %arg23[%c24, %c0_130] : memref<32x256xbf16, #tpu.memory_space<vmem>>, vector<1x256xbf16>
    %c1_131 = arith.constant 1 : index
    %c2048_132 = arith.constant 2048 : index
    %131 = vector.load %arg24[%c1_131, %c2048_132] : memref<2x2560xbf16, #tpu.memory_space<vmem>>, vector<1x256xbf16>
    tpu.vector_store %arg24[%c1_131, %c2048_132], %130 {strides = array<i32>} : memref<2x2560xbf16, #tpu.memory_space<vmem>>, vector<1x256xbf16>,
    %c25 = arith.constant 25 : index
    %c0_133 = arith.constant 0 : index
    %132 = vector.load %arg23[%c25, %c0_133] : memref<32x256xbf16, #tpu.memory_space<vmem>>, vector<1x256xbf16>
    %c1_134 = arith.constant 1 : index
    %c2304_135 = arith.constant 2304 : index
    %133 = vector.load %arg24[%c1_134, %c2304_135] : memref<2x2560xbf16, #tpu.memory_space<vmem>>, vector<1x256xbf16>
    tpu.vector_store %arg24[%c1_134, %c2304_135], %132 {strides = array<i32>} : memref<2x2560xbf16, #tpu.memory_space<vmem>>, vector<1x256xbf16>,
    tpu.wait_dma2 semaphore(%arg26 : memref<!tpu.dma_semaphore, #tpu.memory_space<semaphore_mem>>) src(%arg11 : memref<32x2560xbf16, #tpu.memory_space<any>>) dst(%arg25 : memref<32x2560xbf16, #tpu.memory_space<vmem>>)
    %c0_136 = arith.constant 0 : index
    %c0_137 = arith.constant 0 : index
    %134 = vector.load %arg24[%c0_136, %c0_137] : memref<2x2560xbf16, #tpu.memory_space<vmem>>, vector<2x2560xbf16>
    %c0_138 = arith.constant 0 : index
    %c0_139 = arith.constant 0 : index
    %135 = vector.load %arg25[%c0_138, %c0_139] : memref<32x2560xbf16, #tpu.memory_space<vmem>>, vector<32x2560xbf16>
    %cst_140 = arith.constant dense<0.000000e+00> : vector<2x32xf32>
    %136 = tpu.matmul %134, %135, %cst_140 {dimension_numbers = #tpu.dot_dimension_numbers<[1], [1], [0], [0], [0, 0, 1, 0], [], []>} : vector<2x2560xbf16>, vector<32x2560xbf16>, vector<2x32xf32> -> vector<2x32xf32>
    %c0_141 = arith.constant 0 : index
    %c0_142 = arith.constant 0 : index
    %137 = vector.load %arg12[%c0_141, %c0_142] : memref<1x32xf32, #tpu.memory_space<vmem>>, vector<1x32xf32>
    %138 = vector.broadcast %137 : vector<1x32xf32> to vector<2x32xf32>
    %139 = arith.mulf %136, %138 : vector<2x32xf32>
    %c0_143 = arith.constant 0 : index
    %c0_144 = arith.constant 0 : index
    %140 = vector.load %arg13[%c0_143, %c0_144] : memref<1x32xf32, #tpu.memory_space<vmem>>, vector<1x32xf32>
    %141 = vector.broadcast %140 : vector<1x32xf32> to vector<2x32xf32>
    %142 = arith.addf %139, %141 : vector<2x32xf32>
    %cst_145 = arith.constant 0.000000e+00 : f32
    %143 = vector.broadcast %cst_145 : f32 to vector<2x32xf32>
    %144 = arith.cmpf ogt, %142, %143 : vector<2x32xf32>
    %cst_146 = arith.constant 0.000000e+00 : f32
    %145 = vector.broadcast %cst_146 : f32 to vector<2x32xf32>
    %146 = arith.minimumf %142, %145 : vector<2x32xf32>
    %147 = math.exp %146 : vector<2x32xf32>
    %cst_147 = arith.constant 1.000000e+00 : f32
    %148 = vector.broadcast %cst_147 : f32 to vector<2x32xf32>
    %149 = arith.subf %147, %148 : vector<2x32xf32>
    %150 = arith.select %144, %142, %149 : vector<2x32xi1>, vector<2x32xf32>
    %151 = arith.truncf %150 : vector<2x32xf32> to vector<2x32xbf16>
    %c0_148 = arith.constant 0 : index
    %c0_149 = arith.constant 0 : index
    %152 = vector.load %arg14[%c0_148, %c0_149] : memref<32x128xbf16, #tpu.memory_space<vmem>>, vector<32x128xbf16>
    %cst_150 = arith.constant dense<0.000000e+00> : vector<2x128xf32>
    %153 = tpu.matmul %151, %152, %cst_150 {dimension_numbers = #tpu.dot_dimension_numbers<[1], [0], [0], [1], [0, 0, 1, 1], [], []>} : vector<2x32xbf16>, vector<32x128xbf16>, vector<2x128xf32> -> vector<2x128xf32>
    %c0_151 = arith.constant 0 : index
    %c0_152 = arith.constant 0 : index
    %154 = vector.load %arg15[%c0_151, %c0_152] : memref<1x128xf32, #tpu.memory_space<vmem>>, vector<1x128xf32>
    %155 = vector.broadcast %154 : vector<1x128xf32> to vector<2x128xf32>
    %156 = arith.addf %153, %155 : vector<2x128xf32>
    %157 = vector.extract_strided_slice %156 {offsets = [0, 0], sizes = [2, 32], strides = [1, 1]} : vector<2x128xf32> to vector<2x32xf32>
    %cst_153 = arith.constant 0.000000e+00 : f32
    %158 = vector.broadcast %cst_153 : f32 to vector<2x32xf32>
    %159 = arith.subf %158, %157 : vector<2x32xf32>
    %160 = math.exp %159 : vector<2x32xf32>
    %cst_154 = arith.constant 1.000000e+00 : f32
    %161 = vector.broadcast %cst_154 : f32 to vector<2x32xf32>
    %162 = arith.addf %161, %160 : vector<2x32xf32>
    %cst_155 = arith.constant 1.000000e+00 : f32
    %163 = vector.broadcast %cst_155 : f32 to vector<2x32xf32>
    %164 = arith.divf %163, %162 : vector<2x32xf32>
    %165 = vector.extract_strided_slice %156 {offsets = [0, 32], sizes = [2, 32], strides = [1, 1]} : vector<2x128xf32> to vector<2x32xf32>
    %166 = math.tanh %165 : vector<2x32xf32>
    %167 = vector.extract_strided_slice %156 {offsets = [0, 64], sizes = [2, 32], strides = [1, 1]} : vector<2x128xf32> to vector<2x32xf32>
    %cst_156 = arith.constant 0.000000e+00 : f32
    %168 = vector.broadcast %cst_156 : f32 to vector<2x32xf32>
    %169 = arith.subf %168, %167 : vector<2x32xf32>
    %170 = math.exp %169 : vector<2x32xf32>
    %cst_157 = arith.constant 1.000000e+00 : f32
    %171 = vector.broadcast %cst_157 : f32 to vector<2x32xf32>
    %172 = arith.addf %171, %170 : vector<2x32xf32>
    %cst_158 = arith.constant 1.000000e+00 : f32
    %173 = vector.broadcast %cst_158 : f32 to vector<2x32xf32>
    %174 = arith.divf %173, %172 : vector<2x32xf32>
    %175 = arith.mulf %164, %166 : vector<2x32xf32>
    %176 = math.tanh %175 : vector<2x32xf32>
    %177 = arith.mulf %174, %176 : vector<2x32xf32>
    %178 = arith.truncf %177 : vector<2x32xf32> to vector<2x32xbf16>
    %c0_159 = arith.constant 0 : index
    %c0_160 = arith.constant 0 : index
    %179 = vector.load %arg16[%c0_159, %c0_160] : memref<32x128xbf16, #tpu.memory_space<vmem>>, vector<32x128xbf16>
    %cst_161 = arith.constant dense<0.000000e+00> : vector<2x128xf32>
    %180 = tpu.matmul %178, %179, %cst_161 {dimension_numbers = #tpu.dot_dimension_numbers<[1], [0], [0], [1], [0, 0, 1, 1], [], []>} : vector<2x32xbf16>, vector<32x128xbf16>, vector<2x128xf32> -> vector<2x128xf32>
    %c0_162 = arith.constant 0 : index
    %c0_163 = arith.constant 0 : index
    %181 = vector.load %arg17[%c0_162, %c0_163] : memref<1x128xf32, #tpu.memory_space<vmem>>, vector<1x128xf32>
    %182 = vector.broadcast %181 : vector<1x128xf32> to vector<2x128xf32>
    %183 = arith.addf %180, %182 : vector<2x128xf32>
    %184 = vector.extract_strided_slice %183 {offsets = [0, 0], sizes = [2, 32], strides = [1, 1]} : vector<2x128xf32> to vector<2x32xf32>
    %cst_164 = arith.constant 0.000000e+00 : f32
    %185 = vector.broadcast %cst_164 : f32 to vector<2x32xf32>
    %186 = arith.subf %185, %184 : vector<2x32xf32>
    %187 = math.exp %186 : vector<2x32xf32>
    %cst_165 = arith.constant 1.000000e+00 : f32
    %188 = vector.broadcast %cst_165 : f32 to vector<2x32xf32>
    %189 = arith.addf %188, %187 : vector<2x32xf32>
    %cst_166 = arith.constant 1.000000e+00 : f32
    %190 = vector.broadcast %cst_166 : f32 to vector<2x32xf32>
    %191 = arith.divf %190, %189 : vector<2x32xf32>
    %192 = vector.extract_strided_slice %183 {offsets = [0, 32], sizes = [2, 32], strides = [1, 1]} : vector<2x128xf32> to vector<2x32xf32>
    %193 = math.tanh %192 : vector<2x32xf32>
    %194 = vector.extract_strided_slice %183 {offsets = [0, 64], sizes = [2, 32], strides = [1, 1]} : vector<2x128xf32> to vector<2x32xf32>
    %cst_167 = arith.constant 0.000000e+00 : f32
    %195 = vector.broadcast %cst_167 : f32 to vector<2x32xf32>
    %196 = arith.subf %195, %194 : vector<2x32xf32>
    %197 = math.exp %196 : vector<2x32xf32>
    %cst_168 = arith.constant 1.000000e+00 : f32
    %198 = vector.broadcast %cst_168 : f32 to vector<2x32xf32>
    %199 = arith.addf %198, %197 : vector<2x32xf32>
    %cst_169 = arith.constant 1.000000e+00 : f32
    %200 = vector.broadcast %cst_169 : f32 to vector<2x32xf32>
    %201 = arith.divf %200, %199 : vector<2x32xf32>
    %202 = arith.mulf %191, %193 : vector<2x32xf32>
    %203 = math.tanh %202 : vector<2x32xf32>
    %204 = arith.mulf %201, %203 : vector<2x32xf32>
    %205 = arith.truncf %204 : vector<2x32xf32> to vector<2x32xbf16>
    %c0_170 = arith.constant 0 : index
    %c0_171 = arith.constant 0 : index
    %206 = vector.load %arg18[%c0_170, %c0_171] : memref<32x4xbf16, #tpu.memory_space<vmem>>, vector<32x4xbf16>
    %cst_172 = arith.constant dense<0.000000e+00> : vector<2x4xf32>
    %207 = tpu.matmul %205, %206, %cst_172 {dimension_numbers = #tpu.dot_dimension_numbers<[1], [0], [0], [1], [0, 0, 1, 1], [], []>} : vector<2x32xbf16>, vector<32x4xbf16>, vector<2x4xf32> -> vector<2x4xf32>
    %c0_173 = arith.constant 0 : index
    %c0_174 = arith.constant 0 : index
    %208 = vector.load %arg19[%c0_173, %c0_174] : memref<1x4xf32, #tpu.memory_space<vmem>>, vector<1x4xf32>
    %209 = vector.broadcast %208 : vector<1x4xf32> to vector<2x4xf32>
    %210 = arith.addf %207, %209 : vector<2x4xf32>
    %c0_175 = arith.constant 0 : index
    %c0_176 = arith.constant 0 : index
    %211 = vector.load %arg20[%c0_175, %c0_176] : memref<2x4xf32, #tpu.memory_space<vmem>>, vector<2x4xf32>
    tpu.vector_store %arg20[%c0_175, %c0_176], %210 {strides = array<i32>} : memref<2x4xf32, #tpu.memory_space<vmem>>, vector<2x4xf32>,
    return
  }
  func.func @transform_0(%arg0: i32) -> (i32, i32) {
    %c0_i32 = arith.constant 0 : i32
    %c0_i32_0 = arith.constant 0 : i32
    %c0_i32_1 = arith.constant 0 : i32
    return %c0_i32, %c0_i32_0 : i32, i32
  }
  func.func @transform_1(%arg0: i32) -> (i32, i32, i32) {
    %c0_i32 = arith.constant 0 : i32
    %c0_i32_0 = arith.constant 0 : i32
    %c0_i32_1 = arith.constant 0 : i32
    %c0_i32_2 = arith.constant 0 : i32
    return %c0_i32, %c0_i32_0, %c0_i32_1 : i32, i32, i32
  }
  func.func @transform_2(%arg0: i32) -> (i32, i32) {
    %c0_i32 = arith.constant 0 : i32
    %c0_i32_0 = arith.constant 0 : i32
    %c0_i32_1 = arith.constant 0 : i32
    return %c0_i32, %c0_i32_0 : i32, i32
  }
  func.func @transform_3(%arg0: i32) -> (i32, i32) {
    %c0_i32 = arith.constant 0 : i32
    %c0_i32_0 = arith.constant 0 : i32
    %c0_i32_1 = arith.constant 0 : i32
    return %c0_i32, %c0_i32_0 : i32, i32
  }
  func.func @transform_4(%arg0: i32) -> (i32, i32, i32) {
    %c0_i32 = arith.constant 0 : i32
    %c0_i32_0 = arith.constant 0 : i32
    %c0_i32_1 = arith.constant 0 : i32
    %c0_i32_2 = arith.constant 0 : i32
    return %c0_i32, %c0_i32_0, %c0_i32_1 : i32, i32, i32
  }
  func.func @transform_5(%arg0: i32) -> (i32, i32) {
    %c0_i32 = arith.constant 0 : i32
    %c0_i32_0 = arith.constant 0 : i32
    %c0_i32_1 = arith.constant 0 : i32
    return %c0_i32, %c0_i32_0 : i32, i32
  }
  func.func @transform_6(%arg0: i32) -> (i32, i32) {
    %c0_i32 = arith.constant 0 : i32
    %c0_i32_0 = arith.constant 0 : i32
    %c0_i32_1 = arith.constant 0 : i32
    return %c0_i32, %c0_i32_0 : i32, i32
  }
  func.func @transform_7(%arg0: i32) -> (i32, i32, i32) {
    %c0_i32 = arith.constant 0 : i32
    %c0_i32_0 = arith.constant 0 : i32
    %c0_i32_1 = arith.constant 0 : i32
    %c0_i32_2 = arith.constant 0 : i32
    return %c0_i32, %c0_i32_0, %c0_i32_1 : i32, i32, i32
  }
  func.func @transform_8(%arg0: i32) -> (i32, i32) {
    %c0_i32 = arith.constant 0 : i32
    %c0_i32_0 = arith.constant 0 : i32
    %c0_i32_1 = arith.constant 0 : i32
    return %c0_i32, %c0_i32_0 : i32, i32
  }
  func.func @transform_9(%arg0: i32) -> (i32, i32) {
    %c0_i32 = arith.constant 0 : i32
    %c0_i32_0 = arith.constant 0 : i32
    %c0_i32_1 = arith.constant 0 : i32
    return %c0_i32, %c0_i32_0 : i32, i32
  }
  func.func @transform_11(%arg0: i32) -> (i32, i32) {
    %c0_i32 = arith.constant 0 : i32
    %c0_i32_0 = arith.constant 0 : i32
    %c0_i32_1 = arith.constant 0 : i32
    return %c0_i32, %c0_i32_0 : i32, i32
  }
  func.func @transform_12(%arg0: i32) -> (i32, i32) {
    %c0_i32 = arith.constant 0 : i32
    %c0_i32_0 = arith.constant 0 : i32
    %c0_i32_1 = arith.constant 0 : i32
    return %c0_i32, %c0_i32_0 : i32, i32
  }
  func.func @transform_13(%arg0: i32) -> (i32, i32) {
    %c0_i32 = arith.constant 0 : i32
    %c0_i32_0 = arith.constant 0 : i32
    %c0_i32_1 = arith.constant 0 : i32
    return %c0_i32, %c0_i32_0 : i32, i32
  }
  func.func @transform_14(%arg0: i32) -> (i32, i32) {
    %c0_i32 = arith.constant 0 : i32
    %c0_i32_0 = arith.constant 0 : i32
    %c0_i32_1 = arith.constant 0 : i32
    return %c0_i32, %c0_i32_0 : i32, i32
  }
  func.func @transform_15(%arg0: i32) -> (i32, i32) {
    %c0_i32 = arith.constant 0 : i32
    %c0_i32_0 = arith.constant 0 : i32
    %c0_i32_1 = arith.constant 0 : i32
    return %c0_i32, %c0_i32_0 : i32, i32
  }
  func.func @transform_16(%arg0: i32) -> (i32, i32) {
    %c0_i32 = arith.constant 0 : i32
    %c0_i32_0 = arith.constant 0 : i32
    %c0_i32_1 = arith.constant 0 : i32
    return %c0_i32, %c0_i32_0 : i32, i32
  }
  func.func @transform_17(%arg0: i32) -> (i32, i32) {
    %c0_i32 = arith.constant 0 : i32
    %c0_i32_0 = arith.constant 0 : i32
    %c0_i32_1 = arith.constant 0 : i32
    return %c0_i32, %c0_i32_0 : i32, i32
  }
  func.func @transform_18(%arg0: i32) -> (i32, i32) {
    %c0_i32 = arith.constant 0 : i32
    %c0_i32_0 = arith.constant 0 : i32
    %c0_i32_1 = arith.constant 0 : i32
    return %c0_i32, %c0_i32_0 : i32, i32
  }
  func.func @transform_19(%arg0: i32) -> (i32, i32) {
    %c0_i32 = arith.constant 0 : i32
    %c0_i32_0 = arith.constant 0 : i32
    %c0_i32_1 = arith.constant 0 : i32
    return %c0_i32, %c0_i32_0 : i32, i32
  }
}

</mosaic_0001>

<llo_original>
// kernel: cnn_lstm_forward.1
$region0: #{cnn_lstm_forward.1}
  #allocation0 [shape = 'u32[]', space=smem, size = 0x4, offset = 0x4, fixed_abs, tag = 'smem constant byte address 0x4 - core index']
  #allocation1 [shape = 'u32[144,128]{1,0:T(1,128)}', space=vmem, size = 0x12000, scoped, tag = 'internal scratch']
  #allocation2 [shape = 'bf16[40,96]{1,0:T(8,128)(2,1)}', space=vmem, size = 0x2800, scoped, tag = 'scratch operand']
  #allocation3 [shape = 'bf16[40,160]{1,0:T(8,128)(2,1)}', space=vmem, size = 0x5000, scoped, tag = 'scratch operand']
  #allocation4 [shape = 'bf16[32,256]{1,0:T(16,128)(2,1)}', space=vmem, size = 0x4000, scoped, tag = 'scratch operand']
  #allocation5 [shape = 'bf16[2,2560]{1,0:T(2,128)(2,1)}', space=vmem, size = 0x2800, scoped, tag = 'scratch operand']
  #allocation6 [shape = 'bf16[32,2560]{1,0:T(16,128)(2,1)}', space=vmem, size = 0x28000, scoped, tag = 'scratch operand']
  #allocation7 [shape = 's32[1]{0}', space=sflag, size = 0x4, scoped, tag = 'scratch operand']
  #allocation10 [shape = 's32[]', space=sflag, size = 0x4, offset = 0, fixed_abs, tag = 'sflag constant byte address 0x0 - dummy sync flag']
  %s0 = inlined_call_operand.vmem [shape: bf16[40,140], index: 0, kind: input, shape index: {}]
  %s1 = inlined_call_operand.vmem [shape: bf16[3,140,96], index: 1, kind: input, shape index: {}]
  %s2 = inlined_call_operand.vmem [shape: f32[1,96], index: 2, kind: input, shape index: {}]
  %s3 = inlined_call_operand.vmem [shape: f32[1,96], index: 3, kind: input, shape index: {}]
  %s4 = inlined_call_operand.vmem [shape: bf16[3,96,160], index: 4, kind: input, shape index: {}]
  %s5 = inlined_call_operand.vmem [shape: f32[1,160], index: 5, kind: input, shape index: {}]
  %s6 = inlined_call_operand.vmem [shape: f32[1,160], index: 6, kind: input, shape index: {}]
  %s7 = inlined_call_operand.vmem [shape: bf16[3,160,256], index: 7, kind: input, shape index: {}]
  %s8 = inlined_call_operand.vmem [shape: f32[1,256], index: 8, kind: input, shape index: {}]
  %s9 = inlined_call_operand.vmem [shape: f32[1,256], index: 9, kind: input, shape index: {}]
  %s10 = inlined_call_operand.vmem [shape: bf16[32,2560], index: 10, kind: input, shape index: {}]
  %s11 = inlined_call_operand.vmem [shape: f32[1,32], index: 11, kind: input, shape index: {}]
  %s12 = inlined_call_operand.vmem [shape: f32[1,32], index: 12, kind: input, shape index: {}]
  %s13 = inlined_call_operand.vmem [shape: bf16[32,128], index: 13, kind: input, shape index: {}]
  %s14 = inlined_call_operand.vmem [shape: f32[1,128], index: 14, kind: input, shape index: {}]
  %s15 = inlined_call_operand.vmem [shape: bf16[32,128], index: 15, kind: input, shape index: {}]
  %s16 = inlined_call_operand.vmem [shape: f32[1,128], index: 16, kind: input, shape index: {}]
  %s17 = inlined_call_operand.vmem [shape: bf16[32,4], index: 17, kind: input, shape index: {}]
  %s18 = inlined_call_operand.vmem [shape: f32[1,4], index: 18, kind: input, shape index: {}]
  %s19 = inlined_call_operand.hbm [shape: f32[2,4], index: 19, kind: output, shape index: {}]
  %s20 = sld [smem:[#allocation0]]
  $region119: #{cnn_lstm_forward.1} parent=0
    _
  %s22 = ssub.s32 1, %s20
  %s23 = scalar_select 0, %s22, %s20
  $region1: #{cnn_lstm_forward.1} parent=0
    #allocation8 [shape = 'u8[1024]{0}', space=vmem, size = 0x400, scoped, tag = 'output window, operand 0, single buffered']
    #allocation9 [shape = 's32[1]{0}', space=sflag, size = 0x4, scoped, tag = 'scoped memory for cnn_lstm_forward.1']
    %24 = vsyncpa [#allocation9], 0
    // Predicated region
    $region2: #{cnn_lstm_forward.1} parent=1 // pred_check
      _
    $region3: #{cnn_lstm_forward.1} parent=1 // pred_check_branch
      %26 = sbr.rel (0) target = $region5
    $region4: #{cnn_lstm_forward.1} parent=1 // pred_region
      _
    $region5: #{cnn_lstm_forward.1} parent=1 // pred_fallthru
      _
    // Predicated region
    $region6: #{cnn_lstm_forward.1} parent=1 // pred_check
      _
    $region7: #{cnn_lstm_forward.1} parent=1 // pred_check_branch
      %28 = sbr.rel (0) target = $region9
    $region8: #{cnn_lstm_forward.1} parent=1 // pred_region
      _
    $region9: #{cnn_lstm_forward.1} parent=1 // pred_fallthru
      _
    // Predicated region
    $region10: #{cnn_lstm_forward.1} parent=1 // pred_check
      _
    $region11: #{cnn_lstm_forward.1} parent=1 // pred_check_branch
      %30 = sbr.rel (0) target = $region13
    $region12: #{cnn_lstm_forward.1} parent=1 // pred_region
      _
    $region13: #{cnn_lstm_forward.1} parent=1 // pred_fallthru
      _
    // Predicated region
    $region14: #{cnn_lstm_forward.1} parent=1 // pred_check
      _
    $region15: #{cnn_lstm_forward.1} parent=1 // pred_check_branch
      %32 = sbr.rel (0) target = $region17
    $region16: #{cnn_lstm_forward.1} parent=1 // pred_region
      _
    $region17: #{cnn_lstm_forward.1} parent=1 // pred_fallthru
      _
    // Predicated region
    $region18: #{cnn_lstm_forward.1} parent=1 // pred_check
      _
    $region19: #{cnn_lstm_forward.1} parent=1 // pred_check_branch
      %34 = sbr.rel (0) target = $region21
    $region20: #{cnn_lstm_forward.1} parent=1 // pred_region
      _
    $region21: #{cnn_lstm_forward.1} parent=1 // pred_fallthru
      _
    // Predicated region
    $region22: #{cnn_lstm_forward.1} parent=1 // pred_check
      _
    $region23: #{cnn_lstm_forward.1} parent=1 // pred_check_branch
      %36 = sbr.rel (0) target = $region25
    $region24: #{cnn_lstm_forward.1} parent=1 // pred_region
      _
    $region25: #{cnn_lstm_forward.1} parent=1 // pred_fallthru
      _
    // Predicated region
    $region26: #{cnn_lstm_forward.1} parent=1 // pred_check
      _
    $region27: #{cnn_lstm_forward.1} parent=1 // pred_check_branch
      %38 = sbr.rel (0) target = $region29
    $region28: #{cnn_lstm_forward.1} parent=1 // pred_region
      _
    $region29: #{cnn_lstm_forward.1} parent=1 // pred_fallthru
      _
    // Predicated region
    $region30: #{cnn_lstm_forward.1} parent=1 // pred_check
      _
    $region31: #{cnn_lstm_forward.1} parent=1 // pred_check_branch
      %40 = sbr.rel (0) target = $region33
    $region32: #{cnn_lstm_forward.1} parent=1 // pred_region
      _
    $region33: #{cnn_lstm_forward.1} parent=1 // pred_fallthru
      _
    // Predicated region
    $region34: #{cnn_lstm_forward.1} parent=1 // pred_check
      _
    $region35: #{cnn_lstm_forward.1} parent=1 // pred_check_branch
      %42 = sbr.rel (0) target = $region37
    $region36: #{cnn_lstm_forward.1} parent=1 // pred_region
      _
    $region37: #{cnn_lstm_forward.1} parent=1 // pred_fallthru
      _
    // Predicated region
    $region38: #{cnn_lstm_forward.1} parent=1 // pred_check
      _
    $region39: #{cnn_lstm_forward.1} parent=1 // pred_check_branch
      %44 = sbr.rel (0) target = $region41
    $region40: #{cnn_lstm_forward.1} parent=1 // pred_region
      _
    $region41: #{cnn_lstm_forward.1} parent=1 // pred_fallthru
      _
    // Predicated region
    $region42: #{cnn_lstm_forward.1} parent=1 // pred_check
      _
    $region43: #{cnn_lstm_forward.1} parent=1 // pred_check_branch
      %46 = sbr.rel (0) target = $region45
    $region44: #{cnn_lstm_forward.1} parent=1 // pred_region
      _
    $region45: #{cnn_lstm_forward.1} parent=1 // pred_fallthru
      _
    // Predicated region
    $region46: #{cnn_lstm_forward.1} parent=1 // pred_check
      _
    $region47: #{cnn_lstm_forward.1} parent=1 // pred_check_branch
      %48 = sbr.rel (0) target = $region49
    $region48: #{cnn_lstm_forward.1} parent=1 // pred_region
      _
    $region49: #{cnn_lstm_forward.1} parent=1 // pred_fallthru
      _
    // Predicated region
    $region50: #{cnn_lstm_forward.1} parent=1 // pred_check
      _
    $region51: #{cnn_lstm_forward.1} parent=1 // pred_check_branch
      %50 = sbr.rel (0) target = $region53
    $region52: #{cnn_lstm_forward.1} parent=1 // pred_region
      _
    $region53: #{cnn_lstm_forward.1} parent=1 // pred_fallthru
      _
    // Predicated region
    $region54: #{cnn_lstm_forward.1} parent=1 // pred_check
      _
    $region55: #{cnn_lstm_forward.1} parent=1 // pred_check_branch
      %52 = sbr.rel (0) target = $region57
    $region56: #{cnn_lstm_forward.1} parent=1 // pred_region
      _
    $region57: #{cnn_lstm_forward.1} parent=1 // pred_fallthru
      _
    // Predicated region
    $region58: #{cnn_lstm_forward.1} parent=1 // pred_check
      _
    $region59: #{cnn_lstm_forward.1} parent=1 // pred_check_branch
      %54 = sbr.rel (0) target = $region61
    $region60: #{cnn_lstm_forward.1} parent=1 // pred_region
      _
    $region61: #{cnn_lstm_forward.1} parent=1 // pred_fallthru
      _
    // Predicated region
    $region62: #{cnn_lstm_forward.1} parent=1 // pred_check
      _
    $region63: #{cnn_lstm_forward.1} parent=1 // pred_check_branch
      %56 = sbr.rel (0) target = $region65
    $region64: #{cnn_lstm_forward.1} parent=1 // pred_region
      _
    $region65: #{cnn_lstm_forward.1} parent=1 // pred_fallthru
      _
    // Predicated region
    $region66: #{cnn_lstm_forward.1} parent=1 // pred_check
      _
    $region67: #{cnn_lstm_forward.1} parent=1 // pred_check_branch
      %58 = sbr.rel (0) target = $region69
    $region68: #{cnn_lstm_forward.1} parent=1 // pred_region
      _
    $region69: #{cnn_lstm_forward.1} parent=1 // pred_fallthru
      _
    // Predicated region
    $region70: #{cnn_lstm_forward.1} parent=1 // pred_check
      _
    $region71: #{cnn_lstm_forward.1} parent=1 // pred_check_branch
      %60 = sbr.rel (0) target = $region73
    $region72: #{cnn_lstm_forward.1} parent=1 // pred_region
      _
    $region73: #{cnn_lstm_forward.1} parent=1 // pred_fallthru
      _
    %p63 = scmp.lt.u32.totalorder 4, 8
    %p64 = pneg %p63
    // Predicated region
    $region74: #{cnn_lstm_forward.1} parent=1 // pred_check
      _
    $region75: #{cnn_lstm_forward.1} parent=1 // pred_check_branch
      %66 = sbr.rel (%p63) target = $region77
    $region76: #{cnn_lstm_forward.1} parent=1 // pred_region
      %s239 = sand.u32 4, 7
      %p240 = scmp.eq.s32.totalorder %s239, 0
      %p241 = pneg %p240
      // Predicated region
      $region89: #{cnn_lstm_forward.1} parent=76 // pred_check
        _
      $region90: #{cnn_lstm_forward.1} parent=76 // pred_check_branch
        %243 = sbr.rel (%p240) target = $region92
      $region91: #{cnn_lstm_forward.1} parent=76 // pred_region
        %s244 = sand.u32 4, 7
        %s245 = ssub.s32 4, %s244
        %s246 = scalar_lea.vmem %s10, %s245
        %s247 = ssub.s32 4, %s244
        %s248 = scalar_lea.vmem [#allocation6], %s247
        loop: start=0, step=1, limit=1
        $region93: #{cnn_lstm_forward.1} parent=91 // loop_pre_header
          _
        $region94: #{cnn_lstm_forward.1} parent=91 // loop_header
          %s250 = sphi 0, %s254
          %p251 = scmp.ge.s32.totalorder %s250, 1
          %s255 = sphi %s10, %s10
          %s256 = sphi [#allocation6], [#allocation6]
        $region95: #{cnn_lstm_forward.1} parent=91 // loop_header_branch
          %253 = sbr.rel (%p251) target = $region99
        $region96: #{cnn_lstm_forward.1} parent=91 // loop_body
          _
        $region97: #{cnn_lstm_forward.1} parent=91 // loop_footer
          %s254 = sadd.s32 1, %s250
        $region98: #{cnn_lstm_forward.1} parent=91 // loop_footer_branch
          %249 = sbr.rel target = $region94
        $region99: #{cnn_lstm_forward.1} parent=91 // loop_exit
          _
        %s257 = sshllo.u32 0, %s244
        loop: start=0, step=1, limit=1
        $region100: #{cnn_lstm_forward.1} parent=91 // loop_pre_header
          _
        $region101: #{cnn_lstm_forward.1} parent=91 // loop_header
          %s259 = sphi 0, %s263
          %p260 = scmp.ge.s32.totalorder %s259, 1
          %s264 = sphi %s246, %s246
          %s265 = sphi %s248, %s248
        $region102: #{cnn_lstm_forward.1} parent=91 // loop_header_branch
          %262 = sbr.rel (%p260) target = $region106
        $region103: #{cnn_lstm_forward.1} parent=91 // loop_body
          %v266 = vld [vmem:[%s264] sm:%s257]
          %267 = vst [vmem:[%s265] sm:%s257] %v266
          %v268 = vld [vmem:[%s264 + $0x50] sm:%s257]
          %269 = vst [vmem:[%s265 + $0x4] sm:%s257] %v268
          %v270 = vld [vmem:[%s264 + $0x4] sm:%s257]
          %271 = vst [vmem:[%s265 + $0x8] sm:%s257] %v270
          %v272 = vld [vmem:[%s264 + $0x54] sm:%s257]
          %273 = vst [vmem:[%s265 + $0xc] sm:%s257] %v272
          %v274 = vld [vmem:[%s264 + $0x8] sm:%s257]
          %275 = vst [vmem:[%s265 + $0x10] sm:%s257] %v274
          %v276 = vld [vmem:[%s264 + $0x58] sm:%s257]
          %277 = vst [vmem:[%s265 + $0x14] sm:%s257] %v276
          %v278 = vld [vmem:[%s264 + $0xc] sm:%s257]
          %279 = vst [vmem:[%s265 + $0x18] sm:%s257] %v278
          %v280 = vld [vmem:[%s264 + $0x5c] sm:%s257]
          %281 = vst [vmem:[%s265 + $0x1c] sm:%s257] %v280
          %v282 = vld [vmem:[%s264 + $0x10] sm:%s257]
          %283 = vst [vmem:[%s265 + $0x20] sm:%s257] %v282
          %v284 = vld [vmem:[%s264 + $0x60] sm:%s257]
          %285 = vst [vmem:[%s265 + $0x24] sm:%s257] %v284
          %v286 = vld [vmem:[%s264 + $0x14] sm:%s257]
          %287 = vst [vmem:[%s265 + $0x28] sm:%s257] %v286
          %v288 = vld [vmem:[%s264 + $0x64] sm:%s257]
          %289 = vst [vmem:[%s265 + $0x2c] sm:%s257] %v288
          %v290 = vld [vmem:[%s264 + $0x18] sm:%s257]
          %291 = vst [vmem:[%s265 + $0x30] sm:%s257] %v290
          %v292 = vld [vmem:[%s264 + $0x68] sm:%s257]
          %293 = vst [vmem:[%s265 + $0x34] sm:%s257] %v292
          %v294 = vld [vmem:[%s264 + $0x1c] sm:%s257]
          %295 = vst [vmem:[%s265 + $0x38] sm:%s257] %v294
          %v296 = vld [vmem:[%s264 + $0x6c] sm:%s257]
          %297 = vst [vmem:[%s265 + $0x3c] sm:%s257] %v296
          %v298 = vld [vmem:[%s264 + $0x20] sm:%s257]
          %299 = vst [vmem:[%s265 + $0x40] sm:%s257] %v298
          %v300 = vld [vmem:[%s264 + $0x70] sm:%s257]
          %301 = vst [vmem:[%s265 + $0x44] sm:%s257] %v300
          %v302 = vld [vmem:[%s264 + $0x24] sm:%s257]
          %303 = vst [vmem:[%s265 + $0x48] sm:%s257] %v302
          %v304 = vld [vmem:[%s264 + $0x74] sm:%s257]
          %305 = vst [vmem:[%s265 + $0x4c] sm:%s257] %v304
          %v306 = vld [vmem:[%s264 + $0x28] sm:%s257]
          %307 = vst [vmem:[%s265 + $0x50] sm:%s257] %v306
          %v308 = vld [vmem:[%s264 + $0x78] sm:%s257]
          %309 = vst [vmem:[%s265 + $0x54] sm:%s257] %v308
          %v310 = vld [vmem:[%s264 + $0x2c] sm:%s257]
          %311 = vst [vmem:[%s265 + $0x58] sm:%s257] %v310
          %v312 = vld [vmem:[%s264 + $0x7c] sm:%s257]
          %313 = vst [vmem:[%s265 + $0x5c] sm:%s257] %v312
          %v314 = vld [vmem:[%s264 + $0x30] sm:%s257]
          %315 = vst [vmem:[%s265 + $0x60] sm:%s257] %v314
          %v316 = vld [vmem:[%s264 + $0x80] sm:%s257]
          %317 = vst [vmem:[%s265 + $0x64] sm:%s257] %v316
          %v318 = vld [vmem:[%s264 + $0x34] sm:%s257]
          %319 = vst [vmem:[%s265 + $0x68] sm:%s257] %v318
          %v320 = vld [vmem:[%s264 + $0x84] sm:%s257]
          %321 = vst [vmem:[%s265 + $0x6c] sm:%s257] %v320
          %v322 = vld [vmem:[%s264 + $0x38] sm:%s257]
          %323 = vst [vmem:[%s265 + $0x70] sm:%s257] %v322
          %v324 = vld [vmem:[%s264 + $0x88] sm:%s257]
          %325 = vst [vmem:[%s265 + $0x74] sm:%s257] %v324
          %v326 = vld [vmem:[%s264 + $0x3c] sm:%s257]
          %327 = vst [vmem:[%s265 + $0x78] sm:%s257] %v326
          %v328 = vld [vmem:[%s264 + $0x8c] sm:%s257]
          %329 = vst [vmem:[%s265 + $0x7c] sm:%s257] %v328
          %v330 = vld [vmem:[%s264 + $0x40] sm:%s257]
          %331 = vst [vmem:[%s265 + $0x80] sm:%s257] %v330
          %v332 = vld [vmem:[%s264 + $0x90] sm:%s257]
          %333 = vst [vmem:[%s265 + $0x84] sm:%s257] %v332
          %v334 = vld [vmem:[%s264 + $0x44] sm:%s257]
          %335 = vst [vmem:[%s265 + $0x88] sm:%s257] %v334
          %v336 = vld [vmem:[%s264 + $0x94] sm:%s257]
          %337 = vst [vmem:[%s265 + $0x8c] sm:%s257] %v336
          %v338 = vld [vmem:[%s264 + $0x48] sm:%s257]
          %339 = vst [vmem:[%s265 + $0x90] sm:%s257] %v338
          %v340 = vld [vmem:[%s264 + $0x98] sm:%s257]
          %341 = vst [vmem:[%s265 + $0x94] sm:%s257] %v340
          %v342 = vld [vmem:[%s264 + $0x4c] sm:%s257]
          %343 = vst [vmem:[%s265 + $0x98] sm:%s257] %v342
          %v344 = vld [vmem:[%s264 + $0x9c] sm:%s257]
          %345 = vst [vmem:[%s265 + $0x9c] sm:%s257] %v344
          %v346 = vld [vmem:[%s264 + $0xa0] sm:%s257]
          %347 = vst [vmem:[%s265 + $0xa0] sm:%s257] %v346
          %v348 = vld [vmem:[%s264 + $0xf0] sm:%s257]
          %349 = vst [vmem:[%s265 + $0xa4] sm:%s257] %v348
          %v350 = vld [vmem:[%s264 + $0xa4] sm:%s257]
          %351 = vst [vmem:[%s265 + $0xa8] sm:%s257] %v350
          %v352 = vld [vmem:[%s264 + $0xf4] sm:%s257]
          %353 = vst [vmem:[%s265 + $0xac] sm:%s257] %v352
          %v354 = vld [vmem:[%s264 + $0xa8] sm:%s257]
          %355 = vst [vmem:[%s265 + $0xb0] sm:%s257] %v354
          %v356 = vld [vmem:[%s264 + $0xf8] sm:%s257]
          %357 = vst [vmem:[%s265 + $0xb4] sm:%s257] %v356
          %v358 = vld [vmem:[%s264 + $0xac] sm:%s257]
          %359 = vst [vmem:[%s265 + $0xb8] sm:%s257] %v358
          %v360 = vld [vmem:[%s264 + $0xfc] sm:%s257]
          %361 = vst [vmem:[%s265 + $0xbc] sm:%s257] %v360
          %v362 = vld [vmem:[%s264 + $0xb0] sm:%s257]
          %363 = vst [vmem:[%s265 + $0xc0] sm:%s257] %v362
          %v364 = vld [vmem:[%s264 + $0x100] sm:%s257]
          %365 = vst [vmem:[%s265 + $0xc4] sm:%s257] %v364
          %v366 = vld [vmem:[%s264 + $0xb4] sm:%s257]
          %367 = vst [vmem:[%s265 + $0xc8] sm:%s257] %v366
          %v368 = vld [vmem:[%s264 + $0x104] sm:%s257]
          %369 = vst [vmem:[%s265 + $0xcc] sm:%s257] %v368
          %v370 = vld [vmem:[%s264 + $0xb8] sm:%s257]
          %371 = vst [vmem:[%s265 + $0xd0] sm:%s257] %v370
          %v372 = vld [vmem:[%s264 + $0x108] sm:%s257]
          %373 = vst [vmem:[%s265 + $0xd4] sm:%s257] %v372
          %v374 = vld [vmem:[%s264 + $0xbc] sm:%s257]
          %375 = vst [vmem:[%s265 + $0xd8] sm:%s257] %v374
          %v376 = vld [vmem:[%s264 + $0x10c] sm:%s257]
          %377 = vst [vmem:[%s265 + $0xdc] sm:%s257] %v376
          %v378 = vld [vmem:[%s264 + $0xc0] sm:%s257]
          %379 = vst [vmem:[%s265 + $0xe0] sm:%s257] %v378
          %v380 = vld [vmem:[%s264 + $0x110] sm:%s257]
          %381 = vst [vmem:[%s265 + $0xe4] sm:%s257] %v380
          %v382 = vld [vmem:[%s264 + $0xc4] sm:%s257]
          %383 = vst [vmem:[%s265 + $0xe8] sm:%s257] %v382
          %v384 = vld [vmem:[%s264 + $0x114] sm:%s257]
          %385 = vst [vmem:[%s265 + $0xec] sm:%s257] %v384
          %v386 = vld [vmem:[%s264 + $0xc8] sm:%s257]
          %387 = vst [vmem:[%s265 + $0xf0] sm:%s257] %v386
          %v388 = vld [vmem:[%s264 + $0x118] sm:%s257]
          %389 = vst [vmem:[%s265 + $0xf4] sm:%s257] %v388
          %v390 = vld [vmem:[%s264 + $0xcc] sm:%s257]
          %391 = vst [vmem:[%s265 + $0xf8] sm:%s257] %v390
          %v392 = vld [vmem:[%s264 + $0x11c] sm:%s257]
          %393 = vst [vmem:[%s265 + $0xfc] sm:%s257] %v392
          %v394 = vld [vmem:[%s264 + $0xd0] sm:%s257]
          %395 = vst [vmem:[%s265 + $0x100] sm:%s257] %v394
          %v396 = vld [vmem:[%s264 + $0x120] sm:%s257]
          %397 = vst [vmem:[%s265 + $0x104] sm:%s257] %v396
          %v398 = vld [vmem:[%s264 + $0xd4] sm:%s257]
          %399 = vst [vmem:[%s265 + $0x108] sm:%s257] %v398
          %v400 = vld [vmem:[%s264 + $0x124] sm:%s257]
          %401 = vst [vmem:[%s265 + $0x10c] sm:%s257] %v400
          %v402 = vld [vmem:[%s264 + $0xd8] sm:%s257]
          %403 = vst [vmem:[%s265 + $0x110] sm:%s257] %v402
          %v404 = vld [vmem:[%s264 + $0x128] sm:%s257]
          %405 = vst [vmem:[%s265 + $0x114] sm:%s257] %v404
          %v406 = vld [vmem:[%s264 + $0xdc] sm:%s257]
          %407 = vst [vmem:[%s265 + $0x118] sm:%s257] %v406
          %v408 = vld [vmem:[%s264 + $0x12c] sm:%s257]
          %409 = vst [vmem:[%s265 + $0x11c] sm:%s257] %v408
          %v410 = vld [vmem:[%s264 + $0xe0] sm:%s257]
          %411 = vst [vmem:[%s265 + $0x120] sm:%s257] %v410
          %v412 = vld [vmem:[%s264 + $0x130] sm:%s257]
          %413 = vst [vmem:[%s265 + $0x124] sm:%s257] %v412
          %v414 = vld [vmem:[%s264 + $0xe4] sm:%s257]
          %415 = vst [vmem:[%s265 + $0x128] sm:%s257] %v414
          %v416 = vld [vmem:[%s264 + $0x134] sm:%s257]
          %417 = vst [vmem:[%s265 + $0x12c] sm:%s257] %v416
          %v418 = vld [vmem:[%s264 + $0xe8] sm:%s257]
          %419 = vst [vmem:[%s265 + $0x130] sm:%s257] %v418
          %v420 = vld [vmem:[%s264 + $0x138] sm:%s257]
          %421 = vst [vmem:[%s265 + $0x134] sm:%s257] %v420
          %v422 = vld [vmem:[%s264 + $0xec] sm:%s257]
          %423 = vst [vmem:[%s265 + $0x138] sm:%s257] %v422
          %v424 = vld [vmem:[%s264 + $0x13c] sm:%s257]
          %425 = vst [vmem:[%s265 + $0x13c] sm:%s257] %v424
        $region104: #{cnn_lstm_forward.1} parent=91 // loop_footer
          %s263 = sadd.s32 1, %s259
        $region105: #{cnn_lstm_forward.1} parent=91 // loop_footer_branch
          %258 = sbr.rel target = $region101
        $region106: #{cnn_lstm_forward.1} parent=91 // loop_exit
          _
      $region92: #{cnn_lstm_forward.1} parent=76 // pred_fallthru
        _
    $region77: #{cnn_lstm_forward.1} parent=1 // pred_fallthru
      _
    // Predicated region
    $region78: #{cnn_lstm_forward.1} parent=1 // pred_check
      %p67 = pneg %p63
    $region79: #{cnn_lstm_forward.1} parent=1 // pred_check_branch
      %69 = sbr.rel (%p67) target = $region81
    $region80: #{cnn_lstm_forward.1} parent=1 // pred_region
      %s70 = sshllo.u32 0, 4
      loop: start=0, step=1, limit=1
      $region82: #{cnn_lstm_forward.1} parent=80 // loop_pre_header
        _
      $region83: #{cnn_lstm_forward.1} parent=80 // loop_header
        %s72 = sphi 0, %s76
        %p73 = scmp.ge.s32.totalorder %s72, 1
        %s77 = sphi %s10, %s10
        %s78 = sphi [#allocation6], [#allocation6]
      $region84: #{cnn_lstm_forward.1} parent=80 // loop_header_branch
        %75 = sbr.rel (%p73) target = $region88
      $region85: #{cnn_lstm_forward.1} parent=80 // loop_body
        %v79 = vld [vmem:[%s77] sm:%s70]
        %80 = vst [vmem:[%s78] sm:%s70] %v79
        %v81 = vld [vmem:[%s77 + $0x50] sm:%s70]
        %82 = vst [vmem:[%s78 + $0x4] sm:%s70] %v81
        %v83 = vld [vmem:[%s77 + $0x4] sm:%s70]
        %84 = vst [vmem:[%s78 + $0x8] sm:%s70] %v83
        %v85 = vld [vmem:[%s77 + $0x54] sm:%s70]
        %86 = vst [vmem:[%s78 + $0xc] sm:%s70] %v85
        %v87 = vld [vmem:[%s77 + $0x8] sm:%s70]
        %88 = vst [vmem:[%s78 + $0x10] sm:%s70] %v87
        %v89 = vld [vmem:[%s77 + $0x58] sm:%s70]
        %90 = vst [vmem:[%s78 + $0x14] sm:%s70] %v89
        %v91 = vld [vmem:[%s77 + $0xc] sm:%s70]
        %92 = vst [vmem:[%s78 + $0x18] sm:%s70] %v91
        %v93 = vld [vmem:[%s77 + $0x5c] sm:%s70]
        %94 = vst [vmem:[%s78 + $0x1c] sm:%s70] %v93
        %v95 = vld [vmem:[%s77 + $0x10] sm:%s70]
        %96 = vst [vmem:[%s78 + $0x20] sm:%s70] %v95
        %v97 = vld [vmem:[%s77 + $0x60] sm:%s70]
        %98 = vst [vmem:[%s78 + $0x24] sm:%s70] %v97
        %v99 = vld [vmem:[%s77 + $0x14] sm:%s70]
        %100 = vst [vmem:[%s78 + $0x28] sm:%s70] %v99
        %v101 = vld [vmem:[%s77 + $0x64] sm:%s70]
        %102 = vst [vmem:[%s78 + $0x2c] sm:%s70] %v101
        %v103 = vld [vmem:[%s77 + $0x18] sm:%s70]
        %104 = vst [vmem:[%s78 + $0x30] sm:%s70] %v103
        %v105 = vld [vmem:[%s77 + $0x68] sm:%s70]
        %106 = vst [vmem:[%s78 + $0x34] sm:%s70] %v105
        %v107 = vld [vmem:[%s77 + $0x1c] sm:%s70]
        %108 = vst [vmem:[%s78 + $0x38] sm:%s70] %v107
        %v109 = vld [vmem:[%s77 + $0x6c] sm:%s70]
        %110 = vst [vmem:[%s78 + $0x3c] sm:%s70] %v109
        %v111 = vld [vmem:[%s77 + $0x20] sm:%s70]
        %112 = vst [vmem:[%s78 + $0x40] sm:%s70] %v111
        %v113 = vld [vmem:[%s77 + $0x70] sm:%s70]
        %114 = vst [vmem:[%s78 + $0x44] sm:%s70] %v113
        %v115 = vld [vmem:[%s77 + $0x24] sm:%s70]
        %116 = vst [vmem:[%s78 + $0x48] sm:%s70] %v115
        %v117 = vld [vmem:[%s77 + $0x74] sm:%s70]
        %118 = vst [vmem:[%s78 + $0x4c] sm:%s70] %v117
        %v119 = vld [vmem:[%s77 + $0x28] sm:%s70]
        %120 = vst [vmem:[%s78 + $0x50] sm:%s70] %v119
        %v121 = vld [vmem:[%s77 + $0x78] sm:%s70]
        %122 = vst [vmem:[%s78 + $0x54] sm:%s70] %v121
        %v123 = vld [vmem:[%s77 + $0x2c] sm:%s70]
        %124 = vst [vmem:[%s78 + $0x58] sm:%s70] %v123
        %v125 = vld [vmem:[%s77 + $0x7c] sm:%s70]
        %126 = vst [vmem:[%s78 + $0x5c] sm:%s70] %v125
        %v127 = vld [vmem:[%s77 + $0x30] sm:%s70]
        %128 = vst [vmem:[%s78 + $0x60] sm:%s70] %v127
        %v129 = vld [vmem:[%s77 + $0x80] sm:%s70]
        %130 = vst [vmem:[%s78 + $0x64] sm:%s70] %v129
        %v131 = vld [vmem:[%s77 + $0x34] sm:%s70]
        %132 = vst [vmem:[%s78 + $0x68] sm:%s70] %v131
        %v133 = vld [vmem:[%s77 + $0x84] sm:%s70]
        %134 = vst [vmem:[%s78 + $0x6c] sm:%s70] %v133
        %v135 = vld [vmem:[%s77 + $0x38] sm:%s70]
        %136 = vst [vmem:[%s78 + $0x70] sm:%s70] %v135
        %v137 = vld [vmem:[%s77 + $0x88] sm:%s70]
        %138 = vst [vmem:[%s78 + $0x74] sm:%s70] %v137
        %v139 = vld [vmem:[%s77 + $0x3c] sm:%s70]
        %140 = vst [vmem:[%s78 + $0x78] sm:%s70] %v139
        %v141 = vld [vmem:[%s77 + $0x8c] sm:%s70]
        %142 = vst [vmem:[%s78 + $0x7c] sm:%s70] %v141
        %v143 = vld [vmem:[%s77 + $0x40] sm:%s70]
        %144 = vst [vmem:[%s78 + $0x80] sm:%s70] %v143
        %v145 = vld [vmem:[%s77 + $0x90] sm:%s70]
        %146 = vst [vmem:[%s78 + $0x84] sm:%s70] %v145
        %v147 = vld [vmem:[%s77 + $0x44] sm:%s70]
        %148 = vst [vmem:[%s78 + $0x88] sm:%s70] %v147
        %v149 = vld [vmem:[%s77 + $0x94] sm:%s70]
        %150 = vst [vmem:[%s78 + $0x8c] sm:%s70] %v149
        %v151 = vld [vmem:[%s77 + $0x48] sm:%s70]
        %152 = vst [vmem:[%s78 + $0x90] sm:%s70] %v151
        %v153 = vld [vmem:[%s77 + $0x98] sm:%s70]
        %154 = vst [vmem:[%s78 + $0x94] sm:%s70] %v153
        %v155 = vld [vmem:[%s77 + $0x4c] sm:%s70]
        %156 = vst [vmem:[%s78 + $0x98] sm:%s70] %v155
        %v157 = vld [vmem:[%s77 + $0x9c] sm:%s70]
        %158 = vst [vmem:[%s78 + $0x9c] sm:%s70] %v157
        %v159 = vld [vmem:[%s77 + $0xa0] sm:%s70]
        %160 = vst [vmem:[%s78 + $0xa0] sm:%s70] %v159
        %v161 = vld [vmem:[%s77 + $0xf0] sm:%s70]
        %162 = vst [vmem:[%s78 + $0xa4] sm:%s70] %v161
        %v163 = vld [vmem:[%s77 + $0xa4] sm:%s70]
        %164 = vst [vmem:[%s78 + $0xa8] sm:%s70] %v163
        %v165 = vld [vmem:[%s77 + $0xf4] sm:%s70]
        %166 = vst [vmem:[%s78 + $0xac] sm:%s70] %v165
        %v167 = vld [vmem:[%s77 + $0xa8] sm:%s70]
        %168 = vst [vmem:[%s78 + $0xb0] sm:%s70] %v167
        %v169 = vld [vmem:[%s77 + $0xf8] sm:%s70]
        %170 = vst [vmem:[%s78 + $0xb4] sm:%s70] %v169
        %v171 = vld [vmem:[%s77 + $0xac] sm:%s70]
        %172 = vst [vmem:[%s78 + $0xb8] sm:%s70] %v171
        %v173 = vld [vmem:[%s77 + $0xfc] sm:%s70]
        %174 = vst [vmem:[%s78 + $0xbc] sm:%s70] %v173
        %v175 = vld [vmem:[%s77 + $0xb0] sm:%s70]
        %176 = vst [vmem:[%s78 + $0xc0] sm:%s70] %v175
        %v177 = vld [vmem:[%s77 + $0x100] sm:%s70]
        %178 = vst [vmem:[%s78 + $0xc4] sm:%s70] %v177
        %v179 = vld [vmem:[%s77 + $0xb4] sm:%s70]
        %180 = vst [vmem:[%s78 + $0xc8] sm:%s70] %v179
        %v181 = vld [vmem:[%s77 + $0x104] sm:%s70]
        %182 = vst [vmem:[%s78 + $0xcc] sm:%s70] %v181
        %v183 = vld [vmem:[%s77 + $0xb8] sm:%s70]
        %184 = vst [vmem:[%s78 + $0xd0] sm:%s70] %v183
        %v185 = vld [vmem:[%s77 + $0x108] sm:%s70]
        %186 = vst [vmem:[%s78 + $0xd4] sm:%s70] %v185
        %v187 = vld [vmem:[%s77 + $0xbc] sm:%s70]
        %188 = vst [vmem:[%s78 + $0xd8] sm:%s70] %v187
        %v189 = vld [vmem:[%s77 + $0x10c] sm:%s70]
        %190 = vst [vmem:[%s78 + $0xdc] sm:%s70] %v189
        %v191 = vld [vmem:[%s77 + $0xc0] sm:%s70]
        %192 = vst [vmem:[%s78 + $0xe0] sm:%s70] %v191
        %v193 = vld [vmem:[%s77 + $0x110] sm:%s70]
        %194 = vst [vmem:[%s78 + $0xe4] sm:%s70] %v193
        %v195 = vld [vmem:[%s77 + $0xc4] sm:%s70]
        %196 = vst [vmem:[%s78 + $0xe8] sm:%s70] %v195
        %v197 = vld [vmem:[%s77 + $0x114] sm:%s70]
        %198 = vst [vmem:[%s78 + $0xec] sm:%s70] %v197
        %v199 = vld [vmem:[%s77 + $0xc8] sm:%s70]
        %200 = vst [vmem:[%s78 + $0xf0] sm:%s70] %v199
        %v201 = vld [vmem:[%s77 + $0x118] sm:%s70]
        %202 = vst [vmem:[%s78 + $0xf4] sm:%s70] %v201
        %v203 = vld [vmem:[%s77 + $0xcc] sm:%s70]
        %204 = vst [vmem:[%s78 + $0xf8] sm:%s70] %v203
        %v205 = vld [vmem:[%s77 + $0x11c] sm:%s70]
        %206 = vst [vmem:[%s78 + $0xfc] sm:%s70] %v205
        %v207 = vld [vmem:[%s77 + $0xd0] sm:%s70]
        %208 = vst [vmem:[%s78 + $0x100] sm:%s70] %v207
        %v209 = vld [vmem:[%s77 + $0x120] sm:%s70]
        %210 = vst [vmem:[%s78 + $0x104] sm:%s70] %v209
        %v211 = vld [vmem:[%s77 + $0xd4] sm:%s70]
        %212 = vst [vmem:[%s78 + $0x108] sm:%s70] %v211
        %v213 = vld [vmem:[%s77 + $0x124] sm:%s70]
        %214 = vst [vmem:[%s78 + $0x10c] sm:%s70] %v213
        %v215 = vld [vmem:[%s77 + $0xd8] sm:%s70]
        %216 = vst [vmem:[%s78 + $0x110] sm:%s70] %v215
        %v217 = vld [vmem:[%s77 + $0x128] sm:%s70]
        %218 = vst [vmem:[%s78 + $0x114] sm:%s70] %v217
        %v219 = vld [vmem:[%s77 + $0xdc] sm:%s70]
        %220 = vst [vmem:[%s78 + $0x118] sm:%s70] %v219
        %v221 = vld [vmem:[%s77 + $0x12c] sm:%s70]
        %222 = vst [vmem:[%s78 + $0x11c] sm:%s70] %v221
        %v223 = vld [vmem:[%s77 + $0xe0] sm:%s70]
        %224 = vst [vmem:[%s78 + $0x120] sm:%s70] %v223
        %v225 = vld [vmem:[%s77 + $0x130] sm:%s70]
        %226 = vst [vmem:[%s78 + $0x124] sm:%s70] %v225
        %v227 = vld [vmem:[%s77 + $0xe4] sm:%s70]
        %228 = vst [vmem:[%s78 + $0x128] sm:%s70] %v227
        %v229 = vld [vmem:[%s77 + $0x134] sm:%s70]
        %230 = vst [vmem:[%s78 + $0x12c] sm:%s70] %v229
        %v231 = vld [vmem:[%s77 + $0xe8] sm:%s70]
        %232 = vst [vmem:[%s78 + $0x130] sm:%s70] %v231
        %v233 = vld [vmem:[%s77 + $0x138] sm:%s70]
        %234 = vst [vmem:[%s78 + $0x134] sm:%s70] %v233
        %v235 = vld [vmem:[%s77 + $0xec] sm:%s70]
        %236 = vst [vmem:[%s78 + $0x138] sm:%s70] %v235
        %v237 = vld [vmem:[%s77 + $0x13c] sm:%s70]
        %238 = vst [vmem:[%s78 + $0x13c] sm:%s70] %v237
      $region86: #{cnn_lstm_forward.1} parent=80 // loop_footer
        %s76 = sadd.s32 1, %s72
      $region87: #{cnn_lstm_forward.1} parent=80 // loop_footer_branch
        %71 = sbr.rel target = $region83
      $region88: #{cnn_lstm_forward.1} parent=80 // loop_exit
        _
    $region81: #{cnn_lstm_forward.1} parent=1 // pred_fallthru
      _
    // Predicated region
    $region107: #{cnn_lstm_forward.1} parent=1 // pred_check
      _
    $region108: #{cnn_lstm_forward.1} parent=1 // pred_check_branch
      %428 = sbr.rel (0) target = $region110
    $region109: #{cnn_lstm_forward.1} parent=1 // pred_region
      %429 = vsyncadd [#allocation7], 5120
    $region110: #{cnn_lstm_forward.1} parent=1 // pred_fallthru
      _
    %v430 = vld [vmem:[%s0] sm:$0xff]
    %v431 = vld [vmem:[%s0 + $0x8] sm:$0xff]
    %v432 = vld [vmem:[%s0 + $0x10] sm:$0xff]
    %v433 = vld [vmem:[%s0 + $0x18] sm:$0xff]
    %v434 = vld [vmem:[%s1] sm:$0xf]
    %v435 = vld [vmem:[%s1 + $0x4] sm:$0xf]
    %v436 = vld [vmem:[%s1 + $0x8] sm:$0xf]
    %v437 = vld [vmem:[%s1 + $0xc] sm:$0xf]
    %v438 = vld [vmem:[%s1 + $0x10] sm:$0xf]
    %v439 = vld [vmem:[%s1 + $0x14] sm:$0xf]
    %v440 = vld [vmem:[%s1 + $0x18] sm:$0xf]
    %v441 = vld [vmem:[%s1 + $0x1c] sm:$0xf]
    %v442 = vld [vmem:[%s1 + $0x20] sm:$0xf]
    %v443 = vld [vmem:[%s1 + $0x24] sm:$0xf]
    %v444 = vld [vmem:[%s1 + $0x28] sm:$0xf]
    %v445 = vld [vmem:[%s1 + $0x2c] sm:$0xf]
    %v446 = vld [vmem:[%s1 + $0x30] sm:$0xf]
    %v447 = vld [vmem:[%s1 + $0x34] sm:$0xf]
    %v448 = vld [vmem:[%s1 + $0x38] sm:$0xf]
    %v449 = vld [vmem:[%s1 + $0x3c] sm:$0xf]
    %v450 = vld [vmem:[%s1 + $0x40] sm:$0xf]
    %v451 = vld [vmem:[%s1 + $0x44] sm:$0x3]
    %v452 = vld [vmem:[%s0 + $0x20] sm:$0x11]
    %s453 = scalar_lea.vmem %s1, 72
    %v454 = vld [vmem:[%s453] sm:$0xf]
    %v455 = vld [vmem:[%s453 + $0x4] sm:$0xf]
    %v456 = vld [vmem:[%s453 + $0x8] sm:$0xf]
    %v457 = vld [vmem:[%s453 + $0xc] sm:$0xf]
    %v458 = vld [vmem:[%s453 + $0x10] sm:$0xf]
    %v459 = vld [vmem:[%s453 + $0x14] sm:$0xf]
    %v460 = vld [vmem:[%s453 + $0x18] sm:$0xf]
    %v461 = vld [vmem:[%s453 + $0x1c] sm:$0xf]
    %v462 = vld [vmem:[%s453 + $0x20] sm:$0xf]
    %v463 = vld [vmem:[%s453 + $0x24] sm:$0xf]
    %v464 = vld [vmem:[%s453 + $0x28] sm:$0xf]
    %v465 = vld [vmem:[%s453 + $0x2c] sm:$0xf]
    %v466 = vld [vmem:[%s453 + $0x30] sm:$0xf]
    %v467 = vld [vmem:[%s453 + $0x34] sm:$0xf]
    %v468 = vld [vmem:[%s453 + $0x38] sm:$0xf]
    %v469 = vld [vmem:[%s453 + $0x3c] sm:$0xf]
    %v470 = vld [vmem:[%s453 + $0x40] sm:$0xf]
    %v471 = vld [vmem:[%s453 + $0x44] sm:$0x3]
    %v477 = vunpack.c.l.b16 %v430
    %v478 = vunpack.c.h.b16 %v430
    %v479 = vunpack.c.l.b16 %v431
    %v480 = vunpack.c.h.b16 %v431
    %v481 = vunpack.c.l.b16 %v432
    %v482 = vunpack.c.h.b16 %v432
    %v483 = vunpack.c.l.b16 %v433
    %v484 = vunpack.c.h.b16 %v433
    %v485 = vunpack.c.l.b16 %v452
    %v486 = vunpack.c.h.b16 %v452
    %v487 = vpack.c.b16 %v479, %v477
    %v488 = vpack.c.b16 %v480, %v478
    %v489 = vpack.c.b16 %v483, %v481
    %v490 = vpack.c.b16 %v484, %v482
    %v491 = vpack.c.b16 %v485, %v485
    %v492 = vpack.c.b16 %v486, %v486
    %vm493 = vsmask.f32 7424
    %v495 = vshrl.u32 %v487, 16
    %v497 = vshll.u32 %v487, 16
    %v499 = vrot.slane %v497, 1
    %v500 = vor.u32 %v495, %v499
    %v502 = vshll.u32 %v489, 16
    %v504 = vrot.slane %v502, 1
    %v505 = vsel %vm493, %v500, %v504
    %v507 = vshrl.u32 %v488, 16
    %v509 = vshll.u32 %v488, 16
    %v511 = vrot.slane %v509, 1
    %v512 = vor.u32 %v507, %v511
    %v514 = vshll.u32 %v490, 16
    %v516 = vrot.slane %v514, 1
    %v517 = vsel %vm493, %v512, %v516
    %v518 = vshrl.u32 %v489, 16
    %v520 = vor.u32 %v518, %v504
    %v522 = vshll.u32 %v491, 16
    %v524 = vrot.slane %v522, 1
    %v525 = vsel %vm493, %v520, %v524
    %v526 = vshrl.u32 %v490, 16
    %v528 = vor.u32 %v526, %v516
    %v530 = vshll.u32 %v492, 16
    %v532 = vrot.slane %v530, 1
    %v533 = vsel %vm493, %v528, %v532
    %v554 = vunpack.c.l.b16 %v454
    %v555 = vunpack.c.l.b16 %v455
    %v556 = vunpack.c.l.b16 %v456
    %v557 = vunpack.c.l.b16 %v457
    %v558 = vunpack.c.l.b16 %v458
    %v559 = vunpack.c.l.b16 %v459
    %v560 = vunpack.c.l.b16 %v460
    %v561 = vunpack.c.l.b16 %v461
    %v562 = vunpack.c.l.b16 %v462
    %v563 = vunpack.c.l.b16 %v463
    %v564 = vunpack.c.l.b16 %v464
    %v565 = vunpack.c.l.b16 %v465
    %v566 = vunpack.c.l.b16 %v466
    %v567 = vunpack.c.l.b16 %v467
    %v568 = vunpack.c.l.b16 %v468
    %v569 = vunpack.c.l.b16 %v469
    %v570 = vunpack.c.l.b16 %v470
    %v571 = vunpack.c.l.b16 %v471
    %v572 = vpack.c.b16 %v555, %v554
    %v573 = vpack.c.b16 %v557, %v556
    %v574 = vpack.c.b16 %v559, %v558
    %v575 = vpack.c.b16 %v561, %v560
    %v576 = vpack.c.b16 %v563, %v562
    %v577 = vpack.c.b16 %v565, %v564
    %v578 = vpack.c.b16 %v567, %v566
    %v579 = vpack.c.b16 %v569, %v568
    %v580 = vpack.c.b16 %v571, %v570
    %vm589 = vcmask 97280
    %v591 = vsel %vm589, %v517, 0
    %v594 = vsel %vm589, %v533, 0
    %vm596 = vcmask 1045504
    %v598 = vsel %vm596, %v580, 0
    %600 = vmatprep.subr.bf16.mxu0 0
    %601 = vmatpush1.bf16.msra.mxu0 %v572
    %602 = vmatprep.subr.bf16.mxu0 0
    %603 = vmatpush1.bf16.msra.mxu0 %v573
    %604 = vmatprep.subr.bf16.mxu0 0
    %605 = vmatpush1.bf16.msra.mxu0 %v574
    %606 = vmatprep.subr.bf16.mxu0 0
    %607 = vmatpush1.bf16.msra.mxu0 %v575
    %608 = vmatprep.subr.bf16.mxu0 0
    %609 = vmatpush1.bf16.msra.mxu0 %v576
    %610 = vmatprep.subr.bf16.mxu0 0
    %611 = vmatpush1.bf16.msra.mxu0 %v577
    %612 = vmatprep.subr.bf16.mxu0 0
    %613 = vmatpush1.bf16.msra.mxu0 %v578
    %614 = vmatprep.subr.bf16.mxu0 0
    %615 = vmatpush1.bf16.msra.mxu0 %v579
    %616 = vmatprep.subr.bf16.mxu0 0
    %617 = vmatpush1.bf16.msra.mxu0 %v598
    %618 = vmatprep.subr.bf16.mxu0 0
    %619 = vmatpush1.bf16.msra.mxu0 0
    %620 = vmatprep.subr.bf16.mxu0 0
    %621 = vmatpush1.bf16.msra.mxu0 0
    %622 = vmatprep.subr.bf16.mxu0 0
    %623 = vmatpush1.bf16.msra.mxu0 0
    %624 = vmatprep.subr.bf16.mxu0 0
    %625 = vmatpush1.bf16.msra.mxu0 0
    %626 = vmatprep.subr.bf16.mxu0 0
    %627 = vmatpush1.bf16.msra.mxu0 0
    %628 = vmatprep.subr.bf16.mxu0 0
    %629 = vmatpush1.bf16.msra.mxu0 0
    %630 = vmatprep.subr.bf16.mxu0 0
    %631 = vmatpush1.bf16.msra.mxu0 0
    %632 = vmatprep.mubr.bf16.mxu0 %v591
    %633 = vmatmul.mubr.bf16.gmra.mrb[0].mxu0 %v505
    %v634 = vpop.f32.mrb[0].mxu0
    %v635 = vadd.f32 0.0, %v634
    %v636 = vpop.f32.mrb[0].mxu0
    %v637 = vpop.f32.mrb[0].mxu0
    %v638 = vadd.f32 0.0, %v637
    %v639 = vpop.f32.mrb[0].mxu0
    %640 = vmatprep.mubr.bf16.mxu0 %v594
    %641 = vmatmul.mubr.bf16.gmra.mrb[0].mxu0 %v525
    %v642 = vpop.f32.mrb[0].mxu0
    %v643 = vadd.f32 0.0, %v642
    %v644 = vpop.f32.mrb[0].mxu0
    %v645 = vpop.f32.mrb[0].mxu0
    %v646 = vadd.f32 0.0, %v645
    %v647 = vpop.f32.mrb[0].mxu0
    %648 = vdwg.mxu0
    %v669 = vunpack.c.l.b16 %v434
    %v670 = vunpack.c.l.b16 %v435
    %v671 = vunpack.c.l.b16 %v436
    %v672 = vunpack.c.l.b16 %v437
    %v673 = vunpack.c.l.b16 %v438
    %v674 = vunpack.c.l.b16 %v439
    %v675 = vunpack.c.l.b16 %v440
    %v676 = vunpack.c.l.b16 %v441
    %v677 = vunpack.c.l.b16 %v442
    %v678 = vunpack.c.l.b16 %v443
    %v679 = vunpack.c.l.b16 %v444
    %v680 = vunpack.c.l.b16 %v445
    %v681 = vunpack.c.l.b16 %v446
    %v682 = vunpack.c.l.b16 %v447
    %v683 = vunpack.c.l.b16 %v448
    %v684 = vunpack.c.l.b16 %v449
    %v685 = vunpack.c.l.b16 %v450
    %v686 = vunpack.c.l.b16 %v451
    %v687 = vpack.c.b16 %v670, %v669
    %v688 = vpack.c.b16 %v672, %v671
    %v689 = vpack.c.b16 %v674, %v673
    %v690 = vpack.c.b16 %v676, %v675
    %v691 = vpack.c.b16 %v678, %v677
    %v692 = vpack.c.b16 %v680, %v679
    %v693 = vpack.c.b16 %v682, %v681
    %v694 = vpack.c.b16 %v684, %v683
    %v695 = vpack.c.b16 %v686, %v685
    %v704 = vsel %vm589, %v488, 0
    %v706 = vsel %vm589, %v490, 0
    %v709 = vsel %vm596, %v695, 0
    %711 = vmatprep.subr.bf16.mxu0 0
    %712 = vmatpush1.bf16.msra.mxu0 %v687
    %713 = vmatprep.subr.bf16.mxu0 0
    %714 = vmatpush1.bf16.msra.mxu0 %v688
    %715 = vmatprep.subr.bf16.mxu0 0
    %716 = vmatpush1.bf16.msra.mxu0 %v689
    %717 = vmatprep.subr.bf16.mxu0 0
    %718 = vmatpush1.bf16.msra.mxu0 %v690
    %719 = vmatprep.subr.bf16.mxu0 0
    %720 = vmatpush1.bf16.msra.mxu0 %v691
    %721 = vmatprep.subr.bf16.mxu0 0
    %722 = vmatpush1.bf16.msra.mxu0 %v692
    %723 = vmatprep.subr.bf16.mxu0 0
    %724 = vmatpush1.bf16.msra.mxu0 %v693
    %725 = vmatprep.subr.bf16.mxu0 0
    %726 = vmatpush1.bf16.msra.mxu0 %v694
    %727 = vmatprep.subr.bf16.mxu0 0
    %728 = vmatpush1.bf16.msra.mxu0 %v709
    %729 = vmatprep.subr.bf16.mxu0 0
    %730 = vmatpush1.bf16.msra.mxu0 0
    %731 = vmatprep.subr.bf16.mxu0 0
    %732 = vmatpush1.bf16.msra.mxu0 0
    %733 = vmatprep.subr.bf16.mxu0 0
    %734 = vmatpush1.bf16.msra.mxu0 0
    %735 = vmatprep.subr.bf16.mxu0 0
    %736 = vmatpush1.bf16.msra.mxu0 0
    %737 = vmatprep.subr.bf16.mxu0 0
    %738 = vmatpush1.bf16.msra.mxu0 0
    %739 = vmatprep.subr.bf16.mxu0 0
    %740 = vmatpush1.bf16.msra.mxu0 0
    %741 = vmatprep.subr.bf16.mxu0 0
    %742 = vmatpush1.bf16.msra.mxu0 0
    %743 = vmatprep.mubr.bf16.mxu0 %v704
    %744 = vmatmul.mubr.bf16.gmra.mrb[0].mxu0 %v487
    %v745 = vpop.f32.mrb[0].mxu0
    %v746 = vadd.f32 %v635, %v745
    %v747 = vpop.f32.mrb[0].mxu0
    %v748 = vpop.f32.mrb[0].mxu0
    %v749 = vadd.f32 %v638, %v748
    %v750 = vpop.f32.mrb[0].mxu0
    %751 = vmatprep.mubr.bf16.mxu0 %v706
    %752 = vmatmul.mubr.bf16.gmra.mrb[0].mxu0 %v489
    %v753 = vpop.f32.mrb[0].mxu0
    %v754 = vadd.f32 %v643, %v753
    %v755 = vpop.f32.mrb[0].mxu0
    %v756 = vpop.f32.mrb[0].mxu0
    %v757 = vadd.f32 %v646, %v756
    %v758 = vpop.f32.mrb[0].mxu0
    %759 = vdwg.mxu0
    %v760 = vld [vmem:[%s0] sm:$0xee]
    %s761 = scalar_lea.vmem %s1, 144
    %v762 = vld [vmem:[%s761] sm:$0xf]
    %v763 = vld [vmem:[%s761 + $0x4] sm:$0xf]
    %v764 = vld [vmem:[%s761 + $0x8] sm:$0xf]
    %v765 = vld [vmem:[%s761 + $0xc] sm:$0xf]
    %v766 = vld [vmem:[%s761 + $0x10] sm:$0xf]
    %v767 = vld [vmem:[%s761 + $0x14] sm:$0xf]
    %v768 = vld [vmem:[%s761 + $0x18] sm:$0xf]
    %v769 = vld [vmem:[%s761 + $0x1c] sm:$0xf]
    %v770 = vld [vmem:[%s761 + $0x20] sm:$0xf]
    %v771 = vld [vmem:[%s761 + $0x24] sm:$0xf]
    %v772 = vld [vmem:[%s761 + $0x28] sm:$0xf]
    %v773 = vld [vmem:[%s761 + $0x2c] sm:$0xf]
    %v774 = vld [vmem:[%s761 + $0x30] sm:$0xf]
    %v775 = vld [vmem:[%s761 + $0x34] sm:$0xf]
    %v776 = vld [vmem:[%s761 + $0x38] sm:$0xf]
    %v777 = vld [vmem:[%s761 + $0x3c] sm:$0xf]
    %v778 = vld [vmem:[%s761 + $0x40] sm:$0xf]
    %v779 = vld [vmem:[%s761 + $0x44] sm:$0x3]
    %v781 = vunpack.c.l.b16 %v760
    %v782 = vunpack.c.h.b16 %v760
    %v783 = vpack.c.b16 %v479, %v781
    %v784 = vpack.c.b16 %v480, %v782
    %vm785 = vcmask 1046528
    %v786 = vrot.slane %v783, 1
    %v787 = vrot.slane %v489, 1
    %v788 = vsel %vm785, %v786, %v787
    %v789 = vrot.slane %v784, 1
    %v790 = vrot.slane %v490, 1
    %v791 = vsel %vm785, %v789, %v790
    %v792 = vrot.slane %v491, 1
    %v793 = vsel %vm785, %v787, %v792
    %v794 = vrot.slane %v492, 1
    %v795 = vsel %vm785, %v790, %v794
    %v816 = vunpack.c.l.b16 %v762
    %v817 = vunpack.c.l.b16 %v763
    %v818 = vunpack.c.l.b16 %v764
    %v819 = vunpack.c.l.b16 %v765
    %v820 = vunpack.c.l.b16 %v766
    %v821 = vunpack.c.l.b16 %v767
    %v822 = vunpack.c.l.b16 %v768
    %v823 = vunpack.c.l.b16 %v769
    %v824 = vunpack.c.l.b16 %v770
    %v825 = vunpack.c.l.b16 %v771
    %v826 = vunpack.c.l.b16 %v772
    %v827 = vunpack.c.l.b16 %v773
    %v828 = vunpack.c.l.b16 %v774
    %v829 = vunpack.c.l.b16 %v775
    %v830 = vunpack.c.l.b16 %v776
    %v831 = vunpack.c.l.b16 %v777
    %v832 = vunpack.c.l.b16 %v778
    %v833 = vunpack.c.l.b16 %v779
    %v834 = vpack.c.b16 %v817, %v816
    %v835 = vpack.c.b16 %v819, %v818
    %v836 = vpack.c.b16 %v821, %v820
    %v837 = vpack.c.b16 %v823, %v822
    %v838 = vpack.c.b16 %v825, %v824
    %v839 = vpack.c.b16 %v827, %v826
    %v840 = vpack.c.b16 %v829, %v828
    %v841 = vpack.c.b16 %v831, %v830
    %v842 = vpack.c.b16 %v833, %v832
    %v852 = vsel %vm589, %v791, 0
    %v855 = vsel %vm589, %v795, 0
    %v858 = vsel %vm596, %v842, 0
    %860 = vmatprep.subr.bf16.mxu0 0
    %861 = vmatpush1.bf16.msra.mxu0 %v834
    %862 = vmatprep.subr.bf16.mxu0 0
    %863 = vmatpush1.bf16.msra.mxu0 %v835
    %864 = vmatprep.subr.bf16.mxu0 0
    %865 = vmatpush1.bf16.msra.mxu0 %v836
    %866 = vmatprep.subr.bf16.mxu0 0
    %867 = vmatpush1.bf16.msra.mxu0 %v837
    %868 = vmatprep.subr.bf16.mxu0 0
    %869 = vmatpush1.bf16.msra.mxu0 %v838
    %870 = vmatprep.subr.bf16.mxu0 0
    %871 = vmatpush1.bf16.msra.mxu0 %v839
    %872 = vmatprep.subr.bf16.mxu0 0
    %873 = vmatpush1.bf16.msra.mxu0 %v840
    %874 = vmatprep.subr.bf16.mxu0 0
    %875 = vmatpush1.bf16.msra.mxu0 %v841
    %876 = vmatprep.subr.bf16.mxu0 0
    %877 = vmatpush1.bf16.msra.mxu0 %v858
    %878 = vmatprep.subr.bf16.mxu0 0
    %879 = vmatpush1.bf16.msra.mxu0 0
    %880 = vmatprep.subr.bf16.mxu0 0
    %881 = vmatpush1.bf16.msra.mxu0 0
    %882 = vmatprep.subr.bf16.mxu0 0
    %883 = vmatpush1.bf16.msra.mxu0 0
    %884 = vmatprep.subr.bf16.mxu0 0
    %885 = vmatpush1.bf16.msra.mxu0 0
    %886 = vmatprep.subr.bf16.mxu0 0
    %887 = vmatpush1.bf16.msra.mxu0 0
    %888 = vmatprep.subr.bf16.mxu0 0
    %889 = vmatpush1.bf16.msra.mxu0 0
    %890 = vmatprep.subr.bf16.mxu0 0
    %891 = vmatpush1.bf16.msra.mxu0 0
    %892 = vmatprep.mubr.bf16.mxu0 %v852
    %893 = vmatmul.mubr.bf16.gmra.mrb[0].mxu0 %v788
    %v894 = vpop.f32.mrb[0].mxu0
    %v895 = vadd.f32 0.0, %v894
    %v896 = vpop.f32.mrb[0].mxu0
    %v897 = vpop.f32.mrb[0].mxu0
    %v898 = vadd.f32 0.0, %v897
    %v899 = vpop.f32.mrb[0].mxu0
    %900 = vmatprep.mubr.bf16.mxu0 %v855
    %901 = vmatmul.mubr.bf16.gmra.mrb[0].mxu0 %v793
    %v902 = vpop.f32.mrb[0].mxu0
    %v903 = vadd.f32 0.0, %v902
    %v904 = vpop.f32.mrb[0].mxu0
    %v905 = vpop.f32.mrb[0].mxu0
    %v906 = vadd.f32 0.0, %v905
    %v907 = vpop.f32.mrb[0].mxu0
    %908 = vdwg.mxu0
    %v909 = vadd.f32 %v746, %v895
    %v910 = vadd.f32 %v749, %v898
    %v911 = vadd.f32 %v754, %v903
    %v912 = vadd.f32 %v757, %v906
    %v913 = vld [vmem:[%s2] sm:$0x1]
    %v915 = vlaneseq
    %v916 = vshrl.u32 %v915, 7
    %v917 = vsub.s32 0, %v916
    %v918 = vrot.slane %v913, %v917
    %v920 = vmul.f32 %v909, %v918
    %v921 = vmul.f32 %v910, %v918
    %v922 = vmul.f32 %v911, %v918
    %v923 = vmul.f32 %v912, %v918
    %v924 = vld [vmem:[%s3] sm:$0x1]
    %v926 = vlaneseq
    %v927 = vshrl.u32 %v926, 7
    %v928 = vsub.s32 0, %v927
    %v929 = vrot.slane %v924, %v928
    %v931 = vadd.f32 %v920, %v929
    %v932 = vadd.f32 %v921, %v929
    %v933 = vadd.f32 %v922, %v929
    %v934 = vadd.f32 %v923, %v929
    %vm935 = vcmp.gt.f32.partialorder %v931, 0.0
    %vm936 = vcmp.gt.f32.partialorder %v932, 0.0
    %vm937 = vcmp.gt.f32.partialorder %v933, 0.0
    %vm938 = vcmp.gt.f32.partialorder %v934, 0.0
    %v939 = vmin.f32 %v931, 0.0
    %v940 = vmin.f32 %v932, 0.0
    %v941 = vmin.f32 %v933, 0.0
    %v942 = vmin.f32 %v934, 0.0
    %v943 = vmul.f32 %v939, 1.442695
    %v944 = vpow.pop %v943
    %v945 = vmul.f32 %v940, 1.442695
    %v946 = vpow.pop %v945
    %v947 = vmul.f32 %v941, 1.442695
    %v948 = vpow.pop %v947
    %v949 = vmul.f32 %v942, 1.442695
    %v950 = vpow.pop %v949
    %v951 = vsub.f32 %v944, 1.0
    %v952 = vsub.f32 %v946, 1.0
    %v953 = vsub.f32 %v948, 1.0
    %v954 = vsub.f32 %v950, 1.0
    %v955 = vsel %vm935, %v931, %v951
    %v956 = vsel %vm936, %v932, %v952
    %v957 = vsel %vm937, %v933, %v953
    %v958 = vsel %vm938, %v934, %v954
    %v959 = vpack.c.bf16 %v956, %v955
    %v960 = vpack.c.bf16 %v958, %v957
    %v963 = vunpack.c.l.b16 %v959
    %v964 = vunpack.c.h.b16 %v959
    %v965 = vunpack.c.l.b16 %v960
    %v966 = vunpack.c.h.b16 %v960
    %v967 = vpack.c.b16 %v963, %v963
    %v968 = vpack.c.b16 %v964, %v964
    %v969 = vpack.c.b16 %v965, %v965
    %v970 = vpack.c.b16 %v966, %v966
    %vm975 = vcmask 781312
    %976 = vst.msk [vmem:[#allocation2] sm:$0xf] %vm975, %v967
    %977 = vst.msk [vmem:[#allocation2 + $0x4] sm:$0xf] %vm975, %v968
    %978 = vst.msk [vmem:[#allocation2 + $0x8] sm:$0xf] %vm975, %v969
    %979 = vst.msk [vmem:[#allocation2 + $0xc] sm:$0xf] %vm975, %v970
    %980 = vst.msk [vmem:[#allocation2 + $0x10] sm:$0xf] %vm975, 0
    %v981 = vld [vmem:[#allocation2] sm:$0xf]
    %v982 = vld [vmem:[#allocation2 + $0x4] sm:$0xf]
    %v983 = vld [vmem:[#allocation2 + $0x8] sm:$0xf]
    %v984 = vld [vmem:[#allocation2 + $0xc] sm:$0xf]
    %v985 = vld [vmem:[%s4] sm:$0xff]
    %v986 = vld [vmem:[%s4 + $0x8] sm:$0xff]
    %v987 = vld [vmem:[%s4 + $0x10] sm:$0xff]
    %v988 = vld [vmem:[%s4 + $0x18] sm:$0xff]
    %v989 = vld [vmem:[%s4 + $0x20] sm:$0xff]
    %v990 = vld [vmem:[%s4 + $0x28] sm:$0xff]
    %v991 = vld [vmem:[%s4 + $0x30] sm:$0xff]
    %v992 = vld [vmem:[%s4 + $0x38] sm:$0xff]
    %v993 = vld [vmem:[%s4 + $0x40] sm:$0xff]
    %v994 = vld [vmem:[%s4 + $0x48] sm:$0xff]
    %v995 = vld [vmem:[%s4 + $0x50] sm:$0xff]
    %v996 = vld [vmem:[%s4 + $0x58] sm:$0xff]
    %v997 = vld [vmem:[#allocation2 + $0x10] sm:$0x1]
    %s998 = scalar_lea.vmem %s4, 96
    %v999 = vld [vmem:[%s998] sm:$0xff]
    %v1000 = vld [vmem:[%s998 + $0x8] sm:$0xff]
    %v1001 = vld [vmem:[%s998 + $0x10] sm:$0xff]
    %v1002 = vld [vmem:[%s998 + $0x18] sm:$0xff]
    %v1003 = vld [vmem:[%s998 + $0x20] sm:$0xff]
    %v1004 = vld [vmem:[%s998 + $0x28] sm:$0xff]
    %v1005 = vld [vmem:[%s998 + $0x30] sm:$0xff]
    %v1006 = vld [vmem:[%s998 + $0x38] sm:$0xff]
    %v1007 = vld [vmem:[%s998 + $0x40] sm:$0xff]
    %v1008 = vld [vmem:[%s998 + $0x48] sm:$0xff]
    %v1009 = vld [vmem:[%s998 + $0x50] sm:$0xff]
    %v1010 = vld [vmem:[%s998 + $0x58] sm:$0xff]
    %v1016 = vunpack.c.l.b16 %v981
    %v1017 = vunpack.c.l.b16 %v982
    %v1018 = vunpack.c.l.b16 %v983
    %v1019 = vunpack.c.l.b16 %v984
    %v1020 = vunpack.c.l.b16 %v997
    %v1021 = vpack.c.b16 %v1017, %v1016
    %v1022 = vpack.c.b16 %v1019, %v1018
    %v1023 = vpack.c.b16 %v1020, %v1020
    %v1025 = vshrl.u32 %v1021, 16
    %v1027 = vshll.u32 %v1021, 16
    %v1029 = vrot.slane %v1027, 1
    %v1030 = vor.u32 %v1025, %v1029
    %v1032 = vshll.u32 %v1022, 16
    %v1034 = vrot.slane %v1032, 1
    %v1035 = vsel %vm493, %v1030, %v1034
    %v1036 = vshrl.u32 %v1022, 16
    %v1038 = vor.u32 %v1036, %v1034
    %v1040 = vshll.u32 %v1023, 16
    %v1042 = vrot.slane %v1040, 1
    %v1043 = vsel %vm493, %v1038, %v1042
    %v1056 = vunpack.c.l.b16 %v999
    %v1057 = vunpack.c.h.b16 %v999
    %v1058 = vunpack.c.l.b16 %v1000
    %v1059 = vunpack.c.h.b16 %v1000
    %v1060 = vunpack.c.l.b16 %v1001
    %v1061 = vunpack.c.h.b16 %v1001
    %v1062 = vunpack.c.l.b16 %v1002
    %v1063 = vunpack.c.h.b16 %v1002
    %v1064 = vunpack.c.l.b16 %v1003
    %v1065 = vunpack.c.h.b16 %v1003
    %v1066 = vunpack.c.l.b16 %v1004
    %v1067 = vunpack.c.h.b16 %v1004
    %v1068 = vunpack.c.l.b16 %v1005
    %v1069 = vunpack.c.h.b16 %v1005
    %v1070 = vunpack.c.l.b16 %v1006
    %v1071 = vunpack.c.h.b16 %v1006
    %v1072 = vunpack.c.l.b16 %v1007
    %v1073 = vunpack.c.h.b16 %v1007
    %v1074 = vunpack.c.l.b16 %v1008
    %v1075 = vunpack.c.h.b16 %v1008
    %v1076 = vunpack.c.l.b16 %v1009
    %v1077 = vunpack.c.h.b16 %v1009
    %v1078 = vunpack.c.l.b16 %v1010
    %v1079 = vunpack.c.h.b16 %v1010
    %v1080 = vpack.c.b16 %v1058, %v1056
    %v1081 = vpack.c.b16 %v1059, %v1057
    %v1082 = vpack.c.b16 %v1062, %v1060
    %v1083 = vpack.c.b16 %v1063, %v1061
    %v1084 = vpack.c.b16 %v1066, %v1064
    %v1085 = vpack.c.b16 %v1067, %v1065
    %v1086 = vpack.c.b16 %v1070, %v1068
    %v1087 = vpack.c.b16 %v1071, %v1069
    %v1088 = vpack.c.b16 %v1074, %v1072
    %v1089 = vpack.c.b16 %v1075, %v1073
    %v1090 = vpack.c.b16 %v1078, %v1076
    %v1091 = vpack.c.b16 %v1079, %v1077
    %vm1104 = vcmask 785408
    %v1106 = vsel %vm1104, %v1035, 0
    %v1109 = vsel %vm1104, %v1043, 0
    %1111 = vmatprep.subr.bf16.mxu0 %v1081
    %1112 = vmatpush1.bf16.msra.mxu0 %v1080
    %1113 = vmatprep.subr.bf16.mxu0 %v1083
    %1114 = vmatpush1.bf16.msra.mxu0 %v1082
    %1115 = vmatprep.subr.bf16.mxu0 %v1085
    %1116 = vmatpush1.bf16.msra.mxu0 %v1084
    %1117 = vmatprep.subr.bf16.mxu0 %v1087
    %1118 = vmatpush1.bf16.msra.mxu0 %v1086
    %1119 = vmatprep.subr.bf16.mxu0 %v1089
    %1120 = vmatpush1.bf16.msra.mxu0 %v1088
    %1121 = vmatprep.subr.bf16.mxu0 %v1091
    %1122 = vmatpush1.bf16.msra.mxu0 %v1090
    %1123 = vmatprep.subr.bf16.mxu0 0
    %1124 = vmatpush1.bf16.msra.mxu0 0
    %1125 = vmatprep.subr.bf16.mxu0 0
    %1126 = vmatpush1.bf16.msra.mxu0 0
    %1127 = vmatprep.subr.bf16.mxu0 0
    %1128 = vmatpush1.bf16.msra.mxu0 0
    %1129 = vmatprep.subr.bf16.mxu0 0
    %1130 = vmatpush1.bf16.msra.mxu0 0
    %1131 = vmatprep.subr.bf16.mxu0 0
    %1132 = vmatpush1.bf16.msra.mxu0 0
    %1133 = vmatprep.subr.bf16.mxu0 0
    %1134 = vmatpush1.bf16.msra.mxu0 0
    %1135 = vmatprep.subr.bf16.mxu0 0
    %1136 = vmatpush1.bf16.msra.mxu0 0
    %1137 = vmatprep.subr.bf16.mxu0 0
    %1138 = vmatpush1.bf16.msra.mxu0 0
    %1139 = vmatprep.subr.bf16.mxu0 0
    %1140 = vmatpush1.bf16.msra.mxu0 0
    %1141 = vmatprep.subr.bf16.mxu0 0
    %1142 = vmatpush1.bf16.msra.mxu0 0
    %1143 = vmatprep.mubr.bf16.mxu0 0
    %1144 = vmatmul.mubr.bf16.gmra.mrb[0].mxu0 %v1106
    %v1145 = vpop.f32.mrb[0].mxu0
    %v1146 = vadd.f32 0.0, %v1145
    %v1147 = vpop.f32.mrb[0].mxu0
    %v1148 = vadd.f32 0.0, %v1147
    %v1149 = vpop.f32.mrb[0].mxu0
    %v1150 = vadd.f32 0.0, %v1149
    %v1151 = vpop.f32.mrb[0].mxu0
    %v1152 = vadd.f32 0.0, %v1151
    %1153 = vmatprep.mubr.bf16.mxu0 0
    %1154 = vmatmul.mubr.bf16.gmra.mrb[0].mxu0 %v1109
    %v1155 = vpop.f32.mrb[0].mxu0
    %v1156 = vadd.f32 0.0, %v1155
    %v1157 = vpop.f32.mrb[0].mxu0
    %v1158 = vadd.f32 0.0, %v1157
    %v1159 = vpop.f32.mrb[0].mxu0
    %v1160 = vadd.f32 0.0, %v1159
    %v1161 = vpop.f32.mrb[0].mxu0
    %v1162 = vadd.f32 0.0, %v1161
    %1163 = vdwg.mxu0
    %v1176 = vunpack.c.l.b16 %v985
    %v1177 = vunpack.c.h.b16 %v985
    %v1178 = vunpack.c.l.b16 %v986
    %v1179 = vunpack.c.h.b16 %v986
    %v1180 = vunpack.c.l.b16 %v987
    %v1181 = vunpack.c.h.b16 %v987
    %v1182 = vunpack.c.l.b16 %v988
    %v1183 = vunpack.c.h.b16 %v988
    %v1184 = vunpack.c.l.b16 %v989
    %v1185 = vunpack.c.h.b16 %v989
    %v1186 = vunpack.c.l.b16 %v990
    %v1187 = vunpack.c.h.b16 %v990
    %v1188 = vunpack.c.l.b16 %v991
    %v1189 = vunpack.c.h.b16 %v991
    %v1190 = vunpack.c.l.b16 %v992
    %v1191 = vunpack.c.h.b16 %v992
    %v1192 = vunpack.c.l.b16 %v993
    %v1193 = vunpack.c.h.b16 %v993
    %v1194 = vunpack.c.l.b16 %v994
    %v1195 = vunpack.c.h.b16 %v994
    %v1196 = vunpack.c.l.b16 %v995
    %v1197 = vunpack.c.h.b16 %v995
    %v1198 = vunpack.c.l.b16 %v996
    %v1199 = vunpack.c.h.b16 %v996
    %v1200 = vpack.c.b16 %v1178, %v1176
    %v1201 = vpack.c.b16 %v1179, %v1177
    %v1202 = vpack.c.b16 %v1182, %v1180
    %v1203 = vpack.c.b16 %v1183, %v1181
    %v1204 = vpack.c.b16 %v1186, %v1184
    %v1205 = vpack.c.b16 %v1187, %v1185
    %v1206 = vpack.c.b16 %v1190, %v1188
    %v1207 = vpack.c.b16 %v1191, %v1189
    %v1208 = vpack.c.b16 %v1194, %v1192
    %v1209 = vpack.c.b16 %v1195, %v1193
    %v1210 = vpack.c.b16 %v1198, %v1196
    %v1211 = vpack.c.b16 %v1199, %v1197
    %v1224 = vsel %vm1104, %v1021, 0
    %v1226 = vsel %vm1104, %v1022, 0
    %1228 = vmatprep.subr.bf16.mxu0 %v1201
    %1229 = vmatpush1.bf16.msra.mxu0 %v1200
    %1230 = vmatprep.subr.bf16.mxu0 %v1203
    %1231 = vmatpush1.bf16.msra.mxu0 %v1202
    %1232 = vmatprep.subr.bf16.mxu0 %v1205
    %1233 = vmatpush1.bf16.msra.mxu0 %v1204
    %1234 = vmatprep.subr.bf16.mxu0 %v1207
    %1235 = vmatpush1.bf16.msra.mxu0 %v1206
    %1236 = vmatprep.subr.bf16.mxu0 %v1209
    %1237 = vmatpush1.bf16.msra.mxu0 %v1208
    %1238 = vmatprep.subr.bf16.mxu0 %v1211
    %1239 = vmatpush1.bf16.msra.mxu0 %v1210
    %1240 = vmatprep.subr.bf16.mxu0 0
    %1241 = vmatpush1.bf16.msra.mxu0 0
    %1242 = vmatprep.subr.bf16.mxu0 0
    %1243 = vmatpush1.bf16.msra.mxu0 0
    %1244 = vmatprep.subr.bf16.mxu0 0
    %1245 = vmatpush1.bf16.msra.mxu0 0
    %1246 = vmatprep.subr.bf16.mxu0 0
    %1247 = vmatpush1.bf16.msra.mxu0 0
    %1248 = vmatprep.subr.bf16.mxu0 0
    %1249 = vmatpush1.bf16.msra.mxu0 0
    %1250 = vmatprep.subr.bf16.mxu0 0
    %1251 = vmatpush1.bf16.msra.mxu0 0
    %1252 = vmatprep.subr.bf16.mxu0 0
    %1253 = vmatpush1.bf16.msra.mxu0 0
    %1254 = vmatprep.subr.bf16.mxu0 0
    %1255 = vmatpush1.bf16.msra.mxu0 0
    %1256 = vmatprep.subr.bf16.mxu0 0
    %1257 = vmatpush1.bf16.msra.mxu0 0
    %1258 = vmatprep.subr.bf16.mxu0 0
    %1259 = vmatpush1.bf16.msra.mxu0 0
    %1260 = vmatprep.mubr.bf16.mxu0 0
    %1261 = vmatmul.mubr.bf16.gmra.mrb[0].mxu0 %v1224
    %v1262 = vpop.f32.mrb[0].mxu0
    %v1263 = vadd.f32 %v1146, %v1262
    %v1264 = vpop.f32.mrb[0].mxu0
    %v1265 = vadd.f32 %v1148, %v1264
    %v1266 = vpop.f32.mrb[0].mxu0
    %v1267 = vadd.f32 %v1150, %v1266
    %v1268 = vpop.f32.mrb[0].mxu0
    %v1269 = vadd.f32 %v1152, %v1268
    %1270 = vmatprep.mubr.bf16.mxu0 0
    %1271 = vmatmul.mubr.bf16.gmra.mrb[0].mxu0 %v1226
    %v1272 = vpop.f32.mrb[0].mxu0
    %v1273 = vadd.f32 %v1156, %v1272
    %v1274 = vpop.f32.mrb[0].mxu0
    %v1275 = vadd.f32 %v1158, %v1274
    %v1276 = vpop.f32.mrb[0].mxu0
    %v1277 = vadd.f32 %v1160, %v1276
    %v1278 = vpop.f32.mrb[0].mxu0
    %v1279 = vadd.f32 %v1162, %v1278
    %1280 = vdwg.mxu0
    %v1281 = vld [vmem:[#allocation2] sm:$0xe]
    %s1282 = scalar_lea.vmem %s4, 192
    %v1283 = vld [vmem:[%s1282] sm:$0xff]
    %v1284 = vld [vmem:[%s1282 + $0x8] sm:$0xff]
    %v1285 = vld [vmem:[%s1282 + $0x10] sm:$0xff]
    %v1286 = vld [vmem:[%s1282 + $0x18] sm:$0xff]
    %v1287 = vld [vmem:[%s1282 + $0x20] sm:$0xff]
    %v1288 = vld [vmem:[%s1282 + $0x28] sm:$0xff]
    %v1289 = vld [vmem:[%s1282 + $0x30] sm:$0xff]
    %v1290 = vld [vmem:[%s1282 + $0x38] sm:$0xff]
    %v1291 = vld [vmem:[%s1282 + $0x40] sm:$0xff]
    %v1292 = vld [vmem:[%s1282 + $0x48] sm:$0xff]
    %v1293 = vld [vmem:[%s1282 + $0x50] sm:$0xff]
    %v1294 = vld [vmem:[%s1282 + $0x58] sm:$0xff]
    %v1296 = vunpack.c.l.b16 %v1281
    %v1297 = vpack.c.b16 %v1017, %v1296
    %v1298 = vrot.slane %v1297, 1
    %v1299 = vrot.slane %v1022, 1
    %v1300 = vsel %vm785, %v1298, %v1299
    %v1301 = vrot.slane %v1023, 1
    %v1302 = vsel %vm785, %v1299, %v1301
    %v1315 = vunpack.c.l.b16 %v1283
    %v1316 = vunpack.c.h.b16 %v1283
    %v1317 = vunpack.c.l.b16 %v1284
    %v1318 = vunpack.c.h.b16 %v1284
    %v1319 = vunpack.c.l.b16 %v1285
    %v1320 = vunpack.c.h.b16 %v1285
    %v1321 = vunpack.c.l.b16 %v1286
    %v1322 = vunpack.c.h.b16 %v1286
    %v1323 = vunpack.c.l.b16 %v1287
    %v1324 = vunpack.c.h.b16 %v1287
    %v1325 = vunpack.c.l.b16 %v1288
    %v1326 = vunpack.c.h.b16 %v1288
    %v1327 = vunpack.c.l.b16 %v1289
    %v1328 = vunpack.c.h.b16 %v1289
    %v1329 = vunpack.c.l.b16 %v1290
    %v1330 = vunpack.c.h.b16 %v1290
    %v1331 = vunpack.c.l.b16 %v1291
    %v1332 = vunpack.c.h.b16 %v1291
    %v1333 = vunpack.c.l.b16 %v1292
    %v1334 = vunpack.c.h.b16 %v1292
    %v1335 = vunpack.c.l.b16 %v1293
    %v1336 = vunpack.c.h.b16 %v1293
    %v1337 = vunpack.c.l.b16 %v1294
    %v1338 = vunpack.c.h.b16 %v1294
    %v1339 = vpack.c.b16 %v1317, %v1315
    %v1340 = vpack.c.b16 %v1318, %v1316
    %v1341 = vpack.c.b16 %v1321, %v1319
    %v1342 = vpack.c.b16 %v1322, %v1320
    %v1343 = vpack.c.b16 %v1325, %v1323
    %v1344 = vpack.c.b16 %v1326, %v1324
    %v1345 = vpack.c.b16 %v1329, %v1327
    %v1346 = vpack.c.b16 %v1330, %v1328
    %v1347 = vpack.c.b16 %v1333, %v1331
    %v1348 = vpack.c.b16 %v1334, %v1332
    %v1349 = vpack.c.b16 %v1337, %v1335
    %v1350 = vpack.c.b16 %v1338, %v1336
    %v1364 = vsel %vm1104, %v1300, 0
    %v1367 = vsel %vm1104, %v1302, 0
    %1369 = vmatprep.subr.bf16.mxu0 %v1340
    %1370 = vmatpush1.bf16.msra.mxu0 %v1339
    %1371 = vmatprep.subr.bf16.mxu0 %v1342
    %1372 = vmatpush1.bf16.msra.mxu0 %v1341
    %1373 = vmatprep.subr.bf16.mxu0 %v1344
    %1374 = vmatpush1.bf16.msra.mxu0 %v1343
    %1375 = vmatprep.subr.bf16.mxu0 %v1346
    %1376 = vmatpush1.bf16.msra.mxu0 %v1345
    %1377 = vmatprep.subr.bf16.mxu0 %v1348
    %1378 = vmatpush1.bf16.msra.mxu0 %v1347
    %1379 = vmatprep.subr.bf16.mxu0 %v1350
    %1380 = vmatpush1.bf16.msra.mxu0 %v1349
    %1381 = vmatprep.subr.bf16.mxu0 0
    %1382 = vmatpush1.bf16.msra.mxu0 0
    %1383 = vmatprep.subr.bf16.mxu0 0
    %1384 = vmatpush1.bf16.msra.mxu0 0
    %1385 = vmatprep.subr.bf16.mxu0 0
    %1386 = vmatpush1.bf16.msra.mxu0 0
    %1387 = vmatprep.subr.bf16.mxu0 0
    %1388 = vmatpush1.bf16.msra.mxu0 0
    %1389 = vmatprep.subr.bf16.mxu0 0
    %1390 = vmatpush1.bf16.msra.mxu0 0
    %1391 = vmatprep.subr.bf16.mxu0 0
    %1392 = vmatpush1.bf16.msra.mxu0 0
    %1393 = vmatprep.subr.bf16.mxu0 0
    %1394 = vmatpush1.bf16.msra.mxu0 0
    %1395 = vmatprep.subr.bf16.mxu0 0
    %1396 = vmatpush1.bf16.msra.mxu0 0
    %1397 = vmatprep.subr.bf16.mxu0 0
    %1398 = vmatpush1.bf16.msra.mxu0 0
    %1399 = vmatprep.subr.bf16.mxu0 0
    %1400 = vmatpush1.bf16.msra.mxu0 0
    %1401 = vmatprep.mubr.bf16.mxu0 0
    %1402 = vmatmul.mubr.bf16.gmra.mrb[0].mxu0 %v1364
    %v1403 = vpop.f32.mrb[0].mxu0
    %v1404 = vadd.f32 0.0, %v1403
    %v1405 = vpop.f32.mrb[0].mxu0
    %v1406 = vadd.f32 0.0, %v1405
    %v1407 = vpop.f32.mrb[0].mxu0
    %v1408 = vadd.f32 0.0, %v1407
    %v1409 = vpop.f32.mrb[0].mxu0
    %v1410 = vadd.f32 0.0, %v1409
    %1411 = vmatprep.mubr.bf16.mxu0 0
    %1412 = vmatmul.mubr.bf16.gmra.mrb[0].mxu0 %v1367
    %v1413 = vpop.f32.mrb[0].mxu0
    %v1414 = vadd.f32 0.0, %v1413
    %v1415 = vpop.f32.mrb[0].mxu0
    %v1416 = vadd.f32 0.0, %v1415
    %v1417 = vpop.f32.mrb[0].mxu0
    %v1418 = vadd.f32 0.0, %v1417
    %v1419 = vpop.f32.mrb[0].mxu0
    %v1420 = vadd.f32 0.0, %v1419
    %1421 = vdwg.mxu0
    %v1422 = vadd.f32 %v1263, %v1404
    %v1423 = vadd.f32 %v1265, %v1406
    %v1424 = vadd.f32 %v1267, %v1408
    %v1425 = vadd.f32 %v1269, %v1410
    %v1426 = vadd.f32 %v1273, %v1414
    %v1427 = vadd.f32 %v1275, %v1416
    %v1428 = vadd.f32 %v1277, %v1418
    %v1429 = vadd.f32 %v1279, %v1420
    %v1430 = vld [vmem:[%s5] sm:$0x3]
    %v1432 = vlaneseq
    %v1433 = vshrl.u32 %v1432, 7
    %v1434 = vsub.s32 0, %v1433
    %v1435 = vrot.slane %v1430, %v1434
    %v1436 = vlaneseq
    %v1437 = vshrl.u32 %v1436, 7
    %v1438 = vsub.s32 1, %v1437
    %v1439 = vrot.slane %v1430, %v1438
    %v1442 = vmul.f32 %v1422, %v1435
    %v1443 = vmul.f32 %v1423, %v1439
    %v1444 = vmul.f32 %v1424, %v1435
    %v1445 = vmul.f32 %v1425, %v1439
    %v1446 = vmul.f32 %v1426, %v1435
    %v1447 = vmul.f32 %v1427, %v1439
    %v1448 = vmul.f32 %v1428, %v1435
    %v1449 = vmul.f32 %v1429, %v1439
    %v1450 = vld [vmem:[%s6] sm:$0x3]
    %v1452 = vlaneseq
    %v1453 = vshrl.u32 %v1452, 7
    %v1454 = vsub.s32 0, %v1453
    %v1455 = vrot.slane %v1450, %v1454
    %v1456 = vlaneseq
    %v1457 = vshrl.u32 %v1456, 7
    %v1458 = vsub.s32 1, %v1457
    %v1459 = vrot.slane %v1450, %v1458
    %v1462 = vadd.f32 %v1442, %v1455
    %v1463 = vadd.f32 %v1443, %v1459
    %v1464 = vadd.f32 %v1444, %v1455
    %v1465 = vadd.f32 %v1445, %v1459
    %v1466 = vadd.f32 %v1446, %v1455
    %v1467 = vadd.f32 %v1447, %v1459
    %v1468 = vadd.f32 %v1448, %v1455
    %v1469 = vadd.f32 %v1449, %v1459
    %vm1470 = vcmp.gt.f32.partialorder %v1462, 0.0
    %vm1471 = vcmp.gt.f32.partialorder %v1463, 0.0
    %vm1472 = vcmp.gt.f32.partialorder %v1464, 0.0
    %vm1473 = vcmp.gt.f32.partialorder %v1465, 0.0
    %vm1474 = vcmp.gt.f32.partialorder %v1466, 0.0
    %vm1475 = vcmp.gt.f32.partialorder %v1467, 0.0
    %vm1476 = vcmp.gt.f32.partialorder %v1468, 0.0
    %vm1477 = vcmp.gt.f32.partialorder %v1469, 0.0
    %v1478 = vmin.f32 %v1462, 0.0
    %v1479 = vmin.f32 %v1463, 0.0
    %v1480 = vmin.f32 %v1464, 0.0
    %v1481 = vmin.f32 %v1465, 0.0
    %v1482 = vmin.f32 %v1466, 0.0
    %v1483 = vmin.f32 %v1467, 0.0
    %v1484 = vmin.f32 %v1468, 0.0
    %v1485 = vmin.f32 %v1469, 0.0
    %v1486 = vmul.f32 %v1478, 1.442695
    %v1487 = vpow.pop %v1486
    %v1488 = vmul.f32 %v1479, 1.442695
    %v1489 = vpow.pop %v1488
    %v1490 = vmul.f32 %v1480, 1.442695
    %v1491 = vpow.pop %v1490
    %v1492 = vmul.f32 %v1481, 1.442695
    %v1493 = vpow.pop %v1492
    %v1494 = vmul.f32 %v1482, 1.442695
    %v1495 = vpow.pop %v1494
    %v1496 = vmul.f32 %v1483, 1.442695
    %v1497 = vpow.pop %v1496
    %v1498 = vmul.f32 %v1484, 1.442695
    %v1499 = vpow.pop %v1498
    %v1500 = vmul.f32 %v1485, 1.442695
    %v1501 = vpow.pop %v1500
    %v1502 = vsub.f32 %v1487, 1.0
    %v1503 = vsub.f32 %v1489, 1.0
    %v1504 = vsub.f32 %v1491, 1.0
    %v1505 = vsub.f32 %v1493, 1.0
    %v1506 = vsub.f32 %v1495, 1.0
    %v1507 = vsub.f32 %v1497, 1.0
    %v1508 = vsub.f32 %v1499, 1.0
    %v1509 = vsub.f32 %v1501, 1.0
    %v1510 = vsel %vm1470, %v1462, %v1502
    %v1511 = vsel %vm1471, %v1463, %v1503
    %v1512 = vsel %vm1472, %v1464, %v1504
    %v1513 = vsel %vm1473, %v1465, %v1505
    %v1514 = vsel %vm1474, %v1466, %v1506
    %v1515 = vsel %vm1475, %v1467, %v1507
    %v1516 = vsel %vm1476, %v1468, %v1508
    %v1517 = vsel %vm1477, %v1469, %v1509
    %v1518 = vpack.c.bf16 %v1512, %v1510
    %v1519 = vpack.c.bf16 %v1513, %v1511
    %v1520 = vpack.c.bf16 %v1516, %v1514
    %v1521 = vpack.c.bf16 %v1517, %v1515
    %v1526 = vunpack.c.l.b16 %v1518
    %v1527 = vunpack.c.l.b16 %v1519
    %v1528 = vunpack.c.h.b16 %v1518
    %v1529 = vunpack.c.h.b16 %v1519
    %v1530 = vunpack.c.l.b16 %v1520
    %v1531 = vunpack.c.l.b16 %v1521
    %v1532 = vunpack.c.h.b16 %v1520
    %v1533 = vunpack.c.h.b16 %v1521
    %v1534 = vpack.c.b16 %v1527, %v1526
    %v1535 = vpack.c.b16 %v1529, %v1528
    %v1536 = vpack.c.b16 %v1531, %v1530
    %v1537 = vpack.c.b16 %v1533, %v1532
    %vm1542 = vcmask 1043456
    %vm1543 = vcmask 261124
    %vm1544 = vmor %vm1543, %vm1542
    %1545 = vst.msk [vmem:[#allocation3] sm:$0xff] %vm1544, %v1534
    %1546 = vst.msk [vmem:[#allocation3 + $0x8] sm:$0xff] %vm1544, %v1535
    %1547 = vst.msk [vmem:[#allocation3 + $0x10] sm:$0xff] %vm1544, %v1536
    %1548 = vst.msk [vmem:[#allocation3 + $0x18] sm:$0xff] %vm1544, %v1537
    %1549 = vst.msk [vmem:[#allocation3 + $0x20] sm:$0xff] %vm1544, 0
    %v1550 = vld [vmem:[#allocation3] sm:$0xff]
    %v1551 = vld [vmem:[#allocation3 + $0x8] sm:$0xff]
    %v1552 = vld [vmem:[#allocation3 + $0x10] sm:$0xff]
    %v1553 = vld [vmem:[#allocation3 + $0x18] sm:$0xff]
    %v1554 = vld [vmem:[%s7] sm:$0xff]
    %v1555 = vld [vmem:[%s7 + $0x8] sm:$0xff]
    %v1556 = vld [vmem:[%s7 + $0x10] sm:$0xff]
    %v1557 = vld [vmem:[%s7 + $0x18] sm:$0xff]
    %v1558 = vld [vmem:[%s7 + $0x20] sm:$0xff]
    %v1559 = vld [vmem:[%s7 + $0x28] sm:$0xff]
    %v1560 = vld [vmem:[%s7 + $0x30] sm:$0xff]
    %v1561 = vld [vmem:[%s7 + $0x38] sm:$0xff]
    %v1562 = vld [vmem:[%s7 + $0x40] sm:$0xff]
    %v1563 = vld [vmem:[%s7 + $0x48] sm:$0xff]
    %v1564 = vld [vmem:[%s7 + $0x50] sm:$0xff]
    %v1565 = vld [vmem:[%s7 + $0x58] sm:$0xff]
    %v1566 = vld [vmem:[%s7 + $0x60] sm:$0xff]
    %v1567 = vld [vmem:[%s7 + $0x68] sm:$0xff]
    %v1568 = vld [vmem:[%s7 + $0x70] sm:$0xff]
    %v1569 = vld [vmem:[%s7 + $0x78] sm:$0xff]
    %v1570 = vld [vmem:[%s7 + $0x80] sm:$0xff]
    %v1571 = vld [vmem:[%s7 + $0x88] sm:$0xff]
    %v1572 = vld [vmem:[%s7 + $0x90] sm:$0xff]
    %v1573 = vld [vmem:[%s7 + $0x98] sm:$0xff]
    %v1574 = vld [vmem:[#allocation3 + $0x20] sm:$0x11]
    %s1575 = scalar_lea.vmem %s7, 160
    %v1576 = vld [vmem:[%s1575] sm:$0xff]
    %v1577 = vld [vmem:[%s1575 + $0x8] sm:$0xff]
    %v1578 = vld [vmem:[%s1575 + $0x10] sm:$0xff]
    %v1579 = vld [vmem:[%s1575 + $0x18] sm:$0xff]
    %v1580 = vld [vmem:[%s1575 + $0x20] sm:$0xff]
    %v1581 = vld [vmem:[%s1575 + $0x28] sm:$0xff]
    %v1582 = vld [vmem:[%s1575 + $0x30] sm:$0xff]
    %v1583 = vld [vmem:[%s1575 + $0x38] sm:$0xff]
    %v1584 = vld [vmem:[%s1575 + $0x40] sm:$0xff]
    %v1585 = vld [vmem:[%s1575 + $0x48] sm:$0xff]
    %v1586 = vld [vmem:[%s1575 + $0x50] sm:$0xff]
    %v1587 = vld [vmem:[%s1575 + $0x58] sm:$0xff]
    %v1588 = vld [vmem:[%s1575 + $0x60] sm:$0xff]
    %v1589 = vld [vmem:[%s1575 + $0x68] sm:$0xff]
    %v1590 = vld [vmem:[%s1575 + $0x70] sm:$0xff]
    %v1591 = vld [vmem:[%s1575 + $0x78] sm:$0xff]
    %v1592 = vld [vmem:[%s1575 + $0x80] sm:$0xff]
    %v1593 = vld [vmem:[%s1575 + $0x88] sm:$0xff]
    %v1594 = vld [vmem:[%s1575 + $0x90] sm:$0xff]
    %v1595 = vld [vmem:[%s1575 + $0x98] sm:$0xff]
    %v1601 = vunpack.c.l.b16 %v1550
    %v1602 = vunpack.c.h.b16 %v1550
    %v1603 = vunpack.c.l.b16 %v1551
    %v1604 = vunpack.c.h.b16 %v1551
    %v1605 = vunpack.c.l.b16 %v1552
    %v1606 = vunpack.c.h.b16 %v1552
    %v1607 = vunpack.c.l.b16 %v1553
    %v1608 = vunpack.c.h.b16 %v1553
    %v1609 = vunpack.c.l.b16 %v1574
    %v1610 = vunpack.c.h.b16 %v1574
    %v1611 = vpack.c.b16 %v1603, %v1601
    %v1612 = vpack.c.b16 %v1604, %v1602
    %v1613 = vpack.c.b16 %v1607, %v1605
    %v1614 = vpack.c.b16 %v1608, %v1606
    %v1615 = vpack.c.b16 %v1609, %v1609
    %v1616 = vpack.c.b16 %v1610, %v1610
    %v1618 = vshrl.u32 %v1611, 16
    %v1620 = vshll.u32 %v1611, 16
    %v1622 = vrot.slane %v1620, 1
    %v1623 = vor.u32 %v1618, %v1622
    %v1625 = vshll.u32 %v1613, 16
    %v1627 = vrot.slane %v1625, 1
    %v1628 = vsel %vm493, %v1623, %v1627
    %v1630 = vshrl.u32 %v1612, 16
    %v1632 = vshll.u32 %v1612, 16
    %v1634 = vrot.slane %v1632, 1
    %v1635 = vor.u32 %v1630, %v1634
    %v1637 = vshll.u32 %v1614, 16
    %v1639 = vrot.slane %v1637, 1
    %v1640 = vsel %vm493, %v1635, %v1639
    %v1641 = vshrl.u32 %v1613, 16
    %v1643 = vor.u32 %v1641, %v1627
    %v1645 = vshll.u32 %v1615, 16
    %v1647 = vrot.slane %v1645, 1
    %v1648 = vsel %vm493, %v1643, %v1647
    %v1649 = vshrl.u32 %v1614, 16
    %v1651 = vor.u32 %v1649, %v1639
    %v1653 = vshll.u32 %v1616, 16
    %v1655 = vrot.slane %v1653, 1
    %v1656 = vsel %vm493, %v1651, %v1655
    %v1679 = vunpack.c.l.b16 %v1576
    %v1680 = vunpack.c.h.b16 %v1576
    %v1681 = vunpack.c.l.b16 %v1577
    %v1682 = vunpack.c.h.b16 %v1577
    %v1683 = vunpack.c.l.b16 %v1578
    %v1684 = vunpack.c.h.b16 %v1578
    %v1685 = vunpack.c.l.b16 %v1579
    %v1686 = vunpack.c.h.b16 %v1579
    %v1687 = vunpack.c.l.b16 %v1580
    %v1688 = vunpack.c.h.b16 %v1580
    %v1689 = vunpack.c.l.b16 %v1581
    %v1690 = vunpack.c.h.b16 %v1581
    %v1691 = vunpack.c.l.b16 %v1582
    %v1692 = vunpack.c.h.b16 %v1582
    %v1693 = vunpack.c.l.b16 %v1583
    %v1694 = vunpack.c.h.b16 %v1583
    %v1695 = vunpack.c.l.b16 %v1584
    %v1696 = vunpack.c.h.b16 %v1584
    %v1697 = vunpack.c.l.b16 %v1585
    %v1698 = vunpack.c.h.b16 %v1585
    %v1699 = vunpack.c.l.b16 %v1586
    %v1700 = vunpack.c.h.b16 %v1586
    %v1701 = vunpack.c.l.b16 %v1587
    %v1702 = vunpack.c.h.b16 %v1587
    %v1703 = vunpack.c.l.b16 %v1588
    %v1704 = vunpack.c.h.b16 %v1588
    %v1705 = vunpack.c.l.b16 %v1589
    %v1706 = vunpack.c.h.b16 %v1589
    %v1707 = vunpack.c.l.b16 %v1590
    %v1708 = vunpack.c.h.b16 %v1590
    %v1709 = vunpack.c.l.b16 %v1591
    %v1710 = vunpack.c.h.b16 %v1591
    %v1711 = vunpack.c.l.b16 %v1592
    %v1712 = vunpack.c.h.b16 %v1592
    %v1713 = vunpack.c.l.b16 %v1593
    %v1714 = vunpack.c.h.b16 %v1593
    %v1715 = vunpack.c.l.b16 %v1594
    %v1716 = vunpack.c.h.b16 %v1594
    %v1717 = vunpack.c.l.b16 %v1595
    %v1718 = vunpack.c.h.b16 %v1595
    %v1719 = vpack.c.b16 %v1681, %v1679
    %v1720 = vpack.c.b16 %v1682, %v1680
    %v1721 = vpack.c.b16 %v1685, %v1683
    %v1722 = vpack.c.b16 %v1686, %v1684
    %v1723 = vpack.c.b16 %v1689, %v1687
    %v1724 = vpack.c.b16 %v1690, %v1688
    %v1725 = vpack.c.b16 %v1693, %v1691
    %v1726 = vpack.c.b16 %v1694, %v1692
    %v1727 = vpack.c.b16 %v1697, %v1695
    %v1728 = vpack.c.b16 %v1698, %v1696
    %v1729 = vpack.c.b16 %v1701, %v1699
    %v1730 = vpack.c.b16 %v1702, %v1700
    %v1731 = vpack.c.b16 %v1705, %v1703
    %v1732 = vpack.c.b16 %v1706, %v1704
    %v1733 = vpack.c.b16 %v1709, %v1707
    %v1734 = vpack.c.b16 %v1710, %v1708
    %v1735 = vpack.c.b16 %v1713, %v1711
    %v1736 = vpack.c.b16 %v1714, %v1712
    %v1737 = vpack.c.b16 %v1717, %v1715
    %v1738 = vpack.c.b16 %v1718, %v1716
    %vm1759 = vcmask 261120
    %v1761 = vsel %vm1759, %v1640, 0
    %v1764 = vsel %vm1759, %v1656, 0
    %1766 = vmatprep.subr.bf16.mxu0 %v1720
    %1767 = vmatpush1.bf16.msra.mxu0 %v1719
    %1768 = vmatprep.subr.bf16.mxu0 %v1722
    %1769 = vmatpush1.bf16.msra.mxu0 %v1721
    %1770 = vmatprep.subr.bf16.mxu0 %v1724
    %1771 = vmatpush1.bf16.msra.mxu0 %v1723
    %1772 = vmatprep.subr.bf16.mxu0 %v1726
    %1773 = vmatpush1.bf16.msra.mxu0 %v1725
    %1774 = vmatprep.subr.bf16.mxu0 %v1728
    %1775 = vmatpush1.bf16.msra.mxu0 %v1727
    %1776 = vmatprep.subr.bf16.mxu0 %v1730
    %1777 = vmatpush1.bf16.msra.mxu0 %v1729
    %1778 = vmatprep.subr.bf16.mxu0 %v1732
    %1779 = vmatpush1.bf16.msra.mxu0 %v1731
    %1780 = vmatprep.subr.bf16.mxu0 %v1734
    %1781 = vmatpush1.bf16.msra.mxu0 %v1733
    %1782 = vmatprep.subr.bf16.mxu0 %v1736
    %1783 = vmatpush1.bf16.msra.mxu0 %v1735
    %1784 = vmatprep.subr.bf16.mxu0 %v1738
    %1785 = vmatpush1.bf16.msra.mxu0 %v1737
    %1786 = vmatprep.subr.bf16.mxu0 0
    %1787 = vmatpush1.bf16.msra.mxu0 0
    %1788 = vmatprep.subr.bf16.mxu0 0
    %1789 = vmatpush1.bf16.msra.mxu0 0
    %1790 = vmatprep.subr.bf16.mxu0 0
    %1791 = vmatpush1.bf16.msra.mxu0 0
    %1792 = vmatprep.subr.bf16.mxu0 0
    %1793 = vmatpush1.bf16.msra.mxu0 0
    %1794 = vmatprep.subr.bf16.mxu0 0
    %1795 = vmatpush1.bf16.msra.mxu0 0
    %1796 = vmatprep.subr.bf16.mxu0 0
    %1797 = vmatpush1.bf16.msra.mxu0 0
    %1798 = vmatprep.mubr.bf16.mxu0 %v1761
    %1799 = vmatmul.mubr.bf16.gmra.mrb[0].mxu0 %v1628
    %v1800 = vpop.f32.mrb[0].mxu0
    %v1801 = vadd.f32 0.0, %v1800
    %v1802 = vpop.f32.mrb[0].mxu0
    %v1803 = vadd.f32 0.0, %v1802
    %v1804 = vpop.f32.mrb[0].mxu0
    %v1805 = vadd.f32 0.0, %v1804
    %v1806 = vpop.f32.mrb[0].mxu0
    %v1807 = vadd.f32 0.0, %v1806
    %1808 = vmatprep.mubr.bf16.mxu0 %v1764
    %1809 = vmatmul.mubr.bf16.gmra.mrb[0].mxu0 %v1648
    %v1810 = vpop.f32.mrb[0].mxu0
    %v1811 = vadd.f32 0.0, %v1810
    %v1812 = vpop.f32.mrb[0].mxu0
    %v1813 = vadd.f32 0.0, %v1812
    %v1814 = vpop.f32.mrb[0].mxu0
    %v1815 = vadd.f32 0.0, %v1814
    %v1816 = vpop.f32.mrb[0].mxu0
    %v1817 = vadd.f32 0.0, %v1816
    %1818 = vdwg.mxu0
    %v1841 = vunpack.c.l.b16 %v1554
    %v1842 = vunpack.c.h.b16 %v1554
    %v1843 = vunpack.c.l.b16 %v1555
    %v1844 = vunpack.c.h.b16 %v1555
    %v1845 = vunpack.c.l.b16 %v1556
    %v1846 = vunpack.c.h.b16 %v1556
    %v1847 = vunpack.c.l.b16 %v1557
    %v1848 = vunpack.c.h.b16 %v1557
    %v1849 = vunpack.c.l.b16 %v1558
    %v1850 = vunpack.c.h.b16 %v1558
    %v1851 = vunpack.c.l.b16 %v1559
    %v1852 = vunpack.c.h.b16 %v1559
    %v1853 = vunpack.c.l.b16 %v1560
    %v1854 = vunpack.c.h.b16 %v1560
    %v1855 = vunpack.c.l.b16 %v1561
    %v1856 = vunpack.c.h.b16 %v1561
    %v1857 = vunpack.c.l.b16 %v1562
    %v1858 = vunpack.c.h.b16 %v1562
    %v1859 = vunpack.c.l.b16 %v1563
    %v1860 = vunpack.c.h.b16 %v1563
    %v1861 = vunpack.c.l.b16 %v1564
    %v1862 = vunpack.c.h.b16 %v1564
    %v1863 = vunpack.c.l.b16 %v1565
    %v1864 = vunpack.c.h.b16 %v1565
    %v1865 = vunpack.c.l.b16 %v1566
    %v1866 = vunpack.c.h.b16 %v1566
    %v1867 = vunpack.c.l.b16 %v1567
    %v1868 = vunpack.c.h.b16 %v1567
    %v1869 = vunpack.c.l.b16 %v1568
    %v1870 = vunpack.c.h.b16 %v1568
    %v1871 = vunpack.c.l.b16 %v1569
    %v1872 = vunpack.c.h.b16 %v1569
    %v1873 = vunpack.c.l.b16 %v1570
    %v1874 = vunpack.c.h.b16 %v1570
    %v1875 = vunpack.c.l.b16 %v1571
    %v1876 = vunpack.c.h.b16 %v1571
    %v1877 = vunpack.c.l.b16 %v1572
    %v1878 = vunpack.c.h.b16 %v1572
    %v1879 = vunpack.c.l.b16 %v1573
    %v1880 = vunpack.c.h.b16 %v1573
    %v1881 = vpack.c.b16 %v1843, %v1841
    %v1882 = vpack.c.b16 %v1844, %v1842
    %v1883 = vpack.c.b16 %v1847, %v1845
    %v1884 = vpack.c.b16 %v1848, %v1846
    %v1885 = vpack.c.b16 %v1851, %v1849
    %v1886 = vpack.c.b16 %v1852, %v1850
    %v1887 = vpack.c.b16 %v1855, %v1853
    %v1888 = vpack.c.b16 %v1856, %v1854
    %v1889 = vpack.c.b16 %v1859, %v1857
    %v1890 = vpack.c.b16 %v1860, %v1858
    %v1891 = vpack.c.b16 %v1863, %v1861
    %v1892 = vpack.c.b16 %v1864, %v1862
    %v1893 = vpack.c.b16 %v1867, %v1865
    %v1894 = vpack.c.b16 %v1868, %v1866
    %v1895 = vpack.c.b16 %v1871, %v1869
    %v1896 = vpack.c.b16 %v1872, %v1870
    %v1897 = vpack.c.b16 %v1875, %v1873
    %v1898 = vpack.c.b16 %v1876, %v1874
    %v1899 = vpack.c.b16 %v1879, %v1877
    %v1900 = vpack.c.b16 %v1880, %v1878
    %v1921 = vsel %vm1759, %v1612, 0
    %v1923 = vsel %vm1759, %v1614, 0
    %1925 = vmatprep.subr.bf16.mxu0 %v1882
    %1926 = vmatpush1.bf16.msra.mxu0 %v1881
    %1927 = vmatprep.subr.bf16.mxu0 %v1884
    %1928 = vmatpush1.bf16.msra.mxu0 %v1883
    %1929 = vmatprep.subr.bf16.mxu0 %v1886
    %1930 = vmatpush1.bf16.msra.mxu0 %v1885
    %1931 = vmatprep.subr.bf16.mxu0 %v1888
    %1932 = vmatpush1.bf16.msra.mxu0 %v1887
    %1933 = vmatprep.subr.bf16.mxu0 %v1890
    %1934 = vmatpush1.bf16.msra.mxu0 %v1889
    %1935 = vmatprep.subr.bf16.mxu0 %v1892
    %1936 = vmatpush1.bf16.msra.mxu0 %v1891
    %1937 = vmatprep.subr.bf16.mxu0 %v1894
    %1938 = vmatpush1.bf16.msra.mxu0 %v1893
    %1939 = vmatprep.subr.bf16.mxu0 %v1896
    %1940 = vmatpush1.bf16.msra.mxu0 %v1895
    %1941 = vmatprep.subr.bf16.mxu0 %v1898
    %1942 = vmatpush1.bf16.msra.mxu0 %v1897
    %1943 = vmatprep.subr.bf16.mxu0 %v1900
    %1944 = vmatpush1.bf16.msra.mxu0 %v1899
    %1945 = vmatprep.subr.bf16.mxu0 0
    %1946 = vmatpush1.bf16.msra.mxu0 0
    %1947 = vmatprep.subr.bf16.mxu0 0
    %1948 = vmatpush1.bf16.msra.mxu0 0
    %1949 = vmatprep.subr.bf16.mxu0 0
    %1950 = vmatpush1.bf16.msra.mxu0 0
    %1951 = vmatprep.subr.bf16.mxu0 0
    %1952 = vmatpush1.bf16.msra.mxu0 0
    %1953 = vmatprep.subr.bf16.mxu0 0
    %1954 = vmatpush1.bf16.msra.mxu0 0
    %1955 = vmatprep.subr.bf16.mxu0 0
    %1956 = vmatpush1.bf16.msra.mxu0 0
    %1957 = vmatprep.mubr.bf16.mxu0 %v1921
    %1958 = vmatmul.mubr.bf16.gmra.mrb[0].mxu0 %v1611
    %v1959 = vpop.f32.mrb[0].mxu0
    %v1960 = vadd.f32 %v1801, %v1959
    %v1961 = vpop.f32.mrb[0].mxu0
    %v1962 = vadd.f32 %v1803, %v1961
    %v1963 = vpop.f32.mrb[0].mxu0
    %v1964 = vadd.f32 %v1805, %v1963
    %v1965 = vpop.f32.mrb[0].mxu0
    %v1966 = vadd.f32 %v1807, %v1965
    %1967 = vmatprep.mubr.bf16.mxu0 %v1923
    %1968 = vmatmul.mubr.bf16.gmra.mrb[0].mxu0 %v1613
    %v1969 = vpop.f32.mrb[0].mxu0
    %v1970 = vadd.f32 %v1811, %v1969
    %v1971 = vpop.f32.mrb[0].mxu0
    %v1972 = vadd.f32 %v1813, %v1971
    %v1973 = vpop.f32.mrb[0].mxu0
    %v1974 = vadd.f32 %v1815, %v1973
    %v1975 = vpop.f32.mrb[0].mxu0
    %v1976 = vadd.f32 %v1817, %v1975
    %1977 = vdwg.mxu0
    %v1978 = vld [vmem:[#allocation3] sm:$0xee]
    %s1979 = scalar_lea.vmem %s7, 320
    %v1980 = vld [vmem:[%s1979] sm:$0xff]
    %v1981 = vld [vmem:[%s1979 + $0x8] sm:$0xff]
    %v1982 = vld [vmem:[%s1979 + $0x10] sm:$0xff]
    %v1983 = vld [vmem:[%s1979 + $0x18] sm:$0xff]
    %v1984 = vld [vmem:[%s1979 + $0x20] sm:$0xff]
    %v1985 = vld [vmem:[%s1979 + $0x28] sm:$0xff]
    %v1986 = vld [vmem:[%s1979 + $0x30] sm:$0xff]
    %v1987 = vld [vmem:[%s1979 + $0x38] sm:$0xff]
    %v1988 = vld [vmem:[%s1979 + $0x40] sm:$0xff]
    %v1989 = vld [vmem:[%s1979 + $0x48] sm:$0xff]
    %v1990 = vld [vmem:[%s1979 + $0x50] sm:$0xff]
    %v1991 = vld [vmem:[%s1979 + $0x58] sm:$0xff]
    %v1992 = vld [vmem:[%s1979 + $0x60] sm:$0xff]
    %v1993 = vld [vmem:[%s1979 + $0x68] sm:$0xff]
    %v1994 = vld [vmem:[%s1979 + $0x70] sm:$0xff]
    %v1995 = vld [vmem:[%s1979 + $0x78] sm:$0xff]
    %v1996 = vld [vmem:[%s1979 + $0x80] sm:$0xff]
    %v1997 = vld [vmem:[%s1979 + $0x88] sm:$0xff]
    %v1998 = vld [vmem:[%s1979 + $0x90] sm:$0xff]
    %v1999 = vld [vmem:[%s1979 + $0x98] sm:$0xff]
    %v2001 = vunpack.c.l.b16 %v1978
    %v2002 = vunpack.c.h.b16 %v1978
    %v2003 = vpack.c.b16 %v1603, %v2001
    %v2004 = vpack.c.b16 %v1604, %v2002
    %v2005 = vrot.slane %v2003, 1
    %v2006 = vrot.slane %v1613, 1
    %v2007 = vsel %vm785, %v2005, %v2006
    %v2008 = vrot.slane %v2004, 1
    %v2009 = vrot.slane %v1614, 1
    %v2010 = vsel %vm785, %v2008, %v2009
    %v2011 = vrot.slane %v1615, 1
    %v2012 = vsel %vm785, %v2006, %v2011
    %v2013 = vrot.slane %v1616, 1
    %v2014 = vsel %vm785, %v2009, %v2013
    %v2037 = vunpack.c.l.b16 %v1980
    %v2038 = vunpack.c.h.b16 %v1980
    %v2039 = vunpack.c.l.b16 %v1981
    %v2040 = vunpack.c.h.b16 %v1981
    %v2041 = vunpack.c.l.b16 %v1982
    %v2042 = vunpack.c.h.b16 %v1982
    %v2043 = vunpack.c.l.b16 %v1983
    %v2044 = vunpack.c.h.b16 %v1983
    %v2045 = vunpack.c.l.b16 %v1984
    %v2046 = vunpack.c.h.b16 %v1984
    %v2047 = vunpack.c.l.b16 %v1985
    %v2048 = vunpack.c.h.b16 %v1985
    %v2049 = vunpack.c.l.b16 %v1986
    %v2050 = vunpack.c.h.b16 %v1986
    %v2051 = vunpack.c.l.b16 %v1987
    %v2052 = vunpack.c.h.b16 %v1987
    %v2053 = vunpack.c.l.b16 %v1988
    %v2054 = vunpack.c.h.b16 %v1988
    %v2055 = vunpack.c.l.b16 %v1989
    %v2056 = vunpack.c.h.b16 %v1989
    %v2057 = vunpack.c.l.b16 %v1990
    %v2058 = vunpack.c.h.b16 %v1990
    %v2059 = vunpack.c.l.b16 %v1991
    %v2060 = vunpack.c.h.b16 %v1991
    %v2061 = vunpack.c.l.b16 %v1992
    %v2062 = vunpack.c.h.b16 %v1992
    %v2063 = vunpack.c.l.b16 %v1993
    %v2064 = vunpack.c.h.b16 %v1993
    %v2065 = vunpack.c.l.b16 %v1994
    %v2066 = vunpack.c.h.b16 %v1994
    %v2067 = vunpack.c.l.b16 %v1995
    %v2068 = vunpack.c.h.b16 %v1995
    %v2069 = vunpack.c.l.b16 %v1996
    %v2070 = vunpack.c.h.b16 %v1996
    %v2071 = vunpack.c.l.b16 %v1997
    %v2072 = vunpack.c.h.b16 %v1997
    %v2073 = vunpack.c.l.b16 %v1998
    %v2074 = vunpack.c.h.b16 %v1998
    %v2075 = vunpack.c.l.b16 %v1999
    %v2076 = vunpack.c.h.b16 %v1999
    %v2077 = vpack.c.b16 %v2039, %v2037
    %v2078 = vpack.c.b16 %v2040, %v2038
    %v2079 = vpack.c.b16 %v2043, %v2041
    %v2080 = vpack.c.b16 %v2044, %v2042
    %v2081 = vpack.c.b16 %v2047, %v2045
    %v2082 = vpack.c.b16 %v2048, %v2046
    %v2083 = vpack.c.b16 %v2051, %v2049
    %v2084 = vpack.c.b16 %v2052, %v2050
    %v2085 = vpack.c.b16 %v2055, %v2053
    %v2086 = vpack.c.b16 %v2056, %v2054
    %v2087 = vpack.c.b16 %v2059, %v2057
    %v2088 = vpack.c.b16 %v2060, %v2058
    %v2089 = vpack.c.b16 %v2063, %v2061
    %v2090 = vpack.c.b16 %v2064, %v2062
    %v2091 = vpack.c.b16 %v2067, %v2065
    %v2092 = vpack.c.b16 %v2068, %v2066
    %v2093 = vpack.c.b16 %v2071, %v2069
    %v2094 = vpack.c.b16 %v2072, %v2070
    %v2095 = vpack.c.b16 %v2075, %v2073
    %v2096 = vpack.c.b16 %v2076, %v2074
    %v2118 = vsel %vm1759, %v2010, 0
    %v2121 = vsel %vm1759, %v2014, 0
    %2123 = vmatprep.subr.bf16.mxu0 %v2078
    %2124 = vmatpush1.bf16.msra.mxu0 %v2077
    %2125 = vmatprep.subr.bf16.mxu0 %v2080
    %2126 = vmatpush1.bf16.msra.mxu0 %v2079
    %2127 = vmatprep.subr.bf16.mxu0 %v2082
    %2128 = vmatpush1.bf16.msra.mxu0 %v2081
    %2129 = vmatprep.subr.bf16.mxu0 %v2084
    %2130 = vmatpush1.bf16.msra.mxu0 %v2083
    %2131 = vmatprep.subr.bf16.mxu0 %v2086
    %2132 = vmatpush1.bf16.msra.mxu0 %v2085
    %2133 = vmatprep.subr.bf16.mxu0 %v2088
    %2134 = vmatpush1.bf16.msra.mxu0 %v2087
    %2135 = vmatprep.subr.bf16.mxu0 %v2090
    %2136 = vmatpush1.bf16.msra.mxu0 %v2089
    %2137 = vmatprep.subr.bf16.mxu0 %v2092
    %2138 = vmatpush1.bf16.msra.mxu0 %v2091
    %2139 = vmatprep.subr.bf16.mxu0 %v2094
    %2140 = vmatpush1.bf16.msra.mxu0 %v2093
    %2141 = vmatprep.subr.bf16.mxu0 %v2096
    %2142 = vmatpush1.bf16.msra.mxu0 %v2095
    %2143 = vmatprep.subr.bf16.mxu0 0
    %2144 = vmatpush1.bf16.msra.mxu0 0
    %2145 = vmatprep.subr.bf16.mxu0 0
    %2146 = vmatpush1.bf16.msra.mxu0 0
    %2147 = vmatprep.subr.bf16.mxu0 0
    %2148 = vmatpush1.bf16.msra.mxu0 0
    %2149 = vmatprep.subr.bf16.mxu0 0
    %2150 = vmatpush1.bf16.msra.mxu0 0
    %2151 = vmatprep.subr.bf16.mxu0 0
    %2152 = vmatpush1.bf16.msra.mxu0 0
    %2153 = vmatprep.subr.bf16.mxu0 0
    %2154 = vmatpush1.bf16.msra.mxu0 0
    %2155 = vmatprep.mubr.bf16.mxu0 %v2118
    %2156 = vmatmul.mubr.bf16.gmra.mrb[0].mxu0 %v2007
    %v2157 = vpop.f32.mrb[0].mxu0
    %v2158 = vadd.f32 0.0, %v2157
    %v2159 = vpop.f32.mrb[0].mxu0
    %v2160 = vadd.f32 0.0, %v2159
    %v2161 = vpop.f32.mrb[0].mxu0
    %v2162 = vadd.f32 0.0, %v2161
    %v2163 = vpop.f32.mrb[0].mxu0
    %v2164 = vadd.f32 0.0, %v2163
    %2165 = vmatprep.mubr.bf16.mxu0 %v2121
    %2166 = vmatmul.mubr.bf16.gmra.mrb[0].mxu0 %v2012
    %v2167 = vpop.f32.mrb[0].mxu0
    %v2168 = vadd.f32 0.0, %v2167
    %v2169 = vpop.f32.mrb[0].mxu0
    %v2170 = vadd.f32 0.0, %v2169
    %v2171 = vpop.f32.mrb[0].mxu0
    %v2172 = vadd.f32 0.0, %v2171
    %v2173 = vpop.f32.mrb[0].mxu0
    %v2174 = vadd.f32 0.0, %v2173
    %2175 = vdwg.mxu0
    %v2176 = vadd.f32 %v1960, %v2158
    %v2177 = vadd.f32 %v1962, %v2160
    %v2178 = vadd.f32 %v1964, %v2162
    %v2179 = vadd.f32 %v1966, %v2164
    %v2180 = vadd.f32 %v1970, %v2168
    %v2181 = vadd.f32 %v1972, %v2170
    %v2182 = vadd.f32 %v1974, %v2172
    %v2183 = vadd.f32 %v1976, %v2174
    %v2184 = vld [vmem:[%s8] sm:$0x3]
    %v2186 = vlaneseq
    %v2187 = vshrl.u32 %v2186, 7
    %v2188 = vsub.s32 0, %v2187
    %v2189 = vrot.slane %v2184, %v2188
    %v2190 = vlaneseq
    %v2191 = vshrl.u32 %v2190, 7
    %v2192 = vsub.s32 1, %v2191
    %v2193 = vrot.slane %v2184, %v2192
    %v2196 = vmul.f32 %v2176, %v2189
    %v2197 = vmul.f32 %v2177, %v2193
    %v2198 = vmul.f32 %v2178, %v2189
    %v2199 = vmul.f32 %v2179, %v2193
    %v2200 = vmul.f32 %v2180, %v2189
    %v2201 = vmul.f32 %v2181, %v2193
    %v2202 = vmul.f32 %v2182, %v2189
    %v2203 = vmul.f32 %v2183, %v2193
    %v2204 = vld [vmem:[%s9] sm:$0x3]
    %v2206 = vlaneseq
    %v2207 = vshrl.u32 %v2206, 7
    %v2208 = vsub.s32 0, %v2207
    %v2209 = vrot.slane %v2204, %v2208
    %v2210 = vlaneseq
    %v2211 = vshrl.u32 %v2210, 7
    %v2212 = vsub.s32 1, %v2211
    %v2213 = vrot.slane %v2204, %v2212
    %v2216 = vadd.f32 %v2196, %v2209
    %v2217 = vadd.f32 %v2197, %v2213
    %v2218 = vadd.f32 %v2198, %v2209
    %v2219 = vadd.f32 %v2199, %v2213
    %v2220 = vadd.f32 %v2200, %v2209
    %v2221 = vadd.f32 %v2201, %v2213
    %v2222 = vadd.f32 %v2202, %v2209
    %v2223 = vadd.f32 %v2203, %v2213
    %vm2224 = vcmp.gt.f32.partialorder %v2216, 0.0
    %vm2225 = vcmp.gt.f32.partialorder %v2217, 0.0
    %vm2226 = vcmp.gt.f32.partialorder %v2218, 0.0
    %vm2227 = vcmp.gt.f32.partialorder %v2219, 0.0
    %vm2228 = vcmp.gt.f32.partialorder %v2220, 0.0
    %vm2229 = vcmp.gt.f32.partialorder %v2221, 0.0
    %vm2230 = vcmp.gt.f32.partialorder %v2222, 0.0
    %vm2231 = vcmp.gt.f32.partialorder %v2223, 0.0
    %v2232 = vmin.f32 %v2216, 0.0
    %v2233 = vmin.f32 %v2217, 0.0
    %v2234 = vmin.f32 %v2218, 0.0
    %v2235 = vmin.f32 %v2219, 0.0
    %v2236 = vmin.f32 %v2220, 0.0
    %v2237 = vmin.f32 %v2221, 0.0
    %v2238 = vmin.f32 %v2222, 0.0
    %v2239 = vmin.f32 %v2223, 0.0
    %v2240 = vmul.f32 %v2232, 1.442695
    %v2241 = vpow.pop %v2240
    %v2242 = vmul.f32 %v2233, 1.442695
    %v2243 = vpow.pop %v2242
    %v2244 = vmul.f32 %v2234, 1.442695
    %v2245 = vpow.pop %v2244
    %v2246 = vmul.f32 %v2235, 1.442695
    %v2247 = vpow.pop %v2246
    %v2248 = vmul.f32 %v2236, 1.442695
    %v2249 = vpow.pop %v2248
    %v2250 = vmul.f32 %v2237, 1.442695
    %v2251 = vpow.pop %v2250
    %v2252 = vmul.f32 %v2238, 1.442695
    %v2253 = vpow.pop %v2252
    %v2254 = vmul.f32 %v2239, 1.442695
    %v2255 = vpow.pop %v2254
    %v2256 = vsub.f32 %v2241, 1.0
    %v2257 = vsub.f32 %v2243, 1.0
    %v2258 = vsub.f32 %v2245, 1.0
    %v2259 = vsub.f32 %v2247, 1.0
    %v2260 = vsub.f32 %v2249, 1.0
    %v2261 = vsub.f32 %v2251, 1.0
    %v2262 = vsub.f32 %v2253, 1.0
    %v2263 = vsub.f32 %v2255, 1.0
    %v2264 = vsel %vm2224, %v2216, %v2256
    %v2265 = vsel %vm2225, %v2217, %v2257
    %v2266 = vsel %vm2226, %v2218, %v2258
    %v2267 = vsel %vm2227, %v2219, %v2259
    %v2268 = vsel %vm2228, %v2220, %v2260
    %v2269 = vsel %vm2229, %v2221, %v2261
    %v2270 = vsel %vm2230, %v2222, %v2262
    %v2271 = vsel %vm2231, %v2223, %v2263
    %v2272 = vpack.c.bf16 %v2266, %v2264
    %v2273 = vpack.c.bf16 %v2267, %v2265
    %v2274 = vpack.c.bf16 %v2270, %v2268
    %v2275 = vpack.c.bf16 %v2271, %v2269
    %2276 = vst [vmem:[#allocation4] sm:$0xff] %v2272
    %2277 = vst [vmem:[#allocation4 + $0x8] sm:$0xff] %v2273
    %2278 = vst [vmem:[#allocation4 + $0x10] sm:$0xff] %v2274
    %2279 = vst [vmem:[#allocation4 + $0x18] sm:$0xff] %v2275
    %v2280 = vld [vmem:[#allocation4] sm:$0x1]
    %v2281 = vld [vmem:[#allocation4 + $0x8] sm:$0x1]
    %v2284 = vcombine.low %v2280, %v2281
    %v2286 = vunpack.c.l.s4 1966171168
    %v2287 = vunpack.c.0.s8 %v2286
    %v2288 = vlaneseq
    %v2289 = vshrl.u32 %v2288, 7
    %v2290 = vsub.s32 %v2287, %v2289
    %v2291 = vrot.slane %v2284, %v2290
    %v2293 = vunpack.c.l.s4 1966171168
    %v2294 = vunpack.c.0.s8 %v2293
    %v2295 = vlaneseq
    %v2296 = vshrl.u32 %v2295, 7
    %v2297 = vsub.s32 %v2294, %v2296
    %v2298 = vrot.slane %v2291, %v2297
    %vm2300 = vcmask 1040384
    %vm2301 = vsmask.f32 256
    %vm2302 = vmand %vm2300, %vm2301
    %vm2303 = vcmask 1041409
    %vm2304 = vsmask.f32 1280
    %vm2305 = vmand %vm2303, %vm2304
    %vm2306 = vmor %vm2305, %vm2302
    %v2307 = vld [vmem:[#allocation5] sm:$0x3]
    %v2308 = vsel %vm2306, %v2298, %v2307
    %2309 = vst [vmem:[#allocation5] sm:$0x3] %v2308
    %v2310 = vld [vmem:[#allocation4] sm:$0x1]
    %v2311 = vld [vmem:[#allocation4 + $0x8] sm:$0x1]
    %v2314 = vcombine.low %v2310, %v2311
    %v2316 = vunpack.c.l.s4 1966171168
    %v2317 = vunpack.c.0.s8 %v2316
    %v2318 = vlaneseq
    %v2319 = vshrl.u32 %v2318, 7
    %v2320 = vsub.s32 %v2317, %v2319
    %v2321 = vrot.slane %v2314, %v2320
    %v2323 = vunpack.c.l.s4 1966171168
    %v2324 = vunpack.c.0.s8 %v2323
    %v2325 = vlaneseq
    %v2326 = vshrl.u32 %v2325, 7
    %v2327 = vsub.s32 %v2324, %v2326
    %v2328 = vrot.slane %v2321, %v2327
    %v2330 = vshrl.u32 %v2328, 16
    %v2332 = vrot.slane %v2330, 7
    %v2333 = vrot.slane %v2332, 1
    %v2335 = vld [vmem:[#allocation5 + $0x2] sm:$0x3]
    %v2336 = vsel %vm2306, %v2333, %v2335
    %2337 = vst [vmem:[#allocation5 + $0x2] sm:$0x3] %v2336
    %v2338 = vld [vmem:[#allocation4] sm:$0x2]
    %v2339 = vld [vmem:[#allocation4 + $0x8] sm:$0x2]
    %v2342 = vcombine.low %v2338, %v2339
    %v2344 = vunpack.c.l.s4 1966171168
    %v2345 = vunpack.c.0.s8 %v2344
    %v2346 = vlaneseq
    %v2347 = vshrl.u32 %v2346, 7
    %v2348 = vsub.s32 %v2345, %v2347
    %v2349 = vrot.slane %v2342, %v2348
    %v2350 = vcombine.high %v2349, %v2349
    %v2352 = vunpack.c.l.s4 1966171168
    %v2353 = vunpack.c.0.s8 %v2352
    %v2354 = vlaneseq
    %v2355 = vshrl.u32 %v2354, 7
    %v2356 = vsub.s32 %v2353, %v2355
    %v2357 = vrot.slane %v2350, %v2356
    %v2359 = vld [vmem:[#allocation5 + $0x4] sm:$0x3]
    %v2360 = vsel %vm2306, %v2357, %v2359
    %2361 = vst [vmem:[#allocation5 + $0x4] sm:$0x3] %v2360
    %v2362 = vld [vmem:[#allocation4] sm:$0x2]
    %v2363 = vld [vmem:[#allocation4 + $0x8] sm:$0x2]
    %v2366 = vcombine.low %v2362, %v2363
    %v2368 = vunpack.c.l.s4 1966171168
    %v2369 = vunpack.c.0.s8 %v2368
    %v2370 = vlaneseq
    %v2371 = vshrl.u32 %v2370, 7
    %v2372 = vsub.s32 %v2369, %v2371
    %v2373 = vrot.slane %v2366, %v2372
    %v2374 = vcombine.high %v2373, %v2373
    %v2376 = vunpack.c.l.s4 1966171168
    %v2377 = vunpack.c.0.s8 %v2376
    %v2378 = vlaneseq
    %v2379 = vshrl.u32 %v2378, 7
    %v2380 = vsub.s32 %v2377, %v2379
    %v2381 = vrot.slane %v2374, %v2380
    %v2383 = vshrl.u32 %v2381, 16
    %v2385 = vrot.slane %v2383, 7
    %v2386 = vrot.slane %v2385, 1
    %v2388 = vld [vmem:[#allocation5 + $0x6] sm:$0x3]
    %v2389 = vsel %vm2306, %v2386, %v2388
    %2390 = vst [vmem:[#allocation5 + $0x6] sm:$0x3] %v2389
    %v2391 = vld [vmem:[#allocation4] sm:$0x4]
    %v2392 = vld [vmem:[#allocation4 + $0x8] sm:$0x4]
    %v2395 = vcombine.low %v2391, %v2392
    %v2397 = vunpack.c.l.s4 1966171168
    %v2398 = vunpack.c.0.s8 %v2397
    %v2399 = vlaneseq
    %v2400 = vshrl.u32 %v2399, 7
    %v2401 = vsub.s32 %v2398, %v2400
    %v2402 = vrot.slane %v2395, %v2401
    %v2404 = vunpack.c.l.s4 1966171168
    %v2405 = vunpack.c.0.s8 %v2404
    %v2406 = vlaneseq
    %v2407 = vshrl.u32 %v2406, 7
    %v2408 = vsub.s32 %v2405, %v2407
    %v2409 = vrot.slane %v2402, %v2408
    %v2410 = vcombine.high %v2409, %v2409
    %v2412 = vld [vmem:[#allocation5 + $0x8] sm:$0x3]
    %v2413 = vsel %vm2306, %v2410, %v2412
    %2414 = vst [vmem:[#allocation5 + $0x8] sm:$0x3] %v2413
    %v2415 = vld [vmem:[#allocation4] sm:$0x4]
    %v2416 = vld [vmem:[#allocation4 + $0x8] sm:$0x4]
    %v2419 = vcombine.low %v2415, %v2416
    %v2421 = vunpack.c.l.s4 1966171168
    %v2422 = vunpack.c.0.s8 %v2421
    %v2423 = vlaneseq
    %v2424 = vshrl.u32 %v2423, 7
    %v2425 = vsub.s32 %v2422, %v2424
    %v2426 = vrot.slane %v2419, %v2425
    %v2428 = vunpack.c.l.s4 1966171168
    %v2429 = vunpack.c.0.s8 %v2428
    %v2430 = vlaneseq
    %v2431 = vshrl.u32 %v2430, 7
    %v2432 = vsub.s32 %v2429, %v2431
    %v2433 = vrot.slane %v2426, %v2432
    %v2434 = vcombine.high %v2433, %v2433
    %v2436 = vshrl.u32 %v2434, 16
    %v2438 = vrot.slane %v2436, 7
    %v2439 = vrot.slane %v2438, 1
    %v2441 = vld [vmem:[#allocation5 + $0xa] sm:$0x3]
    %v2442 = vsel %vm2306, %v2439, %v2441
    %2443 = vst [vmem:[#allocation5 + $0xa] sm:$0x3] %v2442
    %v2444 = vld [vmem:[#allocation4] sm:$0x8]
    %v2445 = vld [vmem:[#allocation4 + $0x8] sm:$0x8]
    %v2448 = vcombine.low %v2444, %v2445
    %v2450 = vunpack.c.l.s4 1966171168
    %v2451 = vunpack.c.0.s8 %v2450
    %v2452 = vlaneseq
    %v2453 = vshrl.u32 %v2452, 7
    %v2454 = vsub.s32 %v2451, %v2453
    %v2455 = vrot.slane %v2448, %v2454
    %v2456 = vcombine.high %v2455, %v2455
    %v2458 = vunpack.c.l.s4 1966171168
    %v2459 = vunpack.c.0.s8 %v2458
    %v2460 = vlaneseq
    %v2461 = vshrl.u32 %v2460, 7
    %v2462 = vsub.s32 %v2459, %v2461
    %v2463 = vrot.slane %v2456, %v2462
    %v2464 = vcombine.high %v2463, %v2463
    %v2466 = vld [vmem:[#allocation5 + $0xc] sm:$0x3]
    %v2467 = vsel %vm2306, %v2464, %v2466
    %2468 = vst [vmem:[#allocation5 + $0xc] sm:$0x3] %v2467
    %v2469 = vld [vmem:[#allocation4] sm:$0x8]
    %v2470 = vld [vmem:[#allocation4 + $0x8] sm:$0x8]
    %v2473 = vcombine.low %v2469, %v2470
    %v2475 = vunpack.c.l.s4 1966171168
    %v2476 = vunpack.c.0.s8 %v2475
    %v2477 = vlaneseq
    %v2478 = vshrl.u32 %v2477, 7
    %v2479 = vsub.s32 %v2476, %v2478
    %v2480 = vrot.slane %v2473, %v2479
    %v2481 = vcombine.high %v2480, %v2480
    %v2483 = vunpack.c.l.s4 1966171168
    %v2484 = vunpack.c.0.s8 %v2483
    %v2485 = vlaneseq
    %v2486 = vshrl.u32 %v2485, 7
    %v2487 = vsub.s32 %v2484, %v2486
    %v2488 = vrot.slane %v2481, %v2487
    %v2489 = vcombine.high %v2488, %v2488
    %v2491 = vshrl.u32 %v2489, 16
    %v2493 = vrot.slane %v2491, 7
    %v2494 = vrot.slane %v2493, 1
    %v2496 = vld [vmem:[#allocation5 + $0xe] sm:$0x3]
    %v2497 = vsel %vm2306, %v2494, %v2496
    %2498 = vst [vmem:[#allocation5 + $0xe] sm:$0x3] %v2497
    %v2499 = vld [vmem:[#allocation4] sm:$0x10]
    %v2500 = vld [vmem:[#allocation4 + $0x8] sm:$0x10]
    %v2503 = vcombine.high %v2499, %v2500
    %v2505 = vunpack.c.l.s4 1966171168
    %v2506 = vunpack.c.0.s8 %v2505
    %v2507 = vlaneseq
    %v2508 = vshrl.u32 %v2507, 7
    %v2509 = vsub.s32 %v2506, %v2508
    %v2510 = vrot.slane %v2503, %v2509
    %v2512 = vunpack.c.l.s4 1966171168
    %v2513 = vunpack.c.0.s8 %v2512
    %v2514 = vlaneseq
    %v2515 = vshrl.u32 %v2514, 7
    %v2516 = vsub.s32 %v2513, %v2515
    %v2517 = vrot.slane %v2510, %v2516
    %v2519 = vld [vmem:[#allocation5 + $0x10] sm:$0x3]
    %v2520 = vsel %vm2306, %v2517, %v2519
    %2521 = vst [vmem:[#allocation5 + $0x10] sm:$0x3] %v2520
    %v2522 = vld [vmem:[#allocation4] sm:$0x10]
    %v2523 = vld [vmem:[#allocation4 + $0x8] sm:$0x10]
    %v2526 = vcombine.high %v2522, %v2523
    %v2528 = vunpack.c.l.s4 1966171168
    %v2529 = vunpack.c.0.s8 %v2528
    %v2530 = vlaneseq
    %v2531 = vshrl.u32 %v2530, 7
    %v2532 = vsub.s32 %v2529, %v2531
    %v2533 = vrot.slane %v2526, %v2532
    %v2535 = vunpack.c.l.s4 1966171168
    %v2536 = vunpack.c.0.s8 %v2535
    %v2537 = vlaneseq
    %v2538 = vshrl.u32 %v2537, 7
    %v2539 = vsub.s32 %v2536, %v2538
    %v2540 = vrot.slane %v2533, %v2539
    %v2542 = vshrl.u32 %v2540, 16
    %v2544 = vrot.slane %v2542, 7
    %v2545 = vrot.slane %v2544, 1
    %v2547 = vld [vmem:[#allocation5 + $0x12] sm:$0x3]
    %v2548 = vsel %vm2306, %v2545, %v2547
    %2549 = vst [vmem:[#allocation5 + $0x12] sm:$0x3] %v2548
    %v2550 = vld [vmem:[#allocation4 + $0x10] sm:$0x1]
    %v2551 = vld [vmem:[#allocation4 + $0x18] sm:$0x1]
    %v2554 = vcombine.low %v2550, %v2551
    %v2556 = vunpack.c.l.s4 1966171168
    %v2557 = vunpack.c.0.s8 %v2556
    %v2558 = vlaneseq
    %v2559 = vshrl.u32 %v2558, 7
    %v2560 = vsub.s32 %v2557, %v2559
    %v2561 = vrot.slane %v2554, %v2560
    %v2563 = vunpack.c.l.s4 1966171168
    %v2564 = vunpack.c.0.s8 %v2563
    %v2565 = vlaneseq
    %v2566 = vshrl.u32 %v2565, 7
    %v2567 = vsub.s32 %v2564, %v2566
    %v2568 = vrot.slane %v2561, %v2567
    %v2570 = vshll.u32 %v2568, 16
    %vm2573 = vsmask.f32 7938
    %vm2574 = vmand %vm2300, %vm2573
    %vm2575 = vsmask.f32 7942
    %vm2576 = vmand %vm2303, %vm2575
    %vm2577 = vmor %vm2576, %vm2574
    %v2578 = vld [vmem:[#allocation5] sm:$0x3]
    %v2579 = vsel %vm2577, %v2570, %v2578
    %2580 = vst [vmem:[#allocation5] sm:$0x3] %v2579
    %v2581 = vld [vmem:[#allocation4 + $0x10] sm:$0x1]
    %v2582 = vld [vmem:[#allocation4 + $0x18] sm:$0x1]
    %v2585 = vcombine.low %v2581, %v2582
    %v2587 = vunpack.c.l.s4 1966171168
    %v2588 = vunpack.c.0.s8 %v2587
    %v2589 = vlaneseq
    %v2590 = vshrl.u32 %v2589, 7
    %v2591 = vsub.s32 %v2588, %v2590
    %v2592 = vrot.slane %v2585, %v2591
    %v2594 = vunpack.c.l.s4 1966171168
    %v2595 = vunpack.c.0.s8 %v2594
    %v2596 = vlaneseq
    %v2597 = vshrl.u32 %v2596, 7
    %v2598 = vsub.s32 %v2595, %v2597
    %v2599 = vrot.slane %v2592, %v2598
    %v2601 = vld [vmem:[#allocation5 + $0x2] sm:$0x3]
    %v2602 = vsel %vm2577, %v2599, %v2601
    %2603 = vst [vmem:[#allocation5 + $0x2] sm:$0x3] %v2602
    %v2604 = vld [vmem:[#allocation4 + $0x10] sm:$0x2]
    %v2605 = vld [vmem:[#allocation4 + $0x18] sm:$0x2]
    %v2608 = vcombine.low %v2604, %v2605
    %v2610 = vunpack.c.l.s4 1966171168
    %v2611 = vunpack.c.0.s8 %v2610
    %v2612 = vlaneseq
    %v2613 = vshrl.u32 %v2612, 7
    %v2614 = vsub.s32 %v2611, %v2613
    %v2615 = vrot.slane %v2608, %v2614
    %v2616 = vcombine.high %v2615, %v2615
    %v2618 = vunpack.c.l.s4 1966171168
    %v2619 = vunpack.c.0.s8 %v2618
    %v2620 = vlaneseq
    %v2621 = vshrl.u32 %v2620, 7
    %v2622 = vsub.s32 %v2619, %v2621
    %v2623 = vrot.slane %v2616, %v2622
    %v2625 = vshll.u32 %v2623, 16
    %v2628 = vld [vmem:[#allocation5 + $0x4] sm:$0x3]
    %v2629 = vsel %vm2577, %v2625, %v2628
    %2630 = vst [vmem:[#allocation5 + $0x4] sm:$0x3] %v2629
    %v2631 = vld [vmem:[#allocation4 + $0x10] sm:$0x2]
    %v2632 = vld [vmem:[#allocation4 + $0x18] sm:$0x2]
    %v2635 = vcombine.low %v2631, %v2632
    %v2637 = vunpack.c.l.s4 1966171168
    %v2638 = vunpack.c.0.s8 %v2637
    %v2639 = vlaneseq
    %v2640 = vshrl.u32 %v2639, 7
    %v2641 = vsub.s32 %v2638, %v2640
    %v2642 = vrot.slane %v2635, %v2641
    %v2643 = vcombine.high %v2642, %v2642
    %v2645 = vunpack.c.l.s4 1966171168
    %v2646 = vunpack.c.0.s8 %v2645
    %v2647 = vlaneseq
    %v2648 = vshrl.u32 %v2647, 7
    %v2649 = vsub.s32 %v2646, %v2648
    %v2650 = vrot.slane %v2643, %v2649
    %v2652 = vld [vmem:[#allocation5 + $0x6] sm:$0x3]
    %v2653 = vsel %vm2577, %v2650, %v2652
    %2654 = vst [vmem:[#allocation5 + $0x6] sm:$0x3] %v2653
    %v2655 = vld [vmem:[#allocation4 + $0x10] sm:$0x4]
    %v2656 = vld [vmem:[#allocation4 + $0x18] sm:$0x4]
    %v2659 = vcombine.low %v2655, %v2656
    %v2661 = vunpack.c.l.s4 1966171168
    %v2662 = vunpack.c.0.s8 %v2661
    %v2663 = vlaneseq
    %v2664 = vshrl.u32 %v2663, 7
    %v2665 = vsub.s32 %v2662, %v2664
    %v2666 = vrot.slane %v2659, %v2665
    %v2668 = vunpack.c.l.s4 1966171168
    %v2669 = vunpack.c.0.s8 %v2668
    %v2670 = vlaneseq
    %v2671 = vshrl.u32 %v2670, 7
    %v2672 = vsub.s32 %v2669, %v2671
    %v2673 = vrot.slane %v2666, %v2672
    %v2674 = vcombine.high %v2673, %v2673
    %v2676 = vshll.u32 %v2674, 16
    %v2679 = vld [vmem:[#allocation5 + $0x8] sm:$0x3]
    %v2680 = vsel %vm2577, %v2676, %v2679
    %2681 = vst [vmem:[#allocation5 + $0x8] sm:$0x3] %v2680
    %v2682 = vld [vmem:[#allocation4 + $0x10] sm:$0x4]
    %v2683 = vld [vmem:[#allocation4 + $0x18] sm:$0x4]
    %v2686 = vcombine.low %v2682, %v2683
    %v2688 = vunpack.c.l.s4 1966171168
    %v2689 = vunpack.c.0.s8 %v2688
    %v2690 = vlaneseq
    %v2691 = vshrl.u32 %v2690, 7
    %v2692 = vsub.s32 %v2689, %v2691
    %v2693 = vrot.slane %v2686, %v2692
    %v2695 = vunpack.c.l.s4 1966171168
    %v2696 = vunpack.c.0.s8 %v2695
    %v2697 = vlaneseq
    %v2698 = vshrl.u32 %v2697, 7
    %v2699 = vsub.s32 %v2696, %v2698
    %v2700 = vrot.slane %v2693, %v2699
    %v2701 = vcombine.high %v2700, %v2700
    %v2703 = vld [vmem:[#allocation5 + $0xa] sm:$0x3]
    %v2704 = vsel %vm2577, %v2701, %v2703
    %2705 = vst [vmem:[#allocation5 + $0xa] sm:$0x3] %v2704
    %v2706 = vld [vmem:[#allocation4 + $0x10] sm:$0x8]
    %v2707 = vld [vmem:[#allocation4 + $0x18] sm:$0x8]
    %v2710 = vcombine.low %v2706, %v2707
    %v2712 = vunpack.c.l.s4 1966171168
    %v2713 = vunpack.c.0.s8 %v2712
    %v2714 = vlaneseq
    %v2715 = vshrl.u32 %v2714, 7
    %v2716 = vsub.s32 %v2713, %v2715
    %v2717 = vrot.slane %v2710, %v2716
    %v2718 = vcombine.high %v2717, %v2717
    %v2720 = vunpack.c.l.s4 1966171168
    %v2721 = vunpack.c.0.s8 %v2720
    %v2722 = vlaneseq
    %v2723 = vshrl.u32 %v2722, 7
    %v2724 = vsub.s32 %v2721, %v2723
    %v2725 = vrot.slane %v2718, %v2724
    %v2726 = vcombine.high %v2725, %v2725
    %v2728 = vshll.u32 %v2726, 16
    %v2731 = vld [vmem:[#allocation5 + $0xc] sm:$0x3]
    %v2732 = vsel %vm2577, %v2728, %v2731
    %2733 = vst [vmem:[#allocation5 + $0xc] sm:$0x3] %v2732
    %v2734 = vld [vmem:[#allocation4 + $0x10] sm:$0x8]
    %v2735 = vld [vmem:[#allocation4 + $0x18] sm:$0x8]
    %v2738 = vcombine.low %v2734, %v2735
    %v2740 = vunpack.c.l.s4 1966171168
    %v2741 = vunpack.c.0.s8 %v2740
    %v2742 = vlaneseq
    %v2743 = vshrl.u32 %v2742, 7
    %v2744 = vsub.s32 %v2741, %v2743
    %v2745 = vrot.slane %v2738, %v2744
    %v2746 = vcombine.high %v2745, %v2745
    %v2748 = vunpack.c.l.s4 1966171168
    %v2749 = vunpack.c.0.s8 %v2748
    %v2750 = vlaneseq
    %v2751 = vshrl.u32 %v2750, 7
    %v2752 = vsub.s32 %v2749, %v2751
    %v2753 = vrot.slane %v2746, %v2752
    %v2754 = vcombine.high %v2753, %v2753
    %v2756 = vld [vmem:[#allocation5 + $0xe] sm:$0x3]
    %v2757 = vsel %vm2577, %v2754, %v2756
    %2758 = vst [vmem:[#allocation5 + $0xe] sm:$0x3] %v2757
    %v2759 = vld [vmem:[#allocation4 + $0x10] sm:$0x10]
    %v2760 = vld [vmem:[#allocation4 + $0x18] sm:$0x10]
    %v2763 = vcombine.high %v2759, %v2760
    %v2765 = vunpack.c.l.s4 1966171168
    %v2766 = vunpack.c.0.s8 %v2765
    %v2767 = vlaneseq
    %v2768 = vshrl.u32 %v2767, 7
    %v2769 = vsub.s32 %v2766, %v2768
    %v2770 = vrot.slane %v2763, %v2769
    %v2772 = vunpack.c.l.s4 1966171168
    %v2773 = vunpack.c.0.s8 %v2772
    %v2774 = vlaneseq
    %v2775 = vshrl.u32 %v2774, 7
    %v2776 = vsub.s32 %v2773, %v2775
    %v2777 = vrot.slane %v2770, %v2776
    %v2779 = vshll.u32 %v2777, 16
    %v2782 = vld [vmem:[#allocation5 + $0x10] sm:$0x3]
    %v2783 = vsel %vm2577, %v2779, %v2782
    %2784 = vst [vmem:[#allocation5 + $0x10] sm:$0x3] %v2783
    %v2785 = vld [vmem:[#allocation4 + $0x10] sm:$0x10]
    %v2786 = vld [vmem:[#allocation4 + $0x18] sm:$0x10]
    %v2789 = vcombine.high %v2785, %v2786
    %v2791 = vunpack.c.l.s4 1966171168
    %v2792 = vunpack.c.0.s8 %v2791
    %v2793 = vlaneseq
    %v2794 = vshrl.u32 %v2793, 7
    %v2795 = vsub.s32 %v2792, %v2794
    %v2796 = vrot.slane %v2789, %v2795
    %v2798 = vunpack.c.l.s4 1966171168
    %v2799 = vunpack.c.0.s8 %v2798
    %v2800 = vlaneseq
    %v2801 = vshrl.u32 %v2800, 7
    %v2802 = vsub.s32 %v2799, %v2801
    %v2803 = vrot.slane %v2796, %v2802
    %v2805 = vld [vmem:[#allocation5 + $0x12] sm:$0x3]
    %v2806 = vsel %vm2577, %v2803, %v2805
    %2807 = vst [vmem:[#allocation5 + $0x12] sm:$0x3] %v2806
    %s2808 = smul.u32 4, 4
    %s2809 = smul.u32 %s2808, 20
    %s2810 = sshll.u32 %s2809, 4
    %2811 = dma.done [#allocation7], %s2810
    %v2812 = vld [vmem:[#allocation5] sm:$0xff]
    %v2813 = vld [vmem:[#allocation5 + $0x8] sm:$0xff]
    %v2814 = vld [vmem:[#allocation5 + $0x10] sm:$0xf]
    %v2815 = vld [vmem:[#allocation6] sm:$0xff]
    %v2816 = vld [vmem:[#allocation6 + $0x8] sm:$0xff]
    %v2817 = vld [vmem:[#allocation6 + $0x10] sm:$0xff]
    %v2818 = vld [vmem:[#allocation6 + $0x18] sm:$0xff]
    %v2819 = vld [vmem:[#allocation6 + $0x20] sm:$0xff]
    %v2820 = vld [vmem:[#allocation6 + $0x28] sm:$0xff]
    %v2821 = vld [vmem:[#allocation6 + $0x30] sm:$0xff]
    %v2822 = vld [vmem:[#allocation6 + $0x38] sm:$0xff]
    %v2823 = vld [vmem:[#allocation6 + $0x40] sm:$0xff]
    %v2824 = vld [vmem:[#allocation6 + $0x48] sm:$0xff]
    %v2825 = vld [vmem:[#allocation6 + $0x50] sm:$0xff]
    %v2826 = vld [vmem:[#allocation6 + $0x58] sm:$0xff]
    %v2827 = vld [vmem:[#allocation6 + $0x60] sm:$0xff]
    %v2828 = vld [vmem:[#allocation6 + $0x68] sm:$0xff]
    %v2829 = vld [vmem:[#allocation6 + $0x70] sm:$0xff]
    %v2830 = vld [vmem:[#allocation6 + $0x78] sm:$0xff]
    %v2831 = vld [vmem:[#allocation6 + $0x80] sm:$0xff]
    %v2832 = vld [vmem:[#allocation6 + $0x88] sm:$0xff]
    %v2833 = vld [vmem:[#allocation6 + $0x90] sm:$0xff]
    %v2834 = vld [vmem:[#allocation6 + $0x98] sm:$0xff]
    %v2835 = vld [vmem:[#allocation6 + $0xa0] sm:$0xff]
    %v2836 = vld [vmem:[#allocation6 + $0xa8] sm:$0xff]
    %v2837 = vld [vmem:[#allocation6 + $0xb0] sm:$0xff]
    %v2838 = vld [vmem:[#allocation6 + $0xb8] sm:$0xff]
    %v2839 = vld [vmem:[#allocation6 + $0xc0] sm:$0xff]
    %v2840 = vld [vmem:[#allocation6 + $0xc8] sm:$0xff]
    %v2841 = vld [vmem:[#allocation6 + $0xd0] sm:$0xff]
    %v2842 = vld [vmem:[#allocation6 + $0xd8] sm:$0xff]
    %v2843 = vld [vmem:[#allocation6 + $0xe0] sm:$0xff]
    %v2844 = vld [vmem:[#allocation6 + $0xe8] sm:$0xff]
    %v2845 = vld [vmem:[#allocation6 + $0xf0] sm:$0xff]
    %v2846 = vld [vmem:[#allocation6 + $0xf8] sm:$0xff]
    %v2847 = vld [vmem:[#allocation6 + $0x100] sm:$0xff]
    %v2848 = vld [vmem:[#allocation6 + $0x108] sm:$0xff]
    %v2849 = vld [vmem:[#allocation6 + $0x110] sm:$0xff]
    %v2850 = vld [vmem:[#allocation6 + $0x118] sm:$0xff]
    %v2851 = vld [vmem:[#allocation6 + $0x120] sm:$0xff]
    %v2852 = vld [vmem:[#allocation6 + $0x128] sm:$0xff]
    %v2853 = vld [vmem:[#allocation6 + $0x130] sm:$0xff]
    %v2854 = vld [vmem:[#allocation6 + $0x138] sm:$0xff]
    %v2858 = vcombine.high %v2812, %v2812
    %v2860 = vunpack.c.l.s4 1966171168
    %v2861 = vunpack.c.0.s8 %v2860
    %v2862 = vlaneseq
    %v2863 = vshrl.u32 %v2862, 7
    %v2864 = vsub.s32 %v2861, %v2863
    %v2865 = vrot.slane %v2812, %v2864
    %v2867 = vunpack.c.l.s4 1966171168
    %v2868 = vunpack.c.0.s8 %v2867
    %v2869 = vlaneseq
    %v2870 = vshrl.u32 %v2869, 7
    %v2871 = vsub.s32 %v2868, %v2870
    %v2872 = vrot.slane %v2858, %v2871
    %v2873 = vcombine.high %v2865, %v2865
    %v2874 = vcombine.high %v2872, %v2872
    %v2876 = vunpack.c.l.s4 1966171168
    %v2877 = vunpack.c.0.s8 %v2876
    %v2878 = vlaneseq
    %v2879 = vshrl.u32 %v2878, 7
    %v2880 = vsub.s32 %v2877, %v2879
    %v2881 = vrot.slane %v2865, %v2880
    %v2883 = vunpack.c.l.s4 1966171168
    %v2884 = vunpack.c.0.s8 %v2883
    %v2885 = vlaneseq
    %v2886 = vshrl.u32 %v2885, 7
    %v2887 = vsub.s32 %v2884, %v2886
    %v2888 = vrot.slane %v2872, %v2887
    %v2890 = vunpack.c.l.s4 1966171168
    %v2891 = vunpack.c.0.s8 %v2890
    %v2892 = vlaneseq
    %v2893 = vshrl.u32 %v2892, 7
    %v2894 = vsub.s32 %v2891, %v2893
    %v2895 = vrot.slane %v2873, %v2894
    %v2897 = vunpack.c.l.s4 1966171168
    %v2898 = vunpack.c.0.s8 %v2897
    %v2899 = vlaneseq
    %v2900 = vshrl.u32 %v2899, 7
    %v2901 = vsub.s32 %v2898, %v2900
    %v2902 = vrot.slane %v2874, %v2901
    %v2903 = vcombine.high %v2881, %v2881
    %v2904 = vcombine.high %v2888, %v2888
    %v2905 = vcombine.high %v2895, %v2895
    %v2906 = vcombine.high %v2902, %v2902
    %v2907 = vcombine.high %v2813, %v2813
    %v2909 = vunpack.c.l.s4 1966171168
    %v2910 = vunpack.c.0.s8 %v2909
    %v2911 = vlaneseq
    %v2912 = vshrl.u32 %v2911, 7
    %v2913 = vsub.s32 %v2910, %v2912
    %v2914 = vrot.slane %v2813, %v2913
    %v2916 = vunpack.c.l.s4 1966171168
    %v2917 = vunpack.c.0.s8 %v2916
    %v2918 = vlaneseq
    %v2919 = vshrl.u32 %v2918, 7
    %v2920 = vsub.s32 %v2917, %v2919
    %v2921 = vrot.slane %v2907, %v2920
    %v2922 = vcombine.high %v2914, %v2914
    %v2923 = vcombine.high %v2921, %v2921
    %v2925 = vunpack.c.l.s4 1966171168
    %v2926 = vunpack.c.0.s8 %v2925
    %v2927 = vlaneseq
    %v2928 = vshrl.u32 %v2927, 7
    %v2929 = vsub.s32 %v2926, %v2928
    %v2930 = vrot.slane %v2914, %v2929
    %v2932 = vunpack.c.l.s4 1966171168
    %v2933 = vunpack.c.0.s8 %v2932
    %v2934 = vlaneseq
    %v2935 = vshrl.u32 %v2934, 7
    %v2936 = vsub.s32 %v2933, %v2935
    %v2937 = vrot.slane %v2921, %v2936
    %v2939 = vunpack.c.l.s4 1966171168
    %v2940 = vunpack.c.0.s8 %v2939
    %v2941 = vlaneseq
    %v2942 = vshrl.u32 %v2941, 7
    %v2943 = vsub.s32 %v2940, %v2942
    %v2944 = vrot.slane %v2922, %v2943
    %v2946 = vunpack.c.l.s4 1966171168
    %v2947 = vunpack.c.0.s8 %v2946
    %v2948 = vlaneseq
    %v2949 = vshrl.u32 %v2948, 7
    %v2950 = vsub.s32 %v2947, %v2949
    %v2951 = vrot.slane %v2923, %v2950
    %v2952 = vcombine.high %v2930, %v2930
    %v2953 = vcombine.high %v2937, %v2937
    %v2954 = vcombine.high %v2944, %v2944
    %v2955 = vcombine.high %v2951, %v2951
    %v2957 = vunpack.c.l.s4 1966171168
    %v2958 = vunpack.c.0.s8 %v2957
    %v2959 = vlaneseq
    %v2960 = vshrl.u32 %v2959, 7
    %v2961 = vsub.s32 %v2958, %v2960
    %v2962 = vrot.slane %v2814, %v2961
    %v2963 = vcombine.high %v2962, %v2962
    %v2965 = vunpack.c.l.s4 1966171168
    %v2966 = vunpack.c.0.s8 %v2965
    %v2967 = vlaneseq
    %v2968 = vshrl.u32 %v2967, 7
    %v2969 = vsub.s32 %v2966, %v2968
    %v2970 = vrot.slane %v2962, %v2969
    %v2972 = vunpack.c.l.s4 1966171168
    %v2973 = vunpack.c.0.s8 %v2972
    %v2974 = vlaneseq
    %v2975 = vshrl.u32 %v2974, 7
    %v2976 = vsub.s32 %v2973, %v2975
    %v2977 = vrot.slane %v2963, %v2976
    %v2978 = vcombine.high %v2970, %v2970
    %v2979 = vcombine.high %v2977, %v2977
    %3000 = vmatprep.subr.bf16.mxu0 %v2816
    %3001 = vmatpush1.bf16.xpose.msra.mxu0 %v2815
    %3002 = vmatprep.subr.bf16.mxu0 %v2836
    %3003 = vmatpush1.bf16.xpose.msra.mxu0 %v2835
    %3004 = vmatprep.subr.bf16.mxu0 0
    %3005 = vmatpush1.bf16.xpose.msra.mxu0 0
    %3006 = vmatprep.subr.bf16.mxu0 0
    %3007 = vmatpush1.bf16.xpose.msra.mxu0 0
    %3008 = vmatprep.subr.bf16.mxu0 0
    %3009 = vmatpush1.bf16.xpose.msra.mxu0 0
    %3010 = vmatprep.subr.bf16.mxu0 0
    %3011 = vmatpush1.bf16.xpose.msra.mxu0 0
    %3012 = vmatprep.subr.bf16.mxu0 0
    %3013 = vmatpush1.bf16.xpose.msra.mxu0 0
    %3014 = vmatprep.subr.bf16.mxu0 0
    %3015 = vmatpush1.bf16.xpose.msra.mxu0 0
    %3016 = vmatprep.subr.bf16.mxu0 0
    %3017 = vmatpush1.bf16.xpose.msra.mxu0 0
    %3018 = vmatprep.subr.bf16.mxu0 0
    %3019 = vmatpush1.bf16.xpose.msra.mxu0 0
    %3020 = vmatprep.subr.bf16.mxu0 0
    %3021 = vmatpush1.bf16.xpose.msra.mxu0 0
    %3022 = vmatprep.subr.bf16.mxu0 0
    %3023 = vmatpush1.bf16.xpose.msra.mxu0 0
    %3024 = vmatprep.subr.bf16.mxu0 0
    %3025 = vmatpush1.bf16.xpose.msra.mxu0 0
    %3026 = vmatprep.subr.bf16.mxu0 0
    %3027 = vmatpush1.bf16.xpose.msra.mxu0 0
    %3028 = vmatprep.subr.bf16.mxu0 0
    %3029 = vmatpush1.bf16.xpose.msra.mxu0 0
    %3030 = vmatprep.subr.bf16.mxu0 0
    %3031 = vmatpush1.bf16.xpose.msra.mxu0 0
    %3032 = vmatprep.mubr.bf16.mxu0 %v2895
    %3033 = vmatmul.mubr.bf16.gmra.mrb[0].mxu0 %v2881
    %v3034 = vpop.f32.mrb[0].mxu0
    %v3035 = vadd.f32 0.0, %v3034
    %v3036 = vpop.f32.mrb[0].mxu0
    %v3037 = vpop.f32.mrb[0].mxu0
    %v3038 = vpop.f32.mrb[0].mxu0
    %3039 = vdwg.mxu0
    %3040 = vmatprep.subr.bf16.mxu0 %v2818
    %3041 = vmatpush1.bf16.xpose.msra.mxu0 %v2817
    %3042 = vmatprep.subr.bf16.mxu0 %v2838
    %3043 = vmatpush1.bf16.xpose.msra.mxu0 %v2837
    %3044 = vmatprep.subr.bf16.mxu0 0
    %3045 = vmatpush1.bf16.xpose.msra.mxu0 0
    %3046 = vmatprep.subr.bf16.mxu0 0
    %3047 = vmatpush1.bf16.xpose.msra.mxu0 0
    %3048 = vmatprep.subr.bf16.mxu0 0
    %3049 = vmatpush1.bf16.xpose.msra.mxu0 0
    %3050 = vmatprep.subr.bf16.mxu0 0
    %3051 = vmatpush1.bf16.xpose.msra.mxu0 0
    %3052 = vmatprep.subr.bf16.mxu0 0
    %3053 = vmatpush1.bf16.xpose.msra.mxu0 0
    %3054 = vmatprep.subr.bf16.mxu0 0
    %3055 = vmatpush1.bf16.xpose.msra.mxu0 0
    %3056 = vmatprep.subr.bf16.mxu0 0
    %3057 = vmatpush1.bf16.xpose.msra.mxu0 0
    %3058 = vmatprep.subr.bf16.mxu0 0
    %3059 = vmatpush1.bf16.xpose.msra.mxu0 0
    %3060 = vmatprep.subr.bf16.mxu0 0
    %3061 = vmatpush1.bf16.xpose.msra.mxu0 0
    %3062 = vmatprep.subr.bf16.mxu0 0
    %3063 = vmatpush1.bf16.xpose.msra.mxu0 0
    %3064 = vmatprep.subr.bf16.mxu0 0
    %3065 = vmatpush1.bf16.xpose.msra.mxu0 0
    %3066 = vmatprep.subr.bf16.mxu0 0
    %3067 = vmatpush1.bf16.xpose.msra.mxu0 0
    %3068 = vmatprep.subr.bf16.mxu0 0
    %3069 = vmatpush1.bf16.xpose.msra.mxu0 0
    %3070 = vmatprep.subr.bf16.mxu0 0
    %3071 = vmatpush1.bf16.xpose.msra.mxu0 0
    %3072 = vmatprep.mubr.bf16.mxu0 %v2905
    %3073 = vmatmul.mubr.bf16.gmra.mrb[0].mxu0 %v2903
    %v3074 = vpop.f32.mrb[0].mxu0
    %v3075 = vadd.f32 %v3035, %v3074
    %v3076 = vpop.f32.mrb[0].mxu0
    %v3077 = vpop.f32.mrb[0].mxu0
    %v3078 = vpop.f32.mrb[0].mxu0
    %3079 = vdwg.mxu0
    %3080 = vmatprep.subr.bf16.mxu0 %v2820
    %3081 = vmatpush1.bf16.xpose.msra.mxu0 %v2819
    %3082 = vmatprep.subr.bf16.mxu0 %v2840
    %3083 = vmatpush1.bf16.xpose.msra.mxu0 %v2839
    %3084 = vmatprep.subr.bf16.mxu0 0
    %3085 = vmatpush1.bf16.xpose.msra.mxu0 0
    %3086 = vmatprep.subr.bf16.mxu0 0
    %3087 = vmatpush1.bf16.xpose.msra.mxu0 0
    %3088 = vmatprep.subr.bf16.mxu0 0
    %3089 = vmatpush1.bf16.xpose.msra.mxu0 0
    %3090 = vmatprep.subr.bf16.mxu0 0
    %3091 = vmatpush1.bf16.xpose.msra.mxu0 0
    %3092 = vmatprep.subr.bf16.mxu0 0
    %3093 = vmatpush1.bf16.xpose.msra.mxu0 0
    %3094 = vmatprep.subr.bf16.mxu0 0
    %3095 = vmatpush1.bf16.xpose.msra.mxu0 0
    %3096 = vmatprep.subr.bf16.mxu0 0
    %3097 = vmatpush1.bf16.xpose.msra.mxu0 0
    %3098 = vmatprep.subr.bf16.mxu0 0
    %3099 = vmatpush1.bf16.xpose.msra.mxu0 0
    %3100 = vmatprep.subr.bf16.mxu0 0
    %3101 = vmatpush1.bf16.xpose.msra.mxu0 0
    %3102 = vmatprep.subr.bf16.mxu0 0
    %3103 = vmatpush1.bf16.xpose.msra.mxu0 0
    %3104 = vmatprep.subr.bf16.mxu0 0
    %3105 = vmatpush1.bf16.xpose.msra.mxu0 0
    %3106 = vmatprep.subr.bf16.mxu0 0
    %3107 = vmatpush1.bf16.xpose.msra.mxu0 0
    %3108 = vmatprep.subr.bf16.mxu0 0
    %3109 = vmatpush1.bf16.xpose.msra.mxu0 0
    %3110 = vmatprep.subr.bf16.mxu0 0
    %3111 = vmatpush1.bf16.xpose.msra.mxu0 0
    %3112 = vmatprep.mubr.bf16.mxu0 %v2902
    %3113 = vmatmul.mubr.bf16.gmra.mrb[0].mxu0 %v2888
    %v3114 = vpop.f32.mrb[0].mxu0
    %v3115 = vadd.f32 %v3075, %v3114
    %v3116 = vpop.f32.mrb[0].mxu0
    %v3117 = vpop.f32.mrb[0].mxu0
    %v3118 = vpop.f32.mrb[0].mxu0
    %3119 = vdwg.mxu0
    %3120 = vmatprep.subr.bf16.mxu0 %v2822
    %3121 = vmatpush1.bf16.xpose.msra.mxu0 %v2821
    %3122 = vmatprep.subr.bf16.mxu0 %v2842
    %3123 = vmatpush1.bf16.xpose.msra.mxu0 %v2841
    %3124 = vmatprep.subr.bf16.mxu0 0
    %3125 = vmatpush1.bf16.xpose.msra.mxu0 0
    %3126 = vmatprep.subr.bf16.mxu0 0
    %3127 = vmatpush1.bf16.xpose.msra.mxu0 0
    %3128 = vmatprep.subr.bf16.mxu0 0
    %3129 = vmatpush1.bf16.xpose.msra.mxu0 0
    %3130 = vmatprep.subr.bf16.mxu0 0
    %3131 = vmatpush1.bf16.xpose.msra.mxu0 0
    %3132 = vmatprep.subr.bf16.mxu0 0
    %3133 = vmatpush1.bf16.xpose.msra.mxu0 0
    %3134 = vmatprep.subr.bf16.mxu0 0
    %3135 = vmatpush1.bf16.xpose.msra.mxu0 0
    %3136 = vmatprep.subr.bf16.mxu0 0
    %3137 = vmatpush1.bf16.xpose.msra.mxu0 0
    %3138 = vmatprep.subr.bf16.mxu0 0
    %3139 = vmatpush1.bf16.xpose.msra.mxu0 0
    %3140 = vmatprep.subr.bf16.mxu0 0
    %3141 = vmatpush1.bf16.xpose.msra.mxu0 0
    %3142 = vmatprep.subr.bf16.mxu0 0
    %3143 = vmatpush1.bf16.xpose.msra.mxu0 0
    %3144 = vmatprep.subr.bf16.mxu0 0
    %3145 = vmatpush1.bf16.xpose.msra.mxu0 0
    %3146 = vmatprep.subr.bf16.mxu0 0
    %3147 = vmatpush1.bf16.xpose.msra.mxu0 0
    %3148 = vmatprep.subr.bf16.mxu0 0
    %3149 = vmatpush1.bf16.xpose.msra.mxu0 0
    %3150 = vmatprep.subr.bf16.mxu0 0
    %3151 = vmatpush1.bf16.xpose.msra.mxu0 0
    %3152 = vmatprep.mubr.bf16.mxu0 %v2906
    %3153 = vmatmul.mubr.bf16.gmra.mrb[0].mxu0 %v2904
    %v3154 = vpop.f32.mrb[0].mxu0
    %v3155 = vadd.f32 %v3115, %v3154
    %v3156 = vpop.f32.mrb[0].mxu0
    %v3157 = vpop.f32.mrb[0].mxu0
    %v3158 = vpop.f32.mrb[0].mxu0
    %3159 = vdwg.mxu0
    %3160 = vmatprep.subr.bf16.mxu0 %v2824
    %3161 = vmatpush1.bf16.xpose.msra.mxu0 %v2823
    %3162 = vmatprep.subr.bf16.mxu0 %v2844
    %3163 = vmatpush1.bf16.xpose.msra.mxu0 %v2843
    %3164 = vmatprep.subr.bf16.mxu0 0
    %3165 = vmatpush1.bf16.xpose.msra.mxu0 0
    %3166 = vmatprep.subr.bf16.mxu0 0
    %3167 = vmatpush1.bf16.xpose.msra.mxu0 0
    %3168 = vmatprep.subr.bf16.mxu0 0
    %3169 = vmatpush1.bf16.xpose.msra.mxu0 0
    %3170 = vmatprep.subr.bf16.mxu0 0
    %3171 = vmatpush1.bf16.xpose.msra.mxu0 0
    %3172 = vmatprep.subr.bf16.mxu0 0
    %3173 = vmatpush1.bf16.xpose.msra.mxu0 0
    %3174 = vmatprep.subr.bf16.mxu0 0
    %3175 = vmatpush1.bf16.xpose.msra.mxu0 0
    %3176 = vmatprep.subr.bf16.mxu0 0
    %3177 = vmatpush1.bf16.xpose.msra.mxu0 0
    %3178 = vmatprep.subr.bf16.mxu0 0
    %3179 = vmatpush1.bf16.xpose.msra.mxu0 0
    %3180 = vmatprep.subr.bf16.mxu0 0
    %3181 = vmatpush1.bf16.xpose.msra.mxu0 0
    %3182 = vmatprep.subr.bf16.mxu0 0
    %3183 = vmatpush1.bf16.xpose.msra.mxu0 0
    %3184 = vmatprep.subr.bf16.mxu0 0
    %3185 = vmatpush1.bf16.xpose.msra.mxu0 0
    %3186 = vmatprep.subr.bf16.mxu0 0
    %3187 = vmatpush1.bf16.xpose.msra.mxu0 0
    %3188 = vmatprep.subr.bf16.mxu0 0
    %3189 = vmatpush1.bf16.xpose.msra.mxu0 0
    %3190 = vmatprep.subr.bf16.mxu0 0
    %3191 = vmatpush1.bf16.xpose.msra.mxu0 0
    %3192 = vmatprep.mubr.bf16.mxu0 %v2944
    %3193 = vmatmul.mubr.bf16.gmra.mrb[0].mxu0 %v2930
    %v3194 = vpop.f32.mrb[0].mxu0
    %v3195 = vadd.f32 %v3155, %v3194
    %v3196 = vpop.f32.mrb[0].mxu0
    %v3197 = vpop.f32.mrb[0].mxu0
    %v3198 = vpop.f32.mrb[0].mxu0
    %3199 = vdwg.mxu0
    %3200 = vmatprep.subr.bf16.mxu0 %v2826
    %3201 = vmatpush1.bf16.xpose.msra.mxu0 %v2825
    %3202 = vmatprep.subr.bf16.mxu0 %v2846
    %3203 = vmatpush1.bf16.xpose.msra.mxu0 %v2845
    %3204 = vmatprep.subr.bf16.mxu0 0
    %3205 = vmatpush1.bf16.xpose.msra.mxu0 0
    %3206 = vmatprep.subr.bf16.mxu0 0
    %3207 = vmatpush1.bf16.xpose.msra.mxu0 0
    %3208 = vmatprep.subr.bf16.mxu0 0
    %3209 = vmatpush1.bf16.xpose.msra.mxu0 0
    %3210 = vmatprep.subr.bf16.mxu0 0
    %3211 = vmatpush1.bf16.xpose.msra.mxu0 0
    %3212 = vmatprep.subr.bf16.mxu0 0
    %3213 = vmatpush1.bf16.xpose.msra.mxu0 0
    %3214 = vmatprep.subr.bf16.mxu0 0
    %3215 = vmatpush1.bf16.xpose.msra.mxu0 0
    %3216 = vmatprep.subr.bf16.mxu0 0
    %3217 = vmatpush1.bf16.xpose.msra.mxu0 0
    %3218 = vmatprep.subr.bf16.mxu0 0
    %3219 = vmatpush1.bf16.xpose.msra.mxu0 0
    %3220 = vmatprep.subr.bf16.mxu0 0
    %3221 = vmatpush1.bf16.xpose.msra.mxu0 0
    %3222 = vmatprep.subr.bf16.mxu0 0
    %3223 = vmatpush1.bf16.xpose.msra.mxu0 0
    %3224 = vmatprep.subr.bf16.mxu0 0
    %3225 = vmatpush1.bf16.xpose.msra.mxu0 0
    %3226 = vmatprep.subr.bf16.mxu0 0
    %3227 = vmatpush1.bf16.xpose.msra.mxu0 0
    %3228 = vmatprep.subr.bf16.mxu0 0
    %3229 = vmatpush1.bf16.xpose.msra.mxu0 0
    %3230 = vmatprep.subr.bf16.mxu0 0
    %3231 = vmatpush1.bf16.xpose.msra.mxu0 0
    %3232 = vmatprep.mubr.bf16.mxu0 %v2954
    %3233 = vmatmul.mubr.bf16.gmra.mrb[0].mxu0 %v2952
    %v3234 = vpop.f32.mrb[0].mxu0
    %v3235 = vadd.f32 %v3195, %v3234
    %v3236 = vpop.f32.mrb[0].mxu0
    %v3237 = vpop.f32.mrb[0].mxu0
    %v3238 = vpop.f32.mrb[0].mxu0
    %3239 = vdwg.mxu0
    %3240 = vmatprep.subr.bf16.mxu0 %v2828
    %3241 = vmatpush1.bf16.xpose.msra.mxu0 %v2827
    %3242 = vmatprep.subr.bf16.mxu0 %v2848
    %3243 = vmatpush1.bf16.xpose.msra.mxu0 %v2847
    %3244 = vmatprep.subr.bf16.mxu0 0
    %3245 = vmatpush1.bf16.xpose.msra.mxu0 0
    %3246 = vmatprep.subr.bf16.mxu0 0
    %3247 = vmatpush1.bf16.xpose.msra.mxu0 0
    %3248 = vmatprep.subr.bf16.mxu0 0
    %3249 = vmatpush1.bf16.xpose.msra.mxu0 0
    %3250 = vmatprep.subr.bf16.mxu0 0
    %3251 = vmatpush1.bf16.xpose.msra.mxu0 0
    %3252 = vmatprep.subr.bf16.mxu0 0
    %3253 = vmatpush1.bf16.xpose.msra.mxu0 0
    %3254 = vmatprep.subr.bf16.mxu0 0
    %3255 = vmatpush1.bf16.xpose.msra.mxu0 0
    %3256 = vmatprep.subr.bf16.mxu0 0
    %3257 = vmatpush1.bf16.xpose.msra.mxu0 0
    %3258 = vmatprep.subr.bf16.mxu0 0
    %3259 = vmatpush1.bf16.xpose.msra.mxu0 0
    %3260 = vmatprep.subr.bf16.mxu0 0
    %3261 = vmatpush1.bf16.xpose.msra.mxu0 0
    %3262 = vmatprep.subr.bf16.mxu0 0
    %3263 = vmatpush1.bf16.xpose.msra.mxu0 0
    %3264 = vmatprep.subr.bf16.mxu0 0
    %3265 = vmatpush1.bf16.xpose.msra.mxu0 0
    %3266 = vmatprep.subr.bf16.mxu0 0
    %3267 = vmatpush1.bf16.xpose.msra.mxu0 0
    %3268 = vmatprep.subr.bf16.mxu0 0
    %3269 = vmatpush1.bf16.xpose.msra.mxu0 0
    %3270 = vmatprep.subr.bf16.mxu0 0
    %3271 = vmatpush1.bf16.xpose.msra.mxu0 0
    %3272 = vmatprep.mubr.bf16.mxu0 %v2951
    %3273 = vmatmul.mubr.bf16.gmra.mrb[0].mxu0 %v2937
    %v3274 = vpop.f32.mrb[0].mxu0
    %v3275 = vadd.f32 %v3235, %v3274
    %v3276 = vpop.f32.mrb[0].mxu0
    %v3277 = vpop.f32.mrb[0].mxu0
    %v3278 = vpop.f32.mrb[0].mxu0
    %3279 = vdwg.mxu0
    %3280 = vmatprep.subr.bf16.mxu0 %v2830
    %3281 = vmatpush1.bf16.xpose.msra.mxu0 %v2829
    %3282 = vmatprep.subr.bf16.mxu0 %v2850
    %3283 = vmatpush1.bf16.xpose.msra.mxu0 %v2849
    %3284 = vmatprep.subr.bf16.mxu0 0
    %3285 = vmatpush1.bf16.xpose.msra.mxu0 0
    %3286 = vmatprep.subr.bf16.mxu0 0
    %3287 = vmatpush1.bf16.xpose.msra.mxu0 0
    %3288 = vmatprep.subr.bf16.mxu0 0
    %3289 = vmatpush1.bf16.xpose.msra.mxu0 0
    %3290 = vmatprep.subr.bf16.mxu0 0
    %3291 = vmatpush1.bf16.xpose.msra.mxu0 0
    %3292 = vmatprep.subr.bf16.mxu0 0
    %3293 = vmatpush1.bf16.xpose.msra.mxu0 0
    %3294 = vmatprep.subr.bf16.mxu0 0
    %3295 = vmatpush1.bf16.xpose.msra.mxu0 0
    %3296 = vmatprep.subr.bf16.mxu0 0
    %3297 = vmatpush1.bf16.xpose.msra.mxu0 0
    %3298 = vmatprep.subr.bf16.mxu0 0
    %3299 = vmatpush1.bf16.xpose.msra.mxu0 0
    %3300 = vmatprep.subr.bf16.mxu0 0
    %3301 = vmatpush1.bf16.xpose.msra.mxu0 0
    %3302 = vmatprep.subr.bf16.mxu0 0
    %3303 = vmatpush1.bf16.xpose.msra.mxu0 0
    %3304 = vmatprep.subr.bf16.mxu0 0
    %3305 = vmatpush1.bf16.xpose.msra.mxu0 0
    %3306 = vmatprep.subr.bf16.mxu0 0
    %3307 = vmatpush1.bf16.xpose.msra.mxu0 0
    %3308 = vmatprep.subr.bf16.mxu0 0
    %3309 = vmatpush1.bf16.xpose.msra.mxu0 0
    %3310 = vmatprep.subr.bf16.mxu0 0
    %3311 = vmatpush1.bf16.xpose.msra.mxu0 0
    %3312 = vmatprep.mubr.bf16.mxu0 %v2955
    %3313 = vmatmul.mubr.bf16.gmra.mrb[0].mxu0 %v2953
    %v3314 = vpop.f32.mrb[0].mxu0
    %v3315 = vadd.f32 %v3275, %v3314
    %v3316 = vpop.f32.mrb[0].mxu0
    %v3317 = vpop.f32.mrb[0].mxu0
    %v3318 = vpop.f32.mrb[0].mxu0
    %3319 = vdwg.mxu0
    %3320 = vmatprep.subr.bf16.mxu0 %v2832
    %3321 = vmatpush1.bf16.xpose.msra.mxu0 %v2831
    %3322 = vmatprep.subr.bf16.mxu0 %v2852
    %3323 = vmatpush1.bf16.xpose.msra.mxu0 %v2851
    %3324 = vmatprep.subr.bf16.mxu0 0
    %3325 = vmatpush1.bf16.xpose.msra.mxu0 0
    %3326 = vmatprep.subr.bf16.mxu0 0
    %3327 = vmatpush1.bf16.xpose.msra.mxu0 0
    %3328 = vmatprep.subr.bf16.mxu0 0
    %3329 = vmatpush1.bf16.xpose.msra.mxu0 0
    %3330 = vmatprep.subr.bf16.mxu0 0
    %3331 = vmatpush1.bf16.xpose.msra.mxu0 0
    %3332 = vmatprep.subr.bf16.mxu0 0
    %3333 = vmatpush1.bf16.xpose.msra.mxu0 0
    %3334 = vmatprep.subr.bf16.mxu0 0
    %3335 = vmatpush1.bf16.xpose.msra.mxu0 0
    %3336 = vmatprep.subr.bf16.mxu0 0
    %3337 = vmatpush1.bf16.xpose.msra.mxu0 0
    %3338 = vmatprep.subr.bf16.mxu0 0
    %3339 = vmatpush1.bf16.xpose.msra.mxu0 0
    %3340 = vmatprep.subr.bf16.mxu0 0
    %3341 = vmatpush1.bf16.xpose.msra.mxu0 0
    %3342 = vmatprep.subr.bf16.mxu0 0
    %3343 = vmatpush1.bf16.xpose.msra.mxu0 0
    %3344 = vmatprep.subr.bf16.mxu0 0
    %3345 = vmatpush1.bf16.xpose.msra.mxu0 0
    %3346 = vmatprep.subr.bf16.mxu0 0
    %3347 = vmatpush1.bf16.xpose.msra.mxu0 0
    %3348 = vmatprep.subr.bf16.mxu0 0
    %3349 = vmatpush1.bf16.xpose.msra.mxu0 0
    %3350 = vmatprep.subr.bf16.mxu0 0
    %3351 = vmatpush1.bf16.xpose.msra.mxu0 0
    %3352 = vmatprep.mubr.bf16.mxu0 %v2977
    %3353 = vmatmul.mubr.bf16.gmra.mrb[0].mxu0 %v2970
    %v3354 = vpop.f32.mrb[0].mxu0
    %v3355 = vadd.f32 %v3315, %v3354
    %v3356 = vpop.f32.mrb[0].mxu0
    %v3357 = vpop.f32.mrb[0].mxu0
    %v3358 = vpop.f32.mrb[0].mxu0
    %3359 = vdwg.mxu0
    %3360 = vmatprep.subr.bf16.mxu0 %v2834
    %3361 = vmatpush1.bf16.xpose.msra.mxu0 %v2833
    %3362 = vmatprep.subr.bf16.mxu0 %v2854
    %3363 = vmatpush1.bf16.xpose.msra.mxu0 %v2853
    %3364 = vmatprep.subr.bf16.mxu0 0
    %3365 = vmatpush1.bf16.xpose.msra.mxu0 0
    %3366 = vmatprep.subr.bf16.mxu0 0
    %3367 = vmatpush1.bf16.xpose.msra.mxu0 0
    %3368 = vmatprep.subr.bf16.mxu0 0
    %3369 = vmatpush1.bf16.xpose.msra.mxu0 0
    %3370 = vmatprep.subr.bf16.mxu0 0
    %3371 = vmatpush1.bf16.xpose.msra.mxu0 0
    %3372 = vmatprep.subr.bf16.mxu0 0
    %3373 = vmatpush1.bf16.xpose.msra.mxu0 0
    %3374 = vmatprep.subr.bf16.mxu0 0
    %3375 = vmatpush1.bf16.xpose.msra.mxu0 0
    %3376 = vmatprep.subr.bf16.mxu0 0
    %3377 = vmatpush1.bf16.xpose.msra.mxu0 0
    %3378 = vmatprep.subr.bf16.mxu0 0
    %3379 = vmatpush1.bf16.xpose.msra.mxu0 0
    %3380 = vmatprep.subr.bf16.mxu0 0
    %3381 = vmatpush1.bf16.xpose.msra.mxu0 0
    %3382 = vmatprep.subr.bf16.mxu0 0
    %3383 = vmatpush1.bf16.xpose.msra.mxu0 0
    %3384 = vmatprep.subr.bf16.mxu0 0
    %3385 = vmatpush1.bf16.xpose.msra.mxu0 0
    %3386 = vmatprep.subr.bf16.mxu0 0
    %3387 = vmatpush1.bf16.xpose.msra.mxu0 0
    %3388 = vmatprep.subr.bf16.mxu0 0
    %3389 = vmatpush1.bf16.xpose.msra.mxu0 0
    %3390 = vmatprep.subr.bf16.mxu0 0
    %3391 = vmatpush1.bf16.xpose.msra.mxu0 0
    %3392 = vmatprep.mubr.bf16.mxu0 %v2979
    %3393 = vmatmul.mubr.bf16.gmra.mrb[0].mxu0 %v2978
    %v3394 = vpop.f32.mrb[0].mxu0
    %v3395 = vadd.f32 %v3355, %v3394
    %v3396 = vpop.f32.mrb[0].mxu0
    %v3397 = vpop.f32.mrb[0].mxu0
    %v3398 = vpop.f32.mrb[0].mxu0
    %3399 = vdwg.mxu0
    %v3400 = vld [vmem:[%s11] sm:$0x1]
    %v3402 = vlaneseq
    %v3403 = vshrl.u32 %v3402, 7
    %v3404 = vsub.s32 0, %v3403
    %v3405 = vrot.slane %v3400, %v3404
    %v3407 = vmul.f32 %v3395, %v3405
    %v3408 = vld [vmem:[%s12] sm:$0x1]
    %v3410 = vlaneseq
    %v3411 = vshrl.u32 %v3410, 7
    %v3412 = vsub.s32 0, %v3411
    %v3413 = vrot.slane %v3408, %v3412
    %v3415 = vadd.f32 %v3407, %v3413
    %vm3416 = vcmp.gt.f32.partialorder %v3415, 0.0
    %v3417 = vmin.f32 %v3415, 0.0
    %v3418 = vmul.f32 %v3417, 1.442695
    %v3419 = vpow.pop %v3418
    %v3420 = vsub.f32 %v3419, 1.0
    %v3421 = vsel %vm3416, %v3415, %v3420
    %v3422 = vpack.c.bf16 %v3421, %v3421
    %v3423 = vld [vmem:[%s13] sm:$0xf]
    %v3424 = vld [vmem:[%s13 + $0x4] sm:$0xf]
    %v3425 = vld [vmem:[%s13 + $0x8] sm:$0xf]
    %v3426 = vld [vmem:[%s13 + $0xc] sm:$0xf]
    %v3427 = vld [vmem:[%s14] sm:$0x1]
    %v3429 = vlaneseq
    %v3430 = vshrl.u32 %v3429, 7
    %v3431 = vsub.s32 0, %v3430
    %v3432 = vrot.slane %v3427, %v3431
    %v3438 = vunpack.c.l.b16 %v3423
    %v3439 = vunpack.c.l.b16 %v3424
    %v3440 = vunpack.c.l.b16 %v3425
    %v3441 = vunpack.c.l.b16 %v3426
    %v3442 = vpack.c.b16 %v3439, %v3438
    %v3443 = vpack.c.b16 %v3441, %v3440
    %v3447 = vsel %vm1759, %v3422, 0
    %3449 = vmatprep.subr.bf16.mxu0 0
    %3450 = vmatpush1.bf16.msra.mxu0 %v3442
    %3451 = vmatprep.subr.bf16.mxu0 0
    %3452 = vmatpush1.bf16.msra.mxu0 %v3443
    %3453 = vmatprep.subr.bf16.mxu0 0
    %3454 = vmatpush1.bf16.msra.mxu0 0
    %3455 = vmatprep.subr.bf16.mxu0 0
    %3456 = vmatpush1.bf16.msra.mxu0 0
    %3457 = vmatprep.subr.bf16.mxu0 0
    %3458 = vmatpush1.bf16.msra.mxu0 0
    %3459 = vmatprep.subr.bf16.mxu0 0
    %3460 = vmatpush1.bf16.msra.mxu0 0
    %3461 = vmatprep.subr.bf16.mxu0 0
    %3462 = vmatpush1.bf16.msra.mxu0 0
    %3463 = vmatprep.subr.bf16.mxu0 0
    %3464 = vmatpush1.bf16.msra.mxu0 0
    %3465 = vmatprep.subr.bf16.mxu0 0
    %3466 = vmatpush1.bf16.msra.mxu0 0
    %3467 = vmatprep.subr.bf16.mxu0 0
    %3468 = vmatpush1.bf16.msra.mxu0 0
    %3469 = vmatprep.subr.bf16.mxu0 0
    %3470 = vmatpush1.bf16.msra.mxu0 0
    %3471 = vmatprep.subr.bf16.mxu0 0
    %3472 = vmatpush1.bf16.msra.mxu0 0
    %3473 = vmatprep.subr.bf16.mxu0 0
    %3474 = vmatpush1.bf16.msra.mxu0 0
    %3475 = vmatprep.subr.bf16.mxu0 0
    %3476 = vmatpush1.bf16.msra.mxu0 0
    %3477 = vmatprep.subr.bf16.mxu0 0
    %3478 = vmatpush1.bf16.msra.mxu0 0
    %3479 = vmatprep.subr.bf16.mxu0 0
    %3480 = vmatpush1.bf16.msra.mxu0 0
    %3481 = vmatprep.mubr.bf16.mxu0 0
    %3482 = vmatmul.mubr.bf16.gmra.mrb[0].mxu0 %v3447
    %v3483 = vpop.f32.mrb[0].mxu0
    %v3484 = vadd.f32 %v3432, %v3483
    %v3485 = vpop.f32.mrb[0].mxu0
    %v3486 = vpop.f32.mrb[0].mxu0
    %v3487 = vpop.f32.mrb[0].mxu0
    %3488 = vdwg.mxu0
    %v3489 = vsub.f32 0.0, %v3484
    %v3490 = vmul.f32 %v3489, 1.442695
    %v3491 = vpow.pop %v3490
    %v3492 = vadd.f32 %v3491, 1.0
    %v3493 = vrcp.pop %v3492
    %v3494 = vmul.f32 1.0, %v3493
    %v3495 = vtanh.pop %v3484
    %3497 = vrot.lane.b32.xlu0 %v3495, 96
    %v3498 = vpop.permute.xlu0 %3497
    %v3500 = vmul.f32 %v3494, %v3498
    %v3501 = vtanh.pop %v3500
    %3503 = vrot.lane.b32.xlu0 %v3501, 64
    %v3504 = vpop.permute.xlu0 %3503
    %v3506 = vmul.f32 %v3494, %v3504
    %v3507 = vpack.c.bf16 %v3506, %v3506
    %v3508 = vld [vmem:[%s15] sm:$0xf]
    %v3509 = vld [vmem:[%s15 + $0x4] sm:$0xf]
    %v3510 = vld [vmem:[%s15 + $0x8] sm:$0xf]
    %v3511 = vld [vmem:[%s15 + $0xc] sm:$0xf]
    %v3512 = vld [vmem:[%s16] sm:$0x1]
    %v3514 = vlaneseq
    %v3515 = vshrl.u32 %v3514, 7
    %v3516 = vsub.s32 0, %v3515
    %v3517 = vrot.slane %v3512, %v3516
    %3520 = vrot.lane.b32.xlu0 %v3507, 64
    %v3521 = vpop.permute.xlu0 %3520
    %v3526 = vunpack.c.l.b16 %v3508
    %v3527 = vunpack.c.l.b16 %v3509
    %v3528 = vunpack.c.l.b16 %v3510
    %v3529 = vunpack.c.l.b16 %v3511
    %v3530 = vpack.c.b16 %v3527, %v3526
    %v3531 = vpack.c.b16 %v3529, %v3528
    %v3535 = vsel %vm1759, %v3521, 0
    %3537 = vmatprep.subr.bf16.mxu0 0
    %3538 = vmatpush1.bf16.msra.mxu0 %v3530
    %3539 = vmatprep.subr.bf16.mxu0 0
    %3540 = vmatpush1.bf16.msra.mxu0 %v3531
    %3541 = vmatprep.subr.bf16.mxu0 0
    %3542 = vmatpush1.bf16.msra.mxu0 0
    %3543 = vmatprep.subr.bf16.mxu0 0
    %3544 = vmatpush1.bf16.msra.mxu0 0
    %3545 = vmatprep.subr.bf16.mxu0 0
    %3546 = vmatpush1.bf16.msra.mxu0 0
    %3547 = vmatprep.subr.bf16.mxu0 0
    %3548 = vmatpush1.bf16.msra.mxu0 0
    %3549 = vmatprep.subr.bf16.mxu0 0
    %3550 = vmatpush1.bf16.msra.mxu0 0
    %3551 = vmatprep.subr.bf16.mxu0 0
    %3552 = vmatpush1.bf16.msra.mxu0 0
    %3553 = vmatprep.subr.bf16.mxu0 0
    %3554 = vmatpush1.bf16.msra.mxu0 0
    %3555 = vmatprep.subr.bf16.mxu0 0
    %3556 = vmatpush1.bf16.msra.mxu0 0
    %3557 = vmatprep.subr.bf16.mxu0 0
    %3558 = vmatpush1.bf16.msra.mxu0 0
    %3559 = vmatprep.subr.bf16.mxu0 0
    %3560 = vmatpush1.bf16.msra.mxu0 0
    %3561 = vmatprep.subr.bf16.mxu0 0
    %3562 = vmatpush1.bf16.msra.mxu0 0
    %3563 = vmatprep.subr.bf16.mxu0 0
    %3564 = vmatpush1.bf16.msra.mxu0 0
    %3565 = vmatprep.subr.bf16.mxu0 0
    %3566 = vmatpush1.bf16.msra.mxu0 0
    %3567 = vmatprep.subr.bf16.mxu0 0
    %3568 = vmatpush1.bf16.msra.mxu0 0
    %3569 = vmatprep.mubr.bf16.mxu0 0
    %3570 = vmatmul.mubr.bf16.gmra.mrb[0].mxu0 %v3535
    %v3571 = vpop.f32.mrb[0].mxu0
    %v3572 = vadd.f32 %v3517, %v3571
    %v3573 = vpop.f32.mrb[0].mxu0
    %v3574 = vpop.f32.mrb[0].mxu0
    %v3575 = vpop.f32.mrb[0].mxu0
    %3576 = vdwg.mxu0
    %v3577 = vsub.f32 0.0, %v3572
    %v3578 = vmul.f32 %v3577, 1.442695
    %v3579 = vpow.pop %v3578
    %v3580 = vadd.f32 %v3579, 1.0
    %v3581 = vrcp.pop %v3580
    %v3582 = vmul.f32 1.0, %v3581
    %v3583 = vtanh.pop %v3572
    %3585 = vrot.lane.b32.xlu0 %v3583, 96
    %v3586 = vpop.permute.xlu0 %3585
    %v3588 = vmul.f32 %v3582, %v3586
    %v3589 = vtanh.pop %v3588
    %3591 = vrot.lane.b32.xlu0 %v3589, 64
    %v3592 = vpop.permute.xlu0 %3591
    %v3594 = vmul.f32 %v3582, %v3592
    %v3595 = vpack.c.bf16 %v3594, %v3594
    %v3596 = vld [vmem:[%s17] sm:$0xf]
    %v3597 = vld [vmem:[%s17 + $0x4] sm:$0xf]
    %v3598 = vld [vmem:[%s17 + $0x8] sm:$0xf]
    %v3599 = vld [vmem:[%s17 + $0xc] sm:$0xf]
    %v3600 = vld [vmem:[%s18] sm:$0x1]
    %v3602 = vlaneseq
    %v3603 = vshrl.u32 %v3602, 7
    %v3604 = vsub.s32 0, %v3603
    %v3605 = vrot.slane %v3600, %v3604
    %3608 = vrot.lane.b32.xlu0 %v3595, 64
    %v3609 = vpop.permute.xlu0 %3608
    %v3614 = vunpack.c.l.b16 %v3596
    %v3615 = vunpack.c.l.b16 %v3597
    %v3616 = vunpack.c.l.b16 %v3598
    %v3617 = vunpack.c.l.b16 %v3599
    %v3618 = vpack.c.b16 %v3615, %v3614
    %v3619 = vpack.c.b16 %v3617, %v3616
    %v3623 = vsel %vm1759, %v3609, 0
    %3625 = vmatprep.subr.bf16.mxu0 0
    %3626 = vmatpush1.bf16.msra.mxu0 %v3618
    %3627 = vmatprep.subr.bf16.mxu0 0
    %3628 = vmatpush1.bf16.msra.mxu0 %v3619
    %3629 = vmatprep.subr.bf16.mxu0 0
    %3630 = vmatpush1.bf16.msra.mxu0 0
    %3631 = vmatprep.subr.bf16.mxu0 0
    %3632 = vmatpush1.bf16.msra.mxu0 0
    %3633 = vmatprep.subr.bf16.mxu0 0
    %3634 = vmatpush1.bf16.msra.mxu0 0
    %3635 = vmatprep.subr.bf16.mxu0 0
    %3636 = vmatpush1.bf16.msra.mxu0 0
    %3637 = vmatprep.subr.bf16.mxu0 0
    %3638 = vmatpush1.bf16.msra.mxu0 0
    %3639 = vmatprep.subr.bf16.mxu0 0
    %3640 = vmatpush1.bf16.msra.mxu0 0
    %3641 = vmatprep.subr.bf16.mxu0 0
    %3642 = vmatpush1.bf16.msra.mxu0 0
    %3643 = vmatprep.subr.bf16.mxu0 0
    %3644 = vmatpush1.bf16.msra.mxu0 0
    %3645 = vmatprep.subr.bf16.mxu0 0
    %3646 = vmatpush1.bf16.msra.mxu0 0
    %3647 = vmatprep.subr.bf16.mxu0 0
    %3648 = vmatpush1.bf16.msra.mxu0 0
    %3649 = vmatprep.subr.bf16.mxu0 0
    %3650 = vmatpush1.bf16.msra.mxu0 0
    %3651 = vmatprep.subr.bf16.mxu0 0
    %3652 = vmatpush1.bf16.msra.mxu0 0
    %3653 = vmatprep.subr.bf16.mxu0 0
    %3654 = vmatpush1.bf16.msra.mxu0 0
    %3655 = vmatprep.subr.bf16.mxu0 0
    %3656 = vmatpush1.bf16.msra.mxu0 0
    %3657 = vmatprep.mubr.bf16.mxu0 0
    %3658 = vmatmul.mubr.bf16.gmra.mrb[0].mxu0 %v3623
    %v3659 = vpop.f32.mrb[0].mxu0
    %v3660 = vadd.f32 %v3605, %v3659
    %v3661 = vpop.f32.mrb[0].mxu0
    %v3662 = vpop.f32.mrb[0].mxu0
    %v3663 = vpop.f32.mrb[0].mxu0
    %3664 = vdwg.mxu0
    %vm3665 = vcmask 25600
    %3666 = vst.msk [vmem:[#allocation8] sm:$0x3] %vm3665, %v3660
    // Predicated region
    $region111: #{cnn_lstm_forward.1} parent=1 // pred_check
      _
    $region112: #{cnn_lstm_forward.1} parent=1 // pred_check_branch
      %3668 = sbr.rel (0) target = $region114
    $region113: #{cnn_lstm_forward.1} parent=1 // pred_region
      %s3670 = ssub.s32 32, 32
      %3671 = vsyncadd [#allocation9], %s3670
      %s3673 = sshll.u32 [#allocation8], 4
      %s3674 = int_to_ptr.vmem [resolvable:$true] %s3673
      %3676 = dma.vmem_to_hbm [thread:$0]  %s3674, 32, %s19, [#allocation9]
    $region114: #{cnn_lstm_forward.1} parent=1 // pred_fallthru
      _
    // Predicated region
    $region115: #{cnn_lstm_forward.1} parent=1 // pred_check
      _
    $region116: #{cnn_lstm_forward.1} parent=1 // pred_check_branch
      %3678 = sbr.rel (0) target = $region118
    $region117: #{cnn_lstm_forward.1} parent=1 // pred_region
      %3679 = dma.done [#allocation9], 32
    $region118: #{cnn_lstm_forward.1} parent=1 // pred_fallthru
      _
    %3680 = vsyncpa [#allocation9], 1
  %3681 = vsyncmov [#allocation7]
  %s3682 = vpop.sfrf %3681
  %p3683 = scmp.eq.s32.totalorder %s3682, 0
  %p3684 = pneg %p3683
  %3686 = shalt.err (%p3684)

</llo_original>
